<compile_context>
chip_gen: v6e
topology: v6e:2x2x1
jax: 0.10.0
libtpu: 0.0.40
codegen_flags: <defaults>
</compile_context>

<pallas_src>
import jax
import jax.numpy as jnp
from jax.experimental import pallas as pl
from jax.experimental.pallas import tpu as pltpu


def _upsample_conv_kernel(p_ref, w_ref, b_ref, bias_ref, o_ref):
    """One (batch, row-tile) of conv3x3(nearest_upsample_2x(x)).

    p_ref    : (1, 1, C, (TH+2)*(W+2))  zero-padded input halo tile, rows flattened on lanes
    w_ref    : (12*C, C)                ky-folded channel-mix weights, rows (family, kx, c_out)
    b_ref    : (3*(W+2), 2W)            stacked 0/1 column operators [B0; B1; B2]
    bias_ref : (C, 1)                   f32 bias
    o_ref    : (1, C, TH, 4W)           per original row: [even-row half | odd-row half]
    """
    C = o_ref.shape[1]
    TH = o_ref.shape[2]
    W2 = o_ref.shape[3] // 2          # = 2*W (output width)
    Wp = b_ref.shape[0] // 3          # = W + 2
    CR = 3 * C

    # --- one big channel-mix matmul over the whole (TH+2)-row halo tile -------------
    slab = p_ref[0, 0]                                                  # (C, (TH+2)*Wp)
    g = jnp.dot(w_ref[...], slab, preferred_element_type=jnp.float32)
    g = g.astype(w_ref.dtype)         # bf16 MXU inputs for the column-op stage

    b_stack = b_ref[...]                                                # (3*Wp, W2)
    bias_b = jnp.broadcast_to(bias_ref[...], (C, 2 * W2))               # hoisted, f32

    # --- per output row pair: fold ky via the 4 families, one column-op matmul,
    #     one lane-dense full-width store.  Temporaries die at the store. -----------
    for i in range(TH):
        s0 = i * Wp
        s1 = s0 + Wp
        s2 = s1 + Wp
        # even output row 2i  = A0  @ padded row i   +  A12 @ padded row i+1
        h_e = g[0:CR, s0:s0 + Wp] + g[CR:2 * CR, s1:s1 + Wp]            # (3C, Wp)
        # odd  output row 2i+1 = A01 @ padded row i+1 +  A2  @ padded row i+2
        h_o = g[2 * CR:3 * CR, s1:s1 + Wp] + g[3 * CR:4 * CR, s2:s2 + Wp]
        # kx blocks -> lanes; even/odd phases -> sublanes; single MXU issue per row.
        he_cat = jnp.concatenate([h_e[0:C], h_e[C:2 * C], h_e[2 * C:3 * C]], axis=1)
        ho_cat = jnp.concatenate([h_o[0:C], h_o[C:2 * C], h_o[2 * C:3 * C]], axis=1)
        lhs = jnp.concatenate([he_cat, ho_cat], axis=0)                 # (2C, 3*Wp)
        res = jnp.dot(lhs, b_stack, preferred_element_type=jnp.float32)  # (2C, W2)
        row = jnp.concatenate([res[0:C], res[C:2 * C]], axis=1) + bias_b  # (C, 2*W2)
        o_ref[0, :, i, :] = row.astype(o_ref.dtype)


def _pick_tile_h(h, n, block_h):
    """Largest multiple-of-8 divisor of h that is <= block_h (else h itself)."""
    th = 0
    for cand in range(min(block_h, h), 7, -1):
        if cand % 8 == 0 and h % cand == 0:
            th = cand
            break
    if th == 0:
        return h
    # v7x shards the parallel grid axes over 2 TensorCores: with a single image make
    # sure there are at least 2 grid steps.
    if n == 1 and h // th < 2:
        for cand in range(th - 8, 7, -8):
            if h % cand == 0:
                return cand
    return th


def upsample_forward(x, weight, bias, with_conv=True, block_h=16,
                     compute_dtype=jnp.bfloat16):
    """F.interpolate(x, scale_factor=2, mode='nearest') [+ Conv2d(C, C, 3, 1, 1)].

    x      : (N, C, H, W) (NCHW), weight : (C, C, 3, 3) OIHW, bias : (C,)
    compute_dtype: MXU input dtype (bf16 default; f32 accumulation is always kept).
    On v5e/v6e, block_h=32 with a larger vmem_limit_bytes is beneficial for big layers.
    """
    N, C, H, W = x.shape
    if not with_conv:
        # Pure index duplication; no compute worth a kernel.
        return jnp.repeat(jnp.repeat(x, 2, axis=2), 2, axis=3)

    Wp = W + 2
    W2 = 2 * W
    TH = _pick_tile_h(H, N, block_h)
    R = H // TH
    Rt = TH + 2

    # Zero-pad the ORIGINAL image once (4x cheaper than padding the 2x image) and pre-cut
    # the overlapping halo windows so each grid step DMAs one lane-dense (C, Rt*Wp) tile.
    P = jnp.pad(x, ((0, 0), (0, 0), (1, 1), (1, 1))).astype(compute_dtype)  # (N,C,H+2,Wp)
    tiles = jnp.stack([P[:, :, r * TH:r * TH + Rt, :] for r in range(R)], axis=1)
    tiles = tiles.reshape(N, R, C, Rt * Wp)

    # OIHW -> ky-folded channel-mix families, rows ordered (family, kx, c_out).
    Wt = jnp.transpose(weight, (2, 3, 0, 1))                    # (ky, kx, Cout, Cin)
    fam = jnp.concatenate([Wt[0], Wt[1] + Wt[2], Wt[0] + Wt[1], Wt[2]], axis=0)
    w_big = fam.reshape(12 * C, C).astype(compute_dtype)

    # Column operators (0/1 -> exact in bf16): B_k[jj, q] = 1 iff padded-input column jj
    # feeds output column q through tap kx=k of the conv on the 2x-upsampled image.
    q = jnp.arange(W2)
    jj = jnp.arange(Wp)
    b_stack = jnp.concatenate(
        [(jj[:, None] == ((q + k + 1) // 2)[None, :]).astype(compute_dtype)
         for k in range(3)], axis=0)                            # (3*Wp, W2)

    bias2 = bias.reshape(C, 1).astype(jnp.float32)

    out_flat = pl.pallas_call(
        _upsample_conv_kernel,
        out_shape=jax.ShapeDtypeStruct((N, C, H, 2 * W2), x.dtype),
        grid_spec=pltpu.PrefetchScalarGridSpec(
            num_scalar_prefetch=0,
            grid=(N, R),
            in_specs=[
                pl.BlockSpec((1, 1, C, Rt * Wp), lambda n, r: (n, r, 0, 0)),
                pl.BlockSpec((12 * C, C), lambda n, r: (0, 0)),
                pl.BlockSpec((3 * Wp, W2), lambda n, r: (0, 0)),
                pl.BlockSpec((C, 1), lambda n, r: (0, 0)),
            ],
            out_specs=pl.BlockSpec((1, C, TH, 2 * W2), lambda n, r: (n, 0, r, 0)),
        ),
        compiler_params=pltpu.CompilerParams(
            dimension_semantics=("parallel", "parallel"),
            # Per-step footprint is O(C*TH*W); 64 MiB is safe on all generations
            # (raise toward ~100 MiB together with block_h=32 on v5e/v6e).
            vmem_limit_bytes=64 * 1024 * 1024,
        ),
    )(tiles, w_big, b_stack, bias2)

    # (N, C, H, 4W) -> (N, C, 2H, 2W): free row-major reshape (row de-interleave).
    return out_flat.reshape(N, C, 2 * H, 2 * W)


def _reference_forward(x, weight, bias):
    """Pure-JAX reference matching the PyTorch module (NCHW conv)."""
    up = jnp.repeat(jnp.repeat(x, 2, axis=2), 2, axis=3)
    y = jax.lax.conv_general_dilated(
        up, weight, window_strides=(1, 1), padding=((1, 1), (1, 1)),
        dimension_numbers=("NCHW", "OIHW", "NCHW"))
    return y + bias[None, :, None, None]


if __name__ == "__main__":
    N, C, H, W = 2, 4, 16, 16
    key = jax.random.PRNGKey(0)
    k_x, k_w, k_b = jax.random.split(key, 3)

    x = jax.random.normal(k_x, (N, C, H, W), dtype=jnp.float32)
    # Mimic PyTorch Conv2d default init: uniform(-1/sqrt(fan_in), +1/sqrt(fan_in)).
    fan_in = C * 3 * 3
    bound = 1.0 / (fan_in ** 0.5)
    weight = jax.random.uniform(k_w, (C, C, 3, 3), jnp.float32, -bound, bound)
    bias = jax.random.uniform(k_b, (C,), jnp.float32, -bound, bound)

    ref = jax.block_until_ready(_reference_forward(x, weight, bias))

    # Exact-math check of the decomposition (f32 MXU inputs).
    out_f32 = jax.block_until_ready(
        upsample_forward(x, weight, bias, compute_dtype=jnp.float32))
    assert out_f32.shape == (N, C, 2 * H, 2 * W), out_f32.shape
    assert jnp.allclose(out_f32, ref, atol=1e-4, rtol=1e-4), \
        float(jnp.abs(out_f32 - ref).max())

    # Default path: bf16 MXU inputs, f32 accumulation (looser tolerance).
    out_bf16 = jax.block_until_ready(upsample_forward(x, weight, bias))
    assert out_bf16.shape == (N, C, 2 * H, 2 * W), out_bf16.shape
    assert jnp.allclose(out_bf16, ref, atol=7.5e-2, rtol=2.5e-2), \
        float(jnp.abs(out_bf16 - ref).max())

    print("KERNEL_OK")
</pallas_src>

<mosaic_0001>
module attributes {stable_mosaic.version = 11 : i64} {
  func.func @_upsample_conv_kernel(%arg0: i32, %arg1: i32, %arg2: memref<1x1x4x324xf32, #tpu.memory_space<vmem>>, %arg3: memref<48x4xf32, #tpu.memory_space<vmem>>, %arg4: memref<54x32xf32, #tpu.memory_space<vmem>>, %arg5: memref<4x1xf32, #tpu.memory_space<vmem>>, %arg6: memref<1x4x16x64xf32, #tpu.memory_space<vmem>>) attributes {dimension_semantics = [#tpu.dimension_semantics<parallel>, #tpu.dimension_semantics<parallel>], iteration_bounds = array<i64: 2, 1>, scalar_prefetch = 0 : i64, scratch_operands = 0 : i64, tpu.core_type = #tpu.core_type<tc>, window_params = [{transform_indices = @transform_0, window_bounds = array<i64: 1, 1, 4, 324>}, {pipeline_mode = #tpu.pipeline_mode<synchronous>, transform_indices = @transform_1, window_bounds = array<i64: 48, 4>}, {pipeline_mode = #tpu.pipeline_mode<synchronous>, transform_indices = @transform_2, window_bounds = array<i64: 54, 32>}, {pipeline_mode = #tpu.pipeline_mode<synchronous>, transform_indices = @transform_3, window_bounds = array<i64: 4, 1>}, {transform_indices = @transform_4, window_bounds = array<i64: 1, 4, 16, 64>}]} {
    %c0 = arith.constant 0 : index
    %c0_0 = arith.constant 0 : index
    %c0_1 = arith.constant 0 : index
    %c0_2 = arith.constant 0 : index
    %0 = vector.load %arg2[%c0, %c0_0, %c0_1, %c0_2] : memref<1x1x4x324xf32, #tpu.memory_space<vmem>>, vector<1x1x4x324xf32>
    %1 = vector.shape_cast %0 : vector<1x1x4x324xf32> to vector<4x324xf32>
    %c0_3 = arith.constant 0 : index
    %c0_4 = arith.constant 0 : index
    %2 = vector.load %arg3[%c0_3, %c0_4] : memref<48x4xf32, #tpu.memory_space<vmem>>, vector<48x4xf32>
    %cst = arith.constant dense<0.000000e+00> : vector<48x324xf32>
    %3 = tpu.matmul %2, %1, %cst {dimension_numbers = #tpu.dot_dimension_numbers<[1], [0], [0], [1], [0, 0, 1, 1], [], []>} : vector<48x4xf32>, vector<4x324xf32>, vector<48x324xf32> -> vector<48x324xf32>
    %c0_5 = arith.constant 0 : index
    %c0_6 = arith.constant 0 : index
    %4 = vector.load %arg4[%c0_5, %c0_6] : memref<54x32xf32, #tpu.memory_space<vmem>>, vector<54x32xf32>
    %c0_7 = arith.constant 0 : index
    %c0_8 = arith.constant 0 : index
    %5 = vector.load %arg5[%c0_7, %c0_8] : memref<4x1xf32, #tpu.memory_space<vmem>>, vector<4x1xf32>
    %6 = vector.shape_cast %5 : vector<4x1xf32> to vector<4x1xf32>
    %7 = vector.broadcast %6 : vector<4x1xf32> to vector<4x64xf32>
    %8 = vector.extract_strided_slice %3 {offsets = [0, 0], sizes = [12, 18], strides = [1, 1]} : vector<48x324xf32> to vector<12x18xf32>
    %9 = vector.extract_strided_slice %3 {offsets = [12, 18], sizes = [12, 18], strides = [1, 1]} : vector<48x324xf32> to vector<12x18xf32>
    %10 = arith.addf %8, %9 : vector<12x18xf32>
    %11 = vector.extract_strided_slice %3 {offsets = [24, 18], sizes = [12, 18], strides = [1, 1]} : vector<48x324xf32> to vector<12x18xf32>
    %12 = vector.extract_strided_slice %3 {offsets = [36, 36], sizes = [12, 18], strides = [1, 1]} : vector<48x324xf32> to vector<12x18xf32>
    %13 = arith.addf %11, %12 : vector<12x18xf32>
    %14 = vector.extract_strided_slice %10 {offsets = [0, 0], sizes = [4, 18], strides = [1, 1]} : vector<12x18xf32> to vector<4x18xf32>
    %15 = vector.extract_strided_slice %10 {offsets = [4, 0], sizes = [4, 18], strides = [1, 1]} : vector<12x18xf32> to vector<4x18xf32>
    %16 = vector.extract_strided_slice %10 {offsets = [8, 0], sizes = [4, 18], strides = [1, 1]} : vector<12x18xf32> to vector<4x18xf32>
    %17 = tpu.concatenate %14, %15, %16 in 1 : vector<4x18xf32>, vector<4x18xf32>, vector<4x18xf32> -> vector<4x54xf32>
    %18 = vector.extract_strided_slice %13 {offsets = [0, 0], sizes = [4, 18], strides = [1, 1]} : vector<12x18xf32> to vector<4x18xf32>
    %19 = vector.extract_strided_slice %13 {offsets = [4, 0], sizes = [4, 18], strides = [1, 1]} : vector<12x18xf32> to vector<4x18xf32>
    %20 = vector.extract_strided_slice %13 {offsets = [8, 0], sizes = [4, 18], strides = [1, 1]} : vector<12x18xf32> to vector<4x18xf32>
    %21 = tpu.concatenate %18, %19, %20 in 1 : vector<4x18xf32>, vector<4x18xf32>, vector<4x18xf32> -> vector<4x54xf32>
    %22 = tpu.concatenate %17, %21 in 0 : vector<4x54xf32>, vector<4x54xf32> -> vector<8x54xf32>
    %cst_9 = arith.constant dense<0.000000e+00> : vector<8x32xf32>
    %23 = tpu.matmul %22, %4, %cst_9 {dimension_numbers = #tpu.dot_dimension_numbers<[1], [0], [0], [1], [0, 0, 1, 1], [], []>} : vector<8x54xf32>, vector<54x32xf32>, vector<8x32xf32> -> vector<8x32xf32>
    %24 = vector.extract_strided_slice %23 {offsets = [0, 0], sizes = [4, 32], strides = [1, 1]} : vector<8x32xf32> to vector<4x32xf32>
    %25 = vector.extract_strided_slice %23 {offsets = [4, 0], sizes = [4, 32], strides = [1, 1]} : vector<8x32xf32> to vector<4x32xf32>
    %26 = tpu.concatenate %24, %25 in 1 : vector<4x32xf32>, vector<4x32xf32> -> vector<4x64xf32>
    %27 = arith.addf %26, %7 : vector<4x64xf32>
    %c0_10 = arith.constant 0 : index
    %c0_11 = arith.constant 0 : index
    %c0_12 = arith.constant 0 : index
    %c0_13 = arith.constant 0 : index
    %28 = vector.load %arg6[%c0_10, %c0_11, %c0_12, %c0_13] : memref<1x4x16x64xf32, #tpu.memory_space<vmem>>, vector<1x4x1x64xf32>
    %29 = vector.shape_cast %28 : vector<1x4x1x64xf32> to vector<4x64xf32>
    %30 = vector.shape_cast %27 : vector<4x64xf32> to vector<1x4x1x64xf32>
    tpu.vector_store %arg6[%c0_10, %c0_11, %c0_12, %c0_13], %30 {strides = array<i32>} : memref<1x4x16x64xf32, #tpu.memory_space<vmem>>, vector<1x4x1x64xf32>,
    %31 = vector.extract_strided_slice %3 {offsets = [0, 18], sizes = [12, 18], strides = [1, 1]} : vector<48x324xf32> to vector<12x18xf32>
    %32 = vector.extract_strided_slice %3 {offsets = [12, 36], sizes = [12, 18], strides = [1, 1]} : vector<48x324xf32> to vector<12x18xf32>
    %33 = arith.addf %31, %32 : vector<12x18xf32>
    %34 = vector.extract_strided_slice %3 {offsets = [24, 36], sizes = [12, 18], strides = [1, 1]} : vector<48x324xf32> to vector<12x18xf32>
    %35 = vector.extract_strided_slice %3 {offsets = [36, 54], sizes = [12, 18], strides = [1, 1]} : vector<48x324xf32> to vector<12x18xf32>
    %36 = arith.addf %34, %35 : vector<12x18xf32>
    %37 = vector.extract_strided_slice %33 {offsets = [0, 0], sizes = [4, 18], strides = [1, 1]} : vector<12x18xf32> to vector<4x18xf32>
    %38 = vector.extract_strided_slice %33 {offsets = [4, 0], sizes = [4, 18], strides = [1, 1]} : vector<12x18xf32> to vector<4x18xf32>
    %39 = vector.extract_strided_slice %33 {offsets = [8, 0], sizes = [4, 18], strides = [1, 1]} : vector<12x18xf32> to vector<4x18xf32>
    %40 = tpu.concatenate %37, %38, %39 in 1 : vector<4x18xf32>, vector<4x18xf32>, vector<4x18xf32> -> vector<4x54xf32>
    %41 = vector.extract_strided_slice %36 {offsets = [0, 0], sizes = [4, 18], strides = [1, 1]} : vector<12x18xf32> to vector<4x18xf32>
    %42 = vector.extract_strided_slice %36 {offsets = [4, 0], sizes = [4, 18], strides = [1, 1]} : vector<12x18xf32> to vector<4x18xf32>
    %43 = vector.extract_strided_slice %36 {offsets = [8, 0], sizes = [4, 18], strides = [1, 1]} : vector<12x18xf32> to vector<4x18xf32>
    %44 = tpu.concatenate %41, %42, %43 in 1 : vector<4x18xf32>, vector<4x18xf32>, vector<4x18xf32> -> vector<4x54xf32>
    %45 = tpu.concatenate %40, %44 in 0 : vector<4x54xf32>, vector<4x54xf32> -> vector<8x54xf32>
    %cst_14 = arith.constant dense<0.000000e+00> : vector<8x32xf32>
    %46 = tpu.matmul %45, %4, %cst_14 {dimension_numbers = #tpu.dot_dimension_numbers<[1], [0], [0], [1], [0, 0, 1, 1], [], []>} : vector<8x54xf32>, vector<54x32xf32>, vector<8x32xf32> -> vector<8x32xf32>
    %47 = vector.extract_strided_slice %46 {offsets = [0, 0], sizes = [4, 32], strides = [1, 1]} : vector<8x32xf32> to vector<4x32xf32>
    %48 = vector.extract_strided_slice %46 {offsets = [4, 0], sizes = [4, 32], strides = [1, 1]} : vector<8x32xf32> to vector<4x32xf32>
    %49 = tpu.concatenate %47, %48 in 1 : vector<4x32xf32>, vector<4x32xf32> -> vector<4x64xf32>
    %50 = arith.addf %49, %7 : vector<4x64xf32>
    %c0_15 = arith.constant 0 : index
    %c0_16 = arith.constant 0 : index
    %c1 = arith.constant 1 : index
    %c0_17 = arith.constant 0 : index
    %51 = vector.load %arg6[%c0_15, %c0_16, %c1, %c0_17] : memref<1x4x16x64xf32, #tpu.memory_space<vmem>>, vector<1x4x1x64xf32>
    %52 = vector.shape_cast %51 : vector<1x4x1x64xf32> to vector<4x64xf32>
    %53 = vector.shape_cast %50 : vector<4x64xf32> to vector<1x4x1x64xf32>
    tpu.vector_store %arg6[%c0_15, %c0_16, %c1, %c0_17], %53 {strides = array<i32>} : memref<1x4x16x64xf32, #tpu.memory_space<vmem>>, vector<1x4x1x64xf32>,
    %54 = vector.extract_strided_slice %3 {offsets = [0, 36], sizes = [12, 18], strides = [1, 1]} : vector<48x324xf32> to vector<12x18xf32>
    %55 = vector.extract_strided_slice %3 {offsets = [12, 54], sizes = [12, 18], strides = [1, 1]} : vector<48x324xf32> to vector<12x18xf32>
    %56 = arith.addf %54, %55 : vector<12x18xf32>
    %57 = vector.extract_strided_slice %3 {offsets = [24, 54], sizes = [12, 18], strides = [1, 1]} : vector<48x324xf32> to vector<12x18xf32>
    %58 = vector.extract_strided_slice %3 {offsets = [36, 72], sizes = [12, 18], strides = [1, 1]} : vector<48x324xf32> to vector<12x18xf32>
    %59 = arith.addf %57, %58 : vector<12x18xf32>
    %60 = vector.extract_strided_slice %56 {offsets = [0, 0], sizes = [4, 18], strides = [1, 1]} : vector<12x18xf32> to vector<4x18xf32>
    %61 = vector.extract_strided_slice %56 {offsets = [4, 0], sizes = [4, 18], strides = [1, 1]} : vector<12x18xf32> to vector<4x18xf32>
    %62 = vector.extract_strided_slice %56 {offsets = [8, 0], sizes = [4, 18], strides = [1, 1]} : vector<12x18xf32> to vector<4x18xf32>
    %63 = tpu.concatenate %60, %61, %62 in 1 : vector<4x18xf32>, vector<4x18xf32>, vector<4x18xf32> -> vector<4x54xf32>
    %64 = vector.extract_strided_slice %59 {offsets = [0, 0], sizes = [4, 18], strides = [1, 1]} : vector<12x18xf32> to vector<4x18xf32>
    %65 = vector.extract_strided_slice %59 {offsets = [4, 0], sizes = [4, 18], strides = [1, 1]} : vector<12x18xf32> to vector<4x18xf32>
    %66 = vector.extract_strided_slice %59 {offsets = [8, 0], sizes = [4, 18], strides = [1, 1]} : vector<12x18xf32> to vector<4x18xf32>
    %67 = tpu.concatenate %64, %65, %66 in 1 : vector<4x18xf32>, vector<4x18xf32>, vector<4x18xf32> -> vector<4x54xf32>
    %68 = tpu.concatenate %63, %67 in 0 : vector<4x54xf32>, vector<4x54xf32> -> vector<8x54xf32>
    %cst_18 = arith.constant dense<0.000000e+00> : vector<8x32xf32>
    %69 = tpu.matmul %68, %4, %cst_18 {dimension_numbers = #tpu.dot_dimension_numbers<[1], [0], [0], [1], [0, 0, 1, 1], [], []>} : vector<8x54xf32>, vector<54x32xf32>, vector<8x32xf32> -> vector<8x32xf32>
    %70 = vector.extract_strided_slice %69 {offsets = [0, 0], sizes = [4, 32], strides = [1, 1]} : vector<8x32xf32> to vector<4x32xf32>
    %71 = vector.extract_strided_slice %69 {offsets = [4, 0], sizes = [4, 32], strides = [1, 1]} : vector<8x32xf32> to vector<4x32xf32>
    %72 = tpu.concatenate %70, %71 in 1 : vector<4x32xf32>, vector<4x32xf32> -> vector<4x64xf32>
    %73 = arith.addf %72, %7 : vector<4x64xf32>
    %c0_19 = arith.constant 0 : index
    %c0_20 = arith.constant 0 : index
    %c2 = arith.constant 2 : index
    %c0_21 = arith.constant 0 : index
    %74 = vector.load %arg6[%c0_19, %c0_20, %c2, %c0_21] : memref<1x4x16x64xf32, #tpu.memory_space<vmem>>, vector<1x4x1x64xf32>
    %75 = vector.shape_cast %74 : vector<1x4x1x64xf32> to vector<4x64xf32>
    %76 = vector.shape_cast %73 : vector<4x64xf32> to vector<1x4x1x64xf32>
    tpu.vector_store %arg6[%c0_19, %c0_20, %c2, %c0_21], %76 {strides = array<i32>} : memref<1x4x16x64xf32, #tpu.memory_space<vmem>>, vector<1x4x1x64xf32>,
    %77 = vector.extract_strided_slice %3 {offsets = [0, 54], sizes = [12, 18], strides = [1, 1]} : vector<48x324xf32> to vector<12x18xf32>
    %78 = vector.extract_strided_slice %3 {offsets = [12, 72], sizes = [12, 18], strides = [1, 1]} : vector<48x324xf32> to vector<12x18xf32>
    %79 = arith.addf %77, %78 : vector<12x18xf32>
    %80 = vector.extract_strided_slice %3 {offsets = [24, 72], sizes = [12, 18], strides = [1, 1]} : vector<48x324xf32> to vector<12x18xf32>
    %81 = vector.extract_strided_slice %3 {offsets = [36, 90], sizes = [12, 18], strides = [1, 1]} : vector<48x324xf32> to vector<12x18xf32>
    %82 = arith.addf %80, %81 : vector<12x18xf32>
    %83 = vector.extract_strided_slice %79 {offsets = [0, 0], sizes = [4, 18], strides = [1, 1]} : vector<12x18xf32> to vector<4x18xf32>
    %84 = vector.extract_strided_slice %79 {offsets = [4, 0], sizes = [4, 18], strides = [1, 1]} : vector<12x18xf32> to vector<4x18xf32>
    %85 = vector.extract_strided_slice %79 {offsets = [8, 0], sizes = [4, 18], strides = [1, 1]} : vector<12x18xf32> to vector<4x18xf32>
    %86 = tpu.concatenate %83, %84, %85 in 1 : vector<4x18xf32>, vector<4x18xf32>, vector<4x18xf32> -> vector<4x54xf32>
    %87 = vector.extract_strided_slice %82 {offsets = [0, 0], sizes = [4, 18], strides = [1, 1]} : vector<12x18xf32> to vector<4x18xf32>
    %88 = vector.extract_strided_slice %82 {offsets = [4, 0], sizes = [4, 18], strides = [1, 1]} : vector<12x18xf32> to vector<4x18xf32>
    %89 = vector.extract_strided_slice %82 {offsets = [8, 0], sizes = [4, 18], strides = [1, 1]} : vector<12x18xf32> to vector<4x18xf32>
    %90 = tpu.concatenate %87, %88, %89 in 1 : vector<4x18xf32>, vector<4x18xf32>, vector<4x18xf32> -> vector<4x54xf32>
    %91 = tpu.concatenate %86, %90 in 0 : vector<4x54xf32>, vector<4x54xf32> -> vector<8x54xf32>
    %cst_22 = arith.constant dense<0.000000e+00> : vector<8x32xf32>
    %92 = tpu.matmul %91, %4, %cst_22 {dimension_numbers = #tpu.dot_dimension_numbers<[1], [0], [0], [1], [0, 0, 1, 1], [], []>} : vector<8x54xf32>, vector<54x32xf32>, vector<8x32xf32> -> vector<8x32xf32>
    %93 = vector.extract_strided_slice %92 {offsets = [0, 0], sizes = [4, 32], strides = [1, 1]} : vector<8x32xf32> to vector<4x32xf32>
    %94 = vector.extract_strided_slice %92 {offsets = [4, 0], sizes = [4, 32], strides = [1, 1]} : vector<8x32xf32> to vector<4x32xf32>
    %95 = tpu.concatenate %93, %94 in 1 : vector<4x32xf32>, vector<4x32xf32> -> vector<4x64xf32>
    %96 = arith.addf %95, %7 : vector<4x64xf32>
    %c0_23 = arith.constant 0 : index
    %c0_24 = arith.constant 0 : index
    %c3 = arith.constant 3 : index
    %c0_25 = arith.constant 0 : index
    %97 = vector.load %arg6[%c0_23, %c0_24, %c3, %c0_25] : memref<1x4x16x64xf32, #tpu.memory_space<vmem>>, vector<1x4x1x64xf32>
    %98 = vector.shape_cast %97 : vector<1x4x1x64xf32> to vector<4x64xf32>
    %99 = vector.shape_cast %96 : vector<4x64xf32> to vector<1x4x1x64xf32>
    tpu.vector_store %arg6[%c0_23, %c0_24, %c3, %c0_25], %99 {strides = array<i32>} : memref<1x4x16x64xf32, #tpu.memory_space<vmem>>, vector<1x4x1x64xf32>,
    %100 = vector.extract_strided_slice %3 {offsets = [0, 72], sizes = [12, 18], strides = [1, 1]} : vector<48x324xf32> to vector<12x18xf32>
    %101 = vector.extract_strided_slice %3 {offsets = [12, 90], sizes = [12, 18], strides = [1, 1]} : vector<48x324xf32> to vector<12x18xf32>
    %102 = arith.addf %100, %101 : vector<12x18xf32>
    %103 = vector.extract_strided_slice %3 {offsets = [24, 90], sizes = [12, 18], strides = [1, 1]} : vector<48x324xf32> to vector<12x18xf32>
    %104 = vector.extract_strided_slice %3 {offsets = [36, 108], sizes = [12, 18], strides = [1, 1]} : vector<48x324xf32> to vector<12x18xf32>
    %105 = arith.addf %103, %104 : vector<12x18xf32>
    %106 = vector.extract_strided_slice %102 {offsets = [0, 0], sizes = [4, 18], strides = [1, 1]} : vector<12x18xf32> to vector<4x18xf32>
    %107 = vector.extract_strided_slice %102 {offsets = [4, 0], sizes = [4, 18], strides = [1, 1]} : vector<12x18xf32> to vector<4x18xf32>
    %108 = vector.extract_strided_slice %102 {offsets = [8, 0], sizes = [4, 18], strides = [1, 1]} : vector<12x18xf32> to vector<4x18xf32>
    %109 = tpu.concatenate %106, %107, %108 in 1 : vector<4x18xf32>, vector<4x18xf32>, vector<4x18xf32> -> vector<4x54xf32>
    %110 = vector.extract_strided_slice %105 {offsets = [0, 0], sizes = [4, 18], strides = [1, 1]} : vector<12x18xf32> to vector<4x18xf32>
    %111 = vector.extract_strided_slice %105 {offsets = [4, 0], sizes = [4, 18], strides = [1, 1]} : vector<12x18xf32> to vector<4x18xf32>
    %112 = vector.extract_strided_slice %105 {offsets = [8, 0], sizes = [4, 18], strides = [1, 1]} : vector<12x18xf32> to vector<4x18xf32>
    %113 = tpu.concatenate %110, %111, %112 in 1 : vector<4x18xf32>, vector<4x18xf32>, vector<4x18xf32> -> vector<4x54xf32>
    %114 = tpu.concatenate %109, %113 in 0 : vector<4x54xf32>, vector<4x54xf32> -> vector<8x54xf32>
    %cst_26 = arith.constant dense<0.000000e+00> : vector<8x32xf32>
    %115 = tpu.matmul %114, %4, %cst_26 {dimension_numbers = #tpu.dot_dimension_numbers<[1], [0], [0], [1], [0, 0, 1, 1], [], []>} : vector<8x54xf32>, vector<54x32xf32>, vector<8x32xf32> -> vector<8x32xf32>
    %116 = vector.extract_strided_slice %115 {offsets = [0, 0], sizes = [4, 32], strides = [1, 1]} : vector<8x32xf32> to vector<4x32xf32>
    %117 = vector.extract_strided_slice %115 {offsets = [4, 0], sizes = [4, 32], strides = [1, 1]} : vector<8x32xf32> to vector<4x32xf32>
    %118 = tpu.concatenate %116, %117 in 1 : vector<4x32xf32>, vector<4x32xf32> -> vector<4x64xf32>
    %119 = arith.addf %118, %7 : vector<4x64xf32>
    %c0_27 = arith.constant 0 : index
    %c0_28 = arith.constant 0 : index
    %c4 = arith.constant 4 : index
    %c0_29 = arith.constant 0 : index
    %120 = vector.load %arg6[%c0_27, %c0_28, %c4, %c0_29] : memref<1x4x16x64xf32, #tpu.memory_space<vmem>>, vector<1x4x1x64xf32>
    %121 = vector.shape_cast %120 : vector<1x4x1x64xf32> to vector<4x64xf32>
    %122 = vector.shape_cast %119 : vector<4x64xf32> to vector<1x4x1x64xf32>
    tpu.vector_store %arg6[%c0_27, %c0_28, %c4, %c0_29], %122 {strides = array<i32>} : memref<1x4x16x64xf32, #tpu.memory_space<vmem>>, vector<1x4x1x64xf32>,
    %123 = vector.extract_strided_slice %3 {offsets = [0, 90], sizes = [12, 18], strides = [1, 1]} : vector<48x324xf32> to vector<12x18xf32>
    %124 = vector.extract_strided_slice %3 {offsets = [12, 108], sizes = [12, 18], strides = [1, 1]} : vector<48x324xf32> to vector<12x18xf32>
    %125 = arith.addf %123, %124 : vector<12x18xf32>
    %126 = vector.extract_strided_slice %3 {offsets = [24, 108], sizes = [12, 18], strides = [1, 1]} : vector<48x324xf32> to vector<12x18xf32>
    %127 = vector.extract_strided_slice %3 {offsets = [36, 126], sizes = [12, 18], strides = [1, 1]} : vector<48x324xf32> to vector<12x18xf32>
    %128 = arith.addf %126, %127 : vector<12x18xf32>
    %129 = vector.extract_strided_slice %125 {offsets = [0, 0], sizes = [4, 18], strides = [1, 1]} : vector<12x18xf32> to vector<4x18xf32>
    %130 = vector.extract_strided_slice %125 {offsets = [4, 0], sizes = [4, 18], strides = [1, 1]} : vector<12x18xf32> to vector<4x18xf32>
    %131 = vector.extract_strided_slice %125 {offsets = [8, 0], sizes = [4, 18], strides = [1, 1]} : vector<12x18xf32> to vector<4x18xf32>
    %132 = tpu.concatenate %129, %130, %131 in 1 : vector<4x18xf32>, vector<4x18xf32>, vector<4x18xf32> -> vector<4x54xf32>
    %133 = vector.extract_strided_slice %128 {offsets = [0, 0], sizes = [4, 18], strides = [1, 1]} : vector<12x18xf32> to vector<4x18xf32>
    %134 = vector.extract_strided_slice %128 {offsets = [4, 0], sizes = [4, 18], strides = [1, 1]} : vector<12x18xf32> to vector<4x18xf32>
    %135 = vector.extract_strided_slice %128 {offsets = [8, 0], sizes = [4, 18], strides = [1, 1]} : vector<12x18xf32> to vector<4x18xf32>
    %136 = tpu.concatenate %133, %134, %135 in 1 : vector<4x18xf32>, vector<4x18xf32>, vector<4x18xf32> -> vector<4x54xf32>
    %137 = tpu.concatenate %132, %136 in 0 : vector<4x54xf32>, vector<4x54xf32> -> vector<8x54xf32>
    %cst_30 = arith.constant dense<0.000000e+00> : vector<8x32xf32>
    %138 = tpu.matmul %137, %4, %cst_30 {dimension_numbers = #tpu.dot_dimension_numbers<[1], [0], [0], [1], [0, 0, 1, 1], [], []>} : vector<8x54xf32>, vector<54x32xf32>, vector<8x32xf32> -> vector<8x32xf32>
    %139 = vector.extract_strided_slice %138 {offsets = [0, 0], sizes = [4, 32], strides = [1, 1]} : vector<8x32xf32> to vector<4x32xf32>
    %140 = vector.extract_strided_slice %138 {offsets = [4, 0], sizes = [4, 32], strides = [1, 1]} : vector<8x32xf32> to vector<4x32xf32>
    %141 = tpu.concatenate %139, %140 in 1 : vector<4x32xf32>, vector<4x32xf32> -> vector<4x64xf32>
    %142 = arith.addf %141, %7 : vector<4x64xf32>
    %c0_31 = arith.constant 0 : index
    %c0_32 = arith.constant 0 : index
    %c5 = arith.constant 5 : index
    %c0_33 = arith.constant 0 : index
    %143 = vector.load %arg6[%c0_31, %c0_32, %c5, %c0_33] : memref<1x4x16x64xf32, #tpu.memory_space<vmem>>, vector<1x4x1x64xf32>
    %144 = vector.shape_cast %143 : vector<1x4x1x64xf32> to vector<4x64xf32>
    %145 = vector.shape_cast %142 : vector<4x64xf32> to vector<1x4x1x64xf32>
    tpu.vector_store %arg6[%c0_31, %c0_32, %c5, %c0_33], %145 {strides = array<i32>} : memref<1x4x16x64xf32, #tpu.memory_space<vmem>>, vector<1x4x1x64xf32>,
    %146 = vector.extract_strided_slice %3 {offsets = [0, 108], sizes = [12, 18], strides = [1, 1]} : vector<48x324xf32> to vector<12x18xf32>
    %147 = vector.extract_strided_slice %3 {offsets = [12, 126], sizes = [12, 18], strides = [1, 1]} : vector<48x324xf32> to vector<12x18xf32>
    %148 = arith.addf %146, %147 : vector<12x18xf32>
    %149 = vector.extract_strided_slice %3 {offsets = [24, 126], sizes = [12, 18], strides = [1, 1]} : vector<48x324xf32> to vector<12x18xf32>
    %150 = vector.extract_strided_slice %3 {offsets = [36, 144], sizes = [12, 18], strides = [1, 1]} : vector<48x324xf32> to vector<12x18xf32>
    %151 = arith.addf %149, %150 : vector<12x18xf32>
    %152 = vector.extract_strided_slice %148 {offsets = [0, 0], sizes = [4, 18], strides = [1, 1]} : vector<12x18xf32> to vector<4x18xf32>
    %153 = vector.extract_strided_slice %148 {offsets = [4, 0], sizes = [4, 18], strides = [1, 1]} : vector<12x18xf32> to vector<4x18xf32>
    %154 = vector.extract_strided_slice %148 {offsets = [8, 0], sizes = [4, 18], strides = [1, 1]} : vector<12x18xf32> to vector<4x18xf32>
    %155 = tpu.concatenate %152, %153, %154 in 1 : vector<4x18xf32>, vector<4x18xf32>, vector<4x18xf32> -> vector<4x54xf32>
    %156 = vector.extract_strided_slice %151 {offsets = [0, 0], sizes = [4, 18], strides = [1, 1]} : vector<12x18xf32> to vector<4x18xf32>
    %157 = vector.extract_strided_slice %151 {offsets = [4, 0], sizes = [4, 18], strides = [1, 1]} : vector<12x18xf32> to vector<4x18xf32>
    %158 = vector.extract_strided_slice %151 {offsets = [8, 0], sizes = [4, 18], strides = [1, 1]} : vector<12x18xf32> to vector<4x18xf32>
    %159 = tpu.concatenate %156, %157, %158 in 1 : vector<4x18xf32>, vector<4x18xf32>, vector<4x18xf32> -> vector<4x54xf32>
    %160 = tpu.concatenate %155, %159 in 0 : vector<4x54xf32>, vector<4x54xf32> -> vector<8x54xf32>
    %cst_34 = arith.constant dense<0.000000e+00> : vector<8x32xf32>
    %161 = tpu.matmul %160, %4, %cst_34 {dimension_numbers = #tpu.dot_dimension_numbers<[1], [0], [0], [1], [0, 0, 1, 1], [], []>} : vector<8x54xf32>, vector<54x32xf32>, vector<8x32xf32> -> vector<8x32xf32>
    %162 = vector.extract_strided_slice %161 {offsets = [0, 0], sizes = [4, 32], strides = [1, 1]} : vector<8x32xf32> to vector<4x32xf32>
    %163 = vector.extract_strided_slice %161 {offsets = [4, 0], sizes = [4, 32], strides = [1, 1]} : vector<8x32xf32> to vector<4x32xf32>
    %164 = tpu.concatenate %162, %163 in 1 : vector<4x32xf32>, vector<4x32xf32> -> vector<4x64xf32>
    %165 = arith.addf %164, %7 : vector<4x64xf32>
    %c0_35 = arith.constant 0 : index
    %c0_36 = arith.constant 0 : index
    %c6 = arith.constant 6 : index
    %c0_37 = arith.constant 0 : index
    %166 = vector.load %arg6[%c0_35, %c0_36, %c6, %c0_37] : memref<1x4x16x64xf32, #tpu.memory_space<vmem>>, vector<1x4x1x64xf32>
    %167 = vector.shape_cast %166 : vector<1x4x1x64xf32> to vector<4x64xf32>
    %168 = vector.shape_cast %165 : vector<4x64xf32> to vector<1x4x1x64xf32>
    tpu.vector_store %arg6[%c0_35, %c0_36, %c6, %c0_37], %168 {strides = array<i32>} : memref<1x4x16x64xf32, #tpu.memory_space<vmem>>, vector<1x4x1x64xf32>,
    %169 = vector.extract_strided_slice %3 {offsets = [0, 126], sizes = [12, 18], strides = [1, 1]} : vector<48x324xf32> to vector<12x18xf32>
    %170 = vector.extract_strided_slice %3 {offsets = [12, 144], sizes = [12, 18], strides = [1, 1]} : vector<48x324xf32> to vector<12x18xf32>
    %171 = arith.addf %169, %170 : vector<12x18xf32>
    %172 = vector.extract_strided_slice %3 {offsets = [24, 144], sizes = [12, 18], strides = [1, 1]} : vector<48x324xf32> to vector<12x18xf32>
    %173 = vector.extract_strided_slice %3 {offsets = [36, 162], sizes = [12, 18], strides = [1, 1]} : vector<48x324xf32> to vector<12x18xf32>
    %174 = arith.addf %172, %173 : vector<12x18xf32>
    %175 = vector.extract_strided_slice %171 {offsets = [0, 0], sizes = [4, 18], strides = [1, 1]} : vector<12x18xf32> to vector<4x18xf32>
    %176 = vector.extract_strided_slice %171 {offsets = [4, 0], sizes = [4, 18], strides = [1, 1]} : vector<12x18xf32> to vector<4x18xf32>
    %177 = vector.extract_strided_slice %171 {offsets = [8, 0], sizes = [4, 18], strides = [1, 1]} : vector<12x18xf32> to vector<4x18xf32>
    %178 = tpu.concatenate %175, %176, %177 in 1 : vector<4x18xf32>, vector<4x18xf32>, vector<4x18xf32> -> vector<4x54xf32>
    %179 = vector.extract_strided_slice %174 {offsets = [0, 0], sizes = [4, 18], strides = [1, 1]} : vector<12x18xf32> to vector<4x18xf32>
    %180 = vector.extract_strided_slice %174 {offsets = [4, 0], sizes = [4, 18], strides = [1, 1]} : vector<12x18xf32> to vector<4x18xf32>
    %181 = vector.extract_strided_slice %174 {offsets = [8, 0], sizes = [4, 18], strides = [1, 1]} : vector<12x18xf32> to vector<4x18xf32>
    %182 = tpu.concatenate %179, %180, %181 in 1 : vector<4x18xf32>, vector<4x18xf32>, vector<4x18xf32> -> vector<4x54xf32>
    %183 = tpu.concatenate %178, %182 in 0 : vector<4x54xf32>, vector<4x54xf32> -> vector<8x54xf32>
    %cst_38 = arith.constant dense<0.000000e+00> : vector<8x32xf32>
    %184 = tpu.matmul %183, %4, %cst_38 {dimension_numbers = #tpu.dot_dimension_numbers<[1], [0], [0], [1], [0, 0, 1, 1], [], []>} : vector<8x54xf32>, vector<54x32xf32>, vector<8x32xf32> -> vector<8x32xf32>
    %185 = vector.extract_strided_slice %184 {offsets = [0, 0], sizes = [4, 32], strides = [1, 1]} : vector<8x32xf32> to vector<4x32xf32>
    %186 = vector.extract_strided_slice %184 {offsets = [4, 0], sizes = [4, 32], strides = [1, 1]} : vector<8x32xf32> to vector<4x32xf32>
    %187 = tpu.concatenate %185, %186 in 1 : vector<4x32xf32>, vector<4x32xf32> -> vector<4x64xf32>
    %188 = arith.addf %187, %7 : vector<4x64xf32>
    %c0_39 = arith.constant 0 : index
    %c0_40 = arith.constant 0 : index
    %c7 = arith.constant 7 : index
    %c0_41 = arith.constant 0 : index
    %189 = vector.load %arg6[%c0_39, %c0_40, %c7, %c0_41] : memref<1x4x16x64xf32, #tpu.memory_space<vmem>>, vector<1x4x1x64xf32>
    %190 = vector.shape_cast %189 : vector<1x4x1x64xf32> to vector<4x64xf32>
    %191 = vector.shape_cast %188 : vector<4x64xf32> to vector<1x4x1x64xf32>
    tpu.vector_store %arg6[%c0_39, %c0_40, %c7, %c0_41], %191 {strides = array<i32>} : memref<1x4x16x64xf32, #tpu.memory_space<vmem>>, vector<1x4x1x64xf32>,
    %192 = vector.extract_strided_slice %3 {offsets = [0, 144], sizes = [12, 18], strides = [1, 1]} : vector<48x324xf32> to vector<12x18xf32>
    %193 = vector.extract_strided_slice %3 {offsets = [12, 162], sizes = [12, 18], strides = [1, 1]} : vector<48x324xf32> to vector<12x18xf32>
    %194 = arith.addf %192, %193 : vector<12x18xf32>
    %195 = vector.extract_strided_slice %3 {offsets = [24, 162], sizes = [12, 18], strides = [1, 1]} : vector<48x324xf32> to vector<12x18xf32>
    %196 = vector.extract_strided_slice %3 {offsets = [36, 180], sizes = [12, 18], strides = [1, 1]} : vector<48x324xf32> to vector<12x18xf32>
    %197 = arith.addf %195, %196 : vector<12x18xf32>
    %198 = vector.extract_strided_slice %194 {offsets = [0, 0], sizes = [4, 18], strides = [1, 1]} : vector<12x18xf32> to vector<4x18xf32>
    %199 = vector.extract_strided_slice %194 {offsets = [4, 0], sizes = [4, 18], strides = [1, 1]} : vector<12x18xf32> to vector<4x18xf32>
    %200 = vector.extract_strided_slice %194 {offsets = [8, 0], sizes = [4, 18], strides = [1, 1]} : vector<12x18xf32> to vector<4x18xf32>
    %201 = tpu.concatenate %198, %199, %200 in 1 : vector<4x18xf32>, vector<4x18xf32>, vector<4x18xf32> -> vector<4x54xf32>
    %202 = vector.extract_strided_slice %197 {offsets = [0, 0], sizes = [4, 18], strides = [1, 1]} : vector<12x18xf32> to vector<4x18xf32>
    %203 = vector.extract_strided_slice %197 {offsets = [4, 0], sizes = [4, 18], strides = [1, 1]} : vector<12x18xf32> to vector<4x18xf32>
    %204 = vector.extract_strided_slice %197 {offsets = [8, 0], sizes = [4, 18], strides = [1, 1]} : vector<12x18xf32> to vector<4x18xf32>
    %205 = tpu.concatenate %202, %203, %204 in 1 : vector<4x18xf32>, vector<4x18xf32>, vector<4x18xf32> -> vector<4x54xf32>
    %206 = tpu.concatenate %201, %205 in 0 : vector<4x54xf32>, vector<4x54xf32> -> vector<8x54xf32>
    %cst_42 = arith.constant dense<0.000000e+00> : vector<8x32xf32>
    %207 = tpu.matmul %206, %4, %cst_42 {dimension_numbers = #tpu.dot_dimension_numbers<[1], [0], [0], [1], [0, 0, 1, 1], [], []>} : vector<8x54xf32>, vector<54x32xf32>, vector<8x32xf32> -> vector<8x32xf32>
    %208 = vector.extract_strided_slice %207 {offsets = [0, 0], sizes = [4, 32], strides = [1, 1]} : vector<8x32xf32> to vector<4x32xf32>
    %209 = vector.extract_strided_slice %207 {offsets = [4, 0], sizes = [4, 32], strides = [1, 1]} : vector<8x32xf32> to vector<4x32xf32>
    %210 = tpu.concatenate %208, %209 in 1 : vector<4x32xf32>, vector<4x32xf32> -> vector<4x64xf32>
    %211 = arith.addf %210, %7 : vector<4x64xf32>
    %c0_43 = arith.constant 0 : index
    %c0_44 = arith.constant 0 : index
    %c8 = arith.constant 8 : index
    %c0_45 = arith.constant 0 : index
    %212 = vector.load %arg6[%c0_43, %c0_44, %c8, %c0_45] : memref<1x4x16x64xf32, #tpu.memory_space<vmem>>, vector<1x4x1x64xf32>
    %213 = vector.shape_cast %212 : vector<1x4x1x64xf32> to vector<4x64xf32>
    %214 = vector.shape_cast %211 : vector<4x64xf32> to vector<1x4x1x64xf32>
    tpu.vector_store %arg6[%c0_43, %c0_44, %c8, %c0_45], %214 {strides = array<i32>} : memref<1x4x16x64xf32, #tpu.memory_space<vmem>>, vector<1x4x1x64xf32>,
    %215 = vector.extract_strided_slice %3 {offsets = [0, 162], sizes = [12, 18], strides = [1, 1]} : vector<48x324xf32> to vector<12x18xf32>
    %216 = vector.extract_strided_slice %3 {offsets = [12, 180], sizes = [12, 18], strides = [1, 1]} : vector<48x324xf32> to vector<12x18xf32>
    %217 = arith.addf %215, %216 : vector<12x18xf32>
    %218 = vector.extract_strided_slice %3 {offsets = [24, 180], sizes = [12, 18], strides = [1, 1]} : vector<48x324xf32> to vector<12x18xf32>
    %219 = vector.extract_strided_slice %3 {offsets = [36, 198], sizes = [12, 18], strides = [1, 1]} : vector<48x324xf32> to vector<12x18xf32>
    %220 = arith.addf %218, %219 : vector<12x18xf32>
    %221 = vector.extract_strided_slice %217 {offsets = [0, 0], sizes = [4, 18], strides = [1, 1]} : vector<12x18xf32> to vector<4x18xf32>
    %222 = vector.extract_strided_slice %217 {offsets = [4, 0], sizes = [4, 18], strides = [1, 1]} : vector<12x18xf32> to vector<4x18xf32>
    %223 = vector.extract_strided_slice %217 {offsets = [8, 0], sizes = [4, 18], strides = [1, 1]} : vector<12x18xf32> to vector<4x18xf32>
    %224 = tpu.concatenate %221, %222, %223 in 1 : vector<4x18xf32>, vector<4x18xf32>, vector<4x18xf32> -> vector<4x54xf32>
    %225 = vector.extract_strided_slice %220 {offsets = [0, 0], sizes = [4, 18], strides = [1, 1]} : vector<12x18xf32> to vector<4x18xf32>
    %226 = vector.extract_strided_slice %220 {offsets = [4, 0], sizes = [4, 18], strides = [1, 1]} : vector<12x18xf32> to vector<4x18xf32>
    %227 = vector.extract_strided_slice %220 {offsets = [8, 0], sizes = [4, 18], strides = [1, 1]} : vector<12x18xf32> to vector<4x18xf32>
    %228 = tpu.concatenate %225, %226, %227 in 1 : vector<4x18xf32>, vector<4x18xf32>, vector<4x18xf32> -> vector<4x54xf32>
    %229 = tpu.concatenate %224, %228 in 0 : vector<4x54xf32>, vector<4x54xf32> -> vector<8x54xf32>
    %cst_46 = arith.constant dense<0.000000e+00> : vector<8x32xf32>
    %230 = tpu.matmul %229, %4, %cst_46 {dimension_numbers = #tpu.dot_dimension_numbers<[1], [0], [0], [1], [0, 0, 1, 1], [], []>} : vector<8x54xf32>, vector<54x32xf32>, vector<8x32xf32> -> vector<8x32xf32>
    %231 = vector.extract_strided_slice %230 {offsets = [0, 0], sizes = [4, 32], strides = [1, 1]} : vector<8x32xf32> to vector<4x32xf32>
    %232 = vector.extract_strided_slice %230 {offsets = [4, 0], sizes = [4, 32], strides = [1, 1]} : vector<8x32xf32> to vector<4x32xf32>
    %233 = tpu.concatenate %231, %232 in 1 : vector<4x32xf32>, vector<4x32xf32> -> vector<4x64xf32>
    %234 = arith.addf %233, %7 : vector<4x64xf32>
    %c0_47 = arith.constant 0 : index
    %c0_48 = arith.constant 0 : index
    %c9 = arith.constant 9 : index
    %c0_49 = arith.constant 0 : index
    %235 = vector.load %arg6[%c0_47, %c0_48, %c9, %c0_49] : memref<1x4x16x64xf32, #tpu.memory_space<vmem>>, vector<1x4x1x64xf32>
    %236 = vector.shape_cast %235 : vector<1x4x1x64xf32> to vector<4x64xf32>
    %237 = vector.shape_cast %234 : vector<4x64xf32> to vector<1x4x1x64xf32>
    tpu.vector_store %arg6[%c0_47, %c0_48, %c9, %c0_49], %237 {strides = array<i32>} : memref<1x4x16x64xf32, #tpu.memory_space<vmem>>, vector<1x4x1x64xf32>,
    %238 = vector.extract_strided_slice %3 {offsets = [0, 180], sizes = [12, 18], strides = [1, 1]} : vector<48x324xf32> to vector<12x18xf32>
    %239 = vector.extract_strided_slice %3 {offsets = [12, 198], sizes = [12, 18], strides = [1, 1]} : vector<48x324xf32> to vector<12x18xf32>
    %240 = arith.addf %238, %239 : vector<12x18xf32>
    %241 = vector.extract_strided_slice %3 {offsets = [24, 198], sizes = [12, 18], strides = [1, 1]} : vector<48x324xf32> to vector<12x18xf32>
    %242 = vector.extract_strided_slice %3 {offsets = [36, 216], sizes = [12, 18], strides = [1, 1]} : vector<48x324xf32> to vector<12x18xf32>
    %243 = arith.addf %241, %242 : vector<12x18xf32>
    %244 = vector.extract_strided_slice %240 {offsets = [0, 0], sizes = [4, 18], strides = [1, 1]} : vector<12x18xf32> to vector<4x18xf32>
    %245 = vector.extract_strided_slice %240 {offsets = [4, 0], sizes = [4, 18], strides = [1, 1]} : vector<12x18xf32> to vector<4x18xf32>
    %246 = vector.extract_strided_slice %240 {offsets = [8, 0], sizes = [4, 18], strides = [1, 1]} : vector<12x18xf32> to vector<4x18xf32>
    %247 = tpu.concatenate %244, %245, %246 in 1 : vector<4x18xf32>, vector<4x18xf32>, vector<4x18xf32> -> vector<4x54xf32>
    %248 = vector.extract_strided_slice %243 {offsets = [0, 0], sizes = [4, 18], strides = [1, 1]} : vector<12x18xf32> to vector<4x18xf32>
    %249 = vector.extract_strided_slice %243 {offsets = [4, 0], sizes = [4, 18], strides = [1, 1]} : vector<12x18xf32> to vector<4x18xf32>
    %250 = vector.extract_strided_slice %243 {offsets = [8, 0], sizes = [4, 18], strides = [1, 1]} : vector<12x18xf32> to vector<4x18xf32>
    %251 = tpu.concatenate %248, %249, %250 in 1 : vector<4x18xf32>, vector<4x18xf32>, vector<4x18xf32> -> vector<4x54xf32>
    %252 = tpu.concatenate %247, %251 in 0 : vector<4x54xf32>, vector<4x54xf32> -> vector<8x54xf32>
    %cst_50 = arith.constant dense<0.000000e+00> : vector<8x32xf32>
    %253 = tpu.matmul %252, %4, %cst_50 {dimension_numbers = #tpu.dot_dimension_numbers<[1], [0], [0], [1], [0, 0, 1, 1], [], []>} : vector<8x54xf32>, vector<54x32xf32>, vector<8x32xf32> -> vector<8x32xf32>
    %254 = vector.extract_strided_slice %253 {offsets = [0, 0], sizes = [4, 32], strides = [1, 1]} : vector<8x32xf32> to vector<4x32xf32>
    %255 = vector.extract_strided_slice %253 {offsets = [4, 0], sizes = [4, 32], strides = [1, 1]} : vector<8x32xf32> to vector<4x32xf32>
    %256 = tpu.concatenate %254, %255 in 1 : vector<4x32xf32>, vector<4x32xf32> -> vector<4x64xf32>
    %257 = arith.addf %256, %7 : vector<4x64xf32>
    %c0_51 = arith.constant 0 : index
    %c0_52 = arith.constant 0 : index
    %c10 = arith.constant 10 : index
    %c0_53 = arith.constant 0 : index
    %258 = vector.load %arg6[%c0_51, %c0_52, %c10, %c0_53] : memref<1x4x16x64xf32, #tpu.memory_space<vmem>>, vector<1x4x1x64xf32>
    %259 = vector.shape_cast %258 : vector<1x4x1x64xf32> to vector<4x64xf32>
    %260 = vector.shape_cast %257 : vector<4x64xf32> to vector<1x4x1x64xf32>
    tpu.vector_store %arg6[%c0_51, %c0_52, %c10, %c0_53], %260 {strides = array<i32>} : memref<1x4x16x64xf32, #tpu.memory_space<vmem>>, vector<1x4x1x64xf32>,
    %261 = vector.extract_strided_slice %3 {offsets = [0, 198], sizes = [12, 18], strides = [1, 1]} : vector<48x324xf32> to vector<12x18xf32>
    %262 = vector.extract_strided_slice %3 {offsets = [12, 216], sizes = [12, 18], strides = [1, 1]} : vector<48x324xf32> to vector<12x18xf32>
    %263 = arith.addf %261, %262 : vector<12x18xf32>
    %264 = vector.extract_strided_slice %3 {offsets = [24, 216], sizes = [12, 18], strides = [1, 1]} : vector<48x324xf32> to vector<12x18xf32>
    %265 = vector.extract_strided_slice %3 {offsets = [36, 234], sizes = [12, 18], strides = [1, 1]} : vector<48x324xf32> to vector<12x18xf32>
    %266 = arith.addf %264, %265 : vector<12x18xf32>
    %267 = vector.extract_strided_slice %263 {offsets = [0, 0], sizes = [4, 18], strides = [1, 1]} : vector<12x18xf32> to vector<4x18xf32>
    %268 = vector.extract_strided_slice %263 {offsets = [4, 0], sizes = [4, 18], strides = [1, 1]} : vector<12x18xf32> to vector<4x18xf32>
    %269 = vector.extract_strided_slice %263 {offsets = [8, 0], sizes = [4, 18], strides = [1, 1]} : vector<12x18xf32> to vector<4x18xf32>
    %270 = tpu.concatenate %267, %268, %269 in 1 : vector<4x18xf32>, vector<4x18xf32>, vector<4x18xf32> -> vector<4x54xf32>
    %271 = vector.extract_strided_slice %266 {offsets = [0, 0], sizes = [4, 18], strides = [1, 1]} : vector<12x18xf32> to vector<4x18xf32>
    %272 = vector.extract_strided_slice %266 {offsets = [4, 0], sizes = [4, 18], strides = [1, 1]} : vector<12x18xf32> to vector<4x18xf32>
    %273 = vector.extract_strided_slice %266 {offsets = [8, 0], sizes = [4, 18], strides = [1, 1]} : vector<12x18xf32> to vector<4x18xf32>
    %274 = tpu.concatenate %271, %272, %273 in 1 : vector<4x18xf32>, vector<4x18xf32>, vector<4x18xf32> -> vector<4x54xf32>
    %275 = tpu.concatenate %270, %274 in 0 : vector<4x54xf32>, vector<4x54xf32> -> vector<8x54xf32>
    %cst_54 = arith.constant dense<0.000000e+00> : vector<8x32xf32>
    %276 = tpu.matmul %275, %4, %cst_54 {dimension_numbers = #tpu.dot_dimension_numbers<[1], [0], [0], [1], [0, 0, 1, 1], [], []>} : vector<8x54xf32>, vector<54x32xf32>, vector<8x32xf32> -> vector<8x32xf32>
    %277 = vector.extract_strided_slice %276 {offsets = [0, 0], sizes = [4, 32], strides = [1, 1]} : vector<8x32xf32> to vector<4x32xf32>
    %278 = vector.extract_strided_slice %276 {offsets = [4, 0], sizes = [4, 32], strides = [1, 1]} : vector<8x32xf32> to vector<4x32xf32>
    %279 = tpu.concatenate %277, %278 in 1 : vector<4x32xf32>, vector<4x32xf32> -> vector<4x64xf32>
    %280 = arith.addf %279, %7 : vector<4x64xf32>
    %c0_55 = arith.constant 0 : index
    %c0_56 = arith.constant 0 : index
    %c11 = arith.constant 11 : index
    %c0_57 = arith.constant 0 : index
    %281 = vector.load %arg6[%c0_55, %c0_56, %c11, %c0_57] : memref<1x4x16x64xf32, #tpu.memory_space<vmem>>, vector<1x4x1x64xf32>
    %282 = vector.shape_cast %281 : vector<1x4x1x64xf32> to vector<4x64xf32>
    %283 = vector.shape_cast %280 : vector<4x64xf32> to vector<1x4x1x64xf32>
    tpu.vector_store %arg6[%c0_55, %c0_56, %c11, %c0_57], %283 {strides = array<i32>} : memref<1x4x16x64xf32, #tpu.memory_space<vmem>>, vector<1x4x1x64xf32>,
    %284 = vector.extract_strided_slice %3 {offsets = [0, 216], sizes = [12, 18], strides = [1, 1]} : vector<48x324xf32> to vector<12x18xf32>
    %285 = vector.extract_strided_slice %3 {offsets = [12, 234], sizes = [12, 18], strides = [1, 1]} : vector<48x324xf32> to vector<12x18xf32>
    %286 = arith.addf %284, %285 : vector<12x18xf32>
    %287 = vector.extract_strided_slice %3 {offsets = [24, 234], sizes = [12, 18], strides = [1, 1]} : vector<48x324xf32> to vector<12x18xf32>
    %288 = vector.extract_strided_slice %3 {offsets = [36, 252], sizes = [12, 18], strides = [1, 1]} : vector<48x324xf32> to vector<12x18xf32>
    %289 = arith.addf %287, %288 : vector<12x18xf32>
    %290 = vector.extract_strided_slice %286 {offsets = [0, 0], sizes = [4, 18], strides = [1, 1]} : vector<12x18xf32> to vector<4x18xf32>
    %291 = vector.extract_strided_slice %286 {offsets = [4, 0], sizes = [4, 18], strides = [1, 1]} : vector<12x18xf32> to vector<4x18xf32>
    %292 = vector.extract_strided_slice %286 {offsets = [8, 0], sizes = [4, 18], strides = [1, 1]} : vector<12x18xf32> to vector<4x18xf32>
    %293 = tpu.concatenate %290, %291, %292 in 1 : vector<4x18xf32>, vector<4x18xf32>, vector<4x18xf32> -> vector<4x54xf32>
    %294 = vector.extract_strided_slice %289 {offsets = [0, 0], sizes = [4, 18], strides = [1, 1]} : vector<12x18xf32> to vector<4x18xf32>
    %295 = vector.extract_strided_slice %289 {offsets = [4, 0], sizes = [4, 18], strides = [1, 1]} : vector<12x18xf32> to vector<4x18xf32>
    %296 = vector.extract_strided_slice %289 {offsets = [8, 0], sizes = [4, 18], strides = [1, 1]} : vector<12x18xf32> to vector<4x18xf32>
    %297 = tpu.concatenate %294, %295, %296 in 1 : vector<4x18xf32>, vector<4x18xf32>, vector<4x18xf32> -> vector<4x54xf32>
    %298 = tpu.concatenate %293, %297 in 0 : vector<4x54xf32>, vector<4x54xf32> -> vector<8x54xf32>
    %cst_58 = arith.constant dense<0.000000e+00> : vector<8x32xf32>
    %299 = tpu.matmul %298, %4, %cst_58 {dimension_numbers = #tpu.dot_dimension_numbers<[1], [0], [0], [1], [0, 0, 1, 1], [], []>} : vector<8x54xf32>, vector<54x32xf32>, vector<8x32xf32> -> vector<8x32xf32>
    %300 = vector.extract_strided_slice %299 {offsets = [0, 0], sizes = [4, 32], strides = [1, 1]} : vector<8x32xf32> to vector<4x32xf32>
    %301 = vector.extract_strided_slice %299 {offsets = [4, 0], sizes = [4, 32], strides = [1, 1]} : vector<8x32xf32> to vector<4x32xf32>
    %302 = tpu.concatenate %300, %301 in 1 : vector<4x32xf32>, vector<4x32xf32> -> vector<4x64xf32>
    %303 = arith.addf %302, %7 : vector<4x64xf32>
    %c0_59 = arith.constant 0 : index
    %c0_60 = arith.constant 0 : index
    %c12 = arith.constant 12 : index
    %c0_61 = arith.constant 0 : index
    %304 = vector.load %arg6[%c0_59, %c0_60, %c12, %c0_61] : memref<1x4x16x64xf32, #tpu.memory_space<vmem>>, vector<1x4x1x64xf32>
    %305 = vector.shape_cast %304 : vector<1x4x1x64xf32> to vector<4x64xf32>
    %306 = vector.shape_cast %303 : vector<4x64xf32> to vector<1x4x1x64xf32>
    tpu.vector_store %arg6[%c0_59, %c0_60, %c12, %c0_61], %306 {strides = array<i32>} : memref<1x4x16x64xf32, #tpu.memory_space<vmem>>, vector<1x4x1x64xf32>,
    %307 = vector.extract_strided_slice %3 {offsets = [0, 234], sizes = [12, 18], strides = [1, 1]} : vector<48x324xf32> to vector<12x18xf32>
    %308 = vector.extract_strided_slice %3 {offsets = [12, 252], sizes = [12, 18], strides = [1, 1]} : vector<48x324xf32> to vector<12x18xf32>
    %309 = arith.addf %307, %308 : vector<12x18xf32>
    %310 = vector.extract_strided_slice %3 {offsets = [24, 252], sizes = [12, 18], strides = [1, 1]} : vector<48x324xf32> to vector<12x18xf32>
    %311 = vector.extract_strided_slice %3 {offsets = [36, 270], sizes = [12, 18], strides = [1, 1]} : vector<48x324xf32> to vector<12x18xf32>
    %312 = arith.addf %310, %311 : vector<12x18xf32>
    %313 = vector.extract_strided_slice %309 {offsets = [0, 0], sizes = [4, 18], strides = [1, 1]} : vector<12x18xf32> to vector<4x18xf32>
    %314 = vector.extract_strided_slice %309 {offsets = [4, 0], sizes = [4, 18], strides = [1, 1]} : vector<12x18xf32> to vector<4x18xf32>
    %315 = vector.extract_strided_slice %309 {offsets = [8, 0], sizes = [4, 18], strides = [1, 1]} : vector<12x18xf32> to vector<4x18xf32>
    %316 = tpu.concatenate %313, %314, %315 in 1 : vector<4x18xf32>, vector<4x18xf32>, vector<4x18xf32> -> vector<4x54xf32>
    %317 = vector.extract_strided_slice %312 {offsets = [0, 0], sizes = [4, 18], strides = [1, 1]} : vector<12x18xf32> to vector<4x18xf32>
    %318 = vector.extract_strided_slice %312 {offsets = [4, 0], sizes = [4, 18], strides = [1, 1]} : vector<12x18xf32> to vector<4x18xf32>
    %319 = vector.extract_strided_slice %312 {offsets = [8, 0], sizes = [4, 18], strides = [1, 1]} : vector<12x18xf32> to vector<4x18xf32>
    %320 = tpu.concatenate %317, %318, %319 in 1 : vector<4x18xf32>, vector<4x18xf32>, vector<4x18xf32> -> vector<4x54xf32>
    %321 = tpu.concatenate %316, %320 in 0 : vector<4x54xf32>, vector<4x54xf32> -> vector<8x54xf32>
    %cst_62 = arith.constant dense<0.000000e+00> : vector<8x32xf32>
    %322 = tpu.matmul %321, %4, %cst_62 {dimension_numbers = #tpu.dot_dimension_numbers<[1], [0], [0], [1], [0, 0, 1, 1], [], []>} : vector<8x54xf32>, vector<54x32xf32>, vector<8x32xf32> -> vector<8x32xf32>
    %323 = vector.extract_strided_slice %322 {offsets = [0, 0], sizes = [4, 32], strides = [1, 1]} : vector<8x32xf32> to vector<4x32xf32>
    %324 = vector.extract_strided_slice %322 {offsets = [4, 0], sizes = [4, 32], strides = [1, 1]} : vector<8x32xf32> to vector<4x32xf32>
    %325 = tpu.concatenate %323, %324 in 1 : vector<4x32xf32>, vector<4x32xf32> -> vector<4x64xf32>
    %326 = arith.addf %325, %7 : vector<4x64xf32>
    %c0_63 = arith.constant 0 : index
    %c0_64 = arith.constant 0 : index
    %c13 = arith.constant 13 : index
    %c0_65 = arith.constant 0 : index
    %327 = vector.load %arg6[%c0_63, %c0_64, %c13, %c0_65] : memref<1x4x16x64xf32, #tpu.memory_space<vmem>>, vector<1x4x1x64xf32>
    %328 = vector.shape_cast %327 : vector<1x4x1x64xf32> to vector<4x64xf32>
    %329 = vector.shape_cast %326 : vector<4x64xf32> to vector<1x4x1x64xf32>
    tpu.vector_store %arg6[%c0_63, %c0_64, %c13, %c0_65], %329 {strides = array<i32>} : memref<1x4x16x64xf32, #tpu.memory_space<vmem>>, vector<1x4x1x64xf32>,
    %330 = vector.extract_strided_slice %3 {offsets = [0, 252], sizes = [12, 18], strides = [1, 1]} : vector<48x324xf32> to vector<12x18xf32>
    %331 = vector.extract_strided_slice %3 {offsets = [12, 270], sizes = [12, 18], strides = [1, 1]} : vector<48x324xf32> to vector<12x18xf32>
    %332 = arith.addf %330, %331 : vector<12x18xf32>
    %333 = vector.extract_strided_slice %3 {offsets = [24, 270], sizes = [12, 18], strides = [1, 1]} : vector<48x324xf32> to vector<12x18xf32>
    %334 = vector.extract_strided_slice %3 {offsets = [36, 288], sizes = [12, 18], strides = [1, 1]} : vector<48x324xf32> to vector<12x18xf32>
    %335 = arith.addf %333, %334 : vector<12x18xf32>
    %336 = vector.extract_strided_slice %332 {offsets = [0, 0], sizes = [4, 18], strides = [1, 1]} : vector<12x18xf32> to vector<4x18xf32>
    %337 = vector.extract_strided_slice %332 {offsets = [4, 0], sizes = [4, 18], strides = [1, 1]} : vector<12x18xf32> to vector<4x18xf32>
    %338 = vector.extract_strided_slice %332 {offsets = [8, 0], sizes = [4, 18], strides = [1, 1]} : vector<12x18xf32> to vector<4x18xf32>
    %339 = tpu.concatenate %336, %337, %338 in 1 : vector<4x18xf32>, vector<4x18xf32>, vector<4x18xf32> -> vector<4x54xf32>
    %340 = vector.extract_strided_slice %335 {offsets = [0, 0], sizes = [4, 18], strides = [1, 1]} : vector<12x18xf32> to vector<4x18xf32>
    %341 = vector.extract_strided_slice %335 {offsets = [4, 0], sizes = [4, 18], strides = [1, 1]} : vector<12x18xf32> to vector<4x18xf32>
    %342 = vector.extract_strided_slice %335 {offsets = [8, 0], sizes = [4, 18], strides = [1, 1]} : vector<12x18xf32> to vector<4x18xf32>
    %343 = tpu.concatenate %340, %341, %342 in 1 : vector<4x18xf32>, vector<4x18xf32>, vector<4x18xf32> -> vector<4x54xf32>
    %344 = tpu.concatenate %339, %343 in 0 : vector<4x54xf32>, vector<4x54xf32> -> vector<8x54xf32>
    %cst_66 = arith.constant dense<0.000000e+00> : vector<8x32xf32>
    %345 = tpu.matmul %344, %4, %cst_66 {dimension_numbers = #tpu.dot_dimension_numbers<[1], [0], [0], [1], [0, 0, 1, 1], [], []>} : vector<8x54xf32>, vector<54x32xf32>, vector<8x32xf32> -> vector<8x32xf32>
    %346 = vector.extract_strided_slice %345 {offsets = [0, 0], sizes = [4, 32], strides = [1, 1]} : vector<8x32xf32> to vector<4x32xf32>
    %347 = vector.extract_strided_slice %345 {offsets = [4, 0], sizes = [4, 32], strides = [1, 1]} : vector<8x32xf32> to vector<4x32xf32>
    %348 = tpu.concatenate %346, %347 in 1 : vector<4x32xf32>, vector<4x32xf32> -> vector<4x64xf32>
    %349 = arith.addf %348, %7 : vector<4x64xf32>
    %c0_67 = arith.constant 0 : index
    %c0_68 = arith.constant 0 : index
    %c14 = arith.constant 14 : index
    %c0_69 = arith.constant 0 : index
    %350 = vector.load %arg6[%c0_67, %c0_68, %c14, %c0_69] : memref<1x4x16x64xf32, #tpu.memory_space<vmem>>, vector<1x4x1x64xf32>
    %351 = vector.shape_cast %350 : vector<1x4x1x64xf32> to vector<4x64xf32>
    %352 = vector.shape_cast %349 : vector<4x64xf32> to vector<1x4x1x64xf32>
    tpu.vector_store %arg6[%c0_67, %c0_68, %c14, %c0_69], %352 {strides = array<i32>} : memref<1x4x16x64xf32, #tpu.memory_space<vmem>>, vector<1x4x1x64xf32>,
    %353 = vector.extract_strided_slice %3 {offsets = [0, 270], sizes = [12, 18], strides = [1, 1]} : vector<48x324xf32> to vector<12x18xf32>
    %354 = vector.extract_strided_slice %3 {offsets = [12, 288], sizes = [12, 18], strides = [1, 1]} : vector<48x324xf32> to vector<12x18xf32>
    %355 = arith.addf %353, %354 : vector<12x18xf32>
    %356 = vector.extract_strided_slice %3 {offsets = [24, 288], sizes = [12, 18], strides = [1, 1]} : vector<48x324xf32> to vector<12x18xf32>
    %357 = vector.extract_strided_slice %3 {offsets = [36, 306], sizes = [12, 18], strides = [1, 1]} : vector<48x324xf32> to vector<12x18xf32>
    %358 = arith.addf %356, %357 : vector<12x18xf32>
    %359 = vector.extract_strided_slice %355 {offsets = [0, 0], sizes = [4, 18], strides = [1, 1]} : vector<12x18xf32> to vector<4x18xf32>
    %360 = vector.extract_strided_slice %355 {offsets = [4, 0], sizes = [4, 18], strides = [1, 1]} : vector<12x18xf32> to vector<4x18xf32>
    %361 = vector.extract_strided_slice %355 {offsets = [8, 0], sizes = [4, 18], strides = [1, 1]} : vector<12x18xf32> to vector<4x18xf32>
    %362 = tpu.concatenate %359, %360, %361 in 1 : vector<4x18xf32>, vector<4x18xf32>, vector<4x18xf32> -> vector<4x54xf32>
    %363 = vector.extract_strided_slice %358 {offsets = [0, 0], sizes = [4, 18], strides = [1, 1]} : vector<12x18xf32> to vector<4x18xf32>
    %364 = vector.extract_strided_slice %358 {offsets = [4, 0], sizes = [4, 18], strides = [1, 1]} : vector<12x18xf32> to vector<4x18xf32>
    %365 = vector.extract_strided_slice %358 {offsets = [8, 0], sizes = [4, 18], strides = [1, 1]} : vector<12x18xf32> to vector<4x18xf32>
    %366 = tpu.concatenate %363, %364, %365 in 1 : vector<4x18xf32>, vector<4x18xf32>, vector<4x18xf32> -> vector<4x54xf32>
    %367 = tpu.concatenate %362, %366 in 0 : vector<4x54xf32>, vector<4x54xf32> -> vector<8x54xf32>
    %cst_70 = arith.constant dense<0.000000e+00> : vector<8x32xf32>
    %368 = tpu.matmul %367, %4, %cst_70 {dimension_numbers = #tpu.dot_dimension_numbers<[1], [0], [0], [1], [0, 0, 1, 1], [], []>} : vector<8x54xf32>, vector<54x32xf32>, vector<8x32xf32> -> vector<8x32xf32>
    %369 = vector.extract_strided_slice %368 {offsets = [0, 0], sizes = [4, 32], strides = [1, 1]} : vector<8x32xf32> to vector<4x32xf32>
    %370 = vector.extract_strided_slice %368 {offsets = [4, 0], sizes = [4, 32], strides = [1, 1]} : vector<8x32xf32> to vector<4x32xf32>
    %371 = tpu.concatenate %369, %370 in 1 : vector<4x32xf32>, vector<4x32xf32> -> vector<4x64xf32>
    %372 = arith.addf %371, %7 : vector<4x64xf32>
    %c0_71 = arith.constant 0 : index
    %c0_72 = arith.constant 0 : index
    %c15 = arith.constant 15 : index
    %c0_73 = arith.constant 0 : index
    %373 = vector.load %arg6[%c0_71, %c0_72, %c15, %c0_73] : memref<1x4x16x64xf32, #tpu.memory_space<vmem>>, vector<1x4x1x64xf32>
    %374 = vector.shape_cast %373 : vector<1x4x1x64xf32> to vector<4x64xf32>
    %375 = vector.shape_cast %372 : vector<4x64xf32> to vector<1x4x1x64xf32>
    tpu.vector_store %arg6[%c0_71, %c0_72, %c15, %c0_73], %375 {strides = array<i32>} : memref<1x4x16x64xf32, #tpu.memory_space<vmem>>, vector<1x4x1x64xf32>,
    return
  }
  func.func @transform_0(%arg0: i32, %arg1: i32) -> (i32, i32, i32, i32) {
    %c0_i32 = arith.constant 0 : i32
    %c0_i32_0 = arith.constant 0 : i32
    %c0_i32_1 = arith.constant 0 : i32
    return %arg0, %arg1, %c0_i32, %c0_i32_0 : i32, i32, i32, i32
  }
  func.func @transform_1(%arg0: i32, %arg1: i32) -> (i32, i32) {
    %c0_i32 = arith.constant 0 : i32
    %c0_i32_0 = arith.constant 0 : i32
    %c0_i32_1 = arith.constant 0 : i32
    return %c0_i32, %c0_i32_0 : i32, i32
  }
  func.func @transform_2(%arg0: i32, %arg1: i32) -> (i32, i32) {
    %c0_i32 = arith.constant 0 : i32
    %c0_i32_0 = arith.constant 0 : i32
    %c0_i32_1 = arith.constant 0 : i32
    return %c0_i32, %c0_i32_0 : i32, i32
  }
  func.func @transform_3(%arg0: i32, %arg1: i32) -> (i32, i32) {
    %c0_i32 = arith.constant 0 : i32
    %c0_i32_0 = arith.constant 0 : i32
    %c0_i32_1 = arith.constant 0 : i32
    return %c0_i32, %c0_i32_0 : i32, i32
  }
  func.func @transform_4(%arg0: i32, %arg1: i32) -> (i32, i32, i32, i32) {
    %c0_i32 = arith.constant 0 : i32
    %c0_i32_0 = arith.constant 0 : i32
    %c0_i32_1 = arith.constant 0 : i32
    return %arg0, %c0_i32, %arg1, %c0_i32_0 : i32, i32, i32, i32
  }
}

</mosaic_0001>

<llo_original>
// kernel: tpu_custom_call.1
$region0: #{tpu_custom_call.1}
  #allocation0 [shape = 'u32[]', space=smem, size = 0x4, offset = 0x4, fixed_abs, tag = 'smem constant byte address 0x4 - core index']
  #allocation1 [shape = 'u32[144,128]{1,0:T(1,128)}', space=vmem, size = 0x12000, scoped, tag = 'internal scratch']
  %s0 = inlined_call_operand.vmem [shape: f32[2,1,4,324], index: 0, kind: input, shape index: {}]
  %s1 = inlined_call_operand.vmem [shape: f32[48,4], index: 1, kind: input, shape index: {}]
  %s2 = inlined_call_operand.vmem [shape: f32[54,32], index: 2, kind: input, shape index: {}]
  %s3 = inlined_call_operand.vmem [shape: f32[4,1], index: 3, kind: input, shape index: {}]
  %s4 = inlined_call_operand.hbm [shape: f32[2,4,16,64], index: 4, kind: output, shape index: {}]
  %s5 = sld [smem:[#allocation0]]
  $region49: #{tpu_custom_call.1} parent=0
    _
  %s7 = ssub.s32 1, %s5
  %s8 = scalar_select 0, %s7, %s5
  $region1: #{tpu_custom_call.1} parent=0
    #allocation2 [shape = 'u8[65536]{0}', space=vmem, size = 0x10000, scoped, tag = 'output window, operand 0']
    #allocation3 [shape = 's32[2]{0}', space=sflag, size = 0x8, scoped, tag = 'scoped memory for tpu_custom_call.1']
    %9 = vsyncpa [#allocation3], 0
    %s10 = scalar_lea.sflag [#allocation3], 1
    %11 = vsyncpa %s10, 0
    loop: start=0, step=1, limit=4
    $region2: #{tpu_custom_call.1} parent=1 // loop_pre_header
      _
    $region3: #{tpu_custom_call.1} parent=1 // loop_header
      %s13 = sphi 0, %s17
      %p14 = scmp.ge.s32.totalorder %s13, 4
      %s20 = sphi 0, %s32
      %s21 = sphi 0, %s28
      %s22 = sphi 0, %s20
      %s23 = sphi 0, %s21
      %s24 = sphi 0, %s22
      %s25 = sphi 0, %s23
      %s37 = sphi 0, %s39
      %s40 = sphi 0, %s37
      %s41 = sphi 0, %s40
      %s57 = sphi 0, %s41
      %s61 = sphi 0, %s61
      %s63 = sphi 0, %s61
      %s64 = sphi 0, %s63
      %s78 = sphi 0, %s64
      %s82 = sphi 0, %s82
      %s84 = sphi 0, %s82
      %s85 = sphi 0, %s84
      %s99 = sphi 0, %s85
      %s103 = sphi 0, %s103
      %s105 = sphi 0, %s103
      %s106 = sphi 0, %s105
      %s120 = sphi 0, %s106
      %s128 = sphi 0, %s130
      %s131 = sphi 0, %s128
      %s132 = sphi 0, %s131
      %s148 = sphi 0, %s132
    $region4: #{tpu_custom_call.1} parent=1 // loop_header_branch
      %16 = sbr.rel (%p14) target = $region8
    $region5: #{tpu_custom_call.1} parent=1 // loop_body
      %s18 = ssub.s32 %s13, 1
      %s19 = ssub.s32 %s13, 2
      %s26 = sadd.s32 1, %s21
      %p27 = scmp.ge.s32.totalorder %s26, 1
      %s28 = scalar_select %p27, 0, %s26
      %s29 = sadd.s32 1, %s20
      %s30 = scalar_select %p27, %s29, %s20
      %p31 = scmp.ge.s32.totalorder %s30, 2
      %s32 = scalar_select %p31, 0, %s30
      %s33 = ssub.s32 %s20, %s32
      %s34 = ssub.s32 %s21, %s28
      %s35 = sor.u32 %s33, %s34
      %p36 = scmp.eq.s32.totalorder %s35, 0
      %s38 = sadd.s32 %s37, 1
      %s39 = scalar_select %p36, %s37, %s38
      %p42 = pneg %p36
      %p43 = scmp.eq.s32.totalorder %s13, 1
      %p44 = por %p42, %p43
      %p45 = scmp.ne.s32.totalorder %s37, %s40
      %p46 = scmp.eq.s32.totalorder %s13, 0
      %p47 = por %p45, %p46
      %p48 = scmp.ne.s32.totalorder %s37, %s40
      %p49 = scmp.eq.s32.totalorder %s18, 1
      %p50 = por %p48, %p49
      %p51 = scmp.ne.s32.totalorder %s40, %s41
      %p52 = scmp.eq.s32.totalorder %s18, 0
      %p53 = por %p51, %p52
      %p54 = scmp.ne.s32.totalorder %s40, %s41
      %p55 = scmp.eq.s32.totalorder %s19, 1
      %p56 = por %p54, %p55
      %p58 = scmp.ne.s32.totalorder %s41, %s57
      %p59 = scmp.eq.s32.totalorder %s19, 0
      %p60 = por %p58, %p59
      %s62 = sadd.s32 %s61, 1
      %p65 = scmp.eq.s32.totalorder %s13, 1
      %p66 = scmp.ne.s32.totalorder %s61, %s63
      %p67 = scmp.eq.s32.totalorder %s13, 0
      %p68 = por %p66, %p67
      %p69 = scmp.ne.s32.totalorder %s61, %s63
      %p70 = scmp.eq.s32.totalorder %s18, 1
      %p71 = por %p69, %p70
      %p72 = scmp.ne.s32.totalorder %s63, %s64
      %p73 = scmp.eq.s32.totalorder %s18, 0
      %p74 = por %p72, %p73
      %p75 = scmp.ne.s32.totalorder %s63, %s64
      %p76 = scmp.eq.s32.totalorder %s19, 1
      %p77 = por %p75, %p76
      %p79 = scmp.ne.s32.totalorder %s64, %s78
      %p80 = scmp.eq.s32.totalorder %s19, 0
      %p81 = por %p79, %p80
      %s83 = sadd.s32 %s82, 1
      %p86 = scmp.eq.s32.totalorder %s13, 1
      %p87 = scmp.ne.s32.totalorder %s82, %s84
      %p88 = scmp.eq.s32.totalorder %s13, 0
      %p89 = por %p87, %p88
      %p90 = scmp.ne.s32.totalorder %s82, %s84
      %p91 = scmp.eq.s32.totalorder %s18, 1
      %p92 = por %p90, %p91
      %p93 = scmp.ne.s32.totalorder %s84, %s85
      %p94 = scmp.eq.s32.totalorder %s18, 0
      %p95 = por %p93, %p94
      %p96 = scmp.ne.s32.totalorder %s84, %s85
      %p97 = scmp.eq.s32.totalorder %s19, 1
      %p98 = por %p96, %p97
      %p100 = scmp.ne.s32.totalorder %s85, %s99
      %p101 = scmp.eq.s32.totalorder %s19, 0
      %p102 = por %p100, %p101
      %s104 = sadd.s32 %s103, 1
      %p107 = scmp.eq.s32.totalorder %s13, 1
      %p108 = scmp.ne.s32.totalorder %s103, %s105
      %p109 = scmp.eq.s32.totalorder %s13, 0
      %p110 = por %p108, %p109
      %p111 = scmp.ne.s32.totalorder %s103, %s105
      %p112 = scmp.eq.s32.totalorder %s18, 1
      %p113 = por %p111, %p112
      %p114 = scmp.ne.s32.totalorder %s105, %s106
      %p115 = scmp.eq.s32.totalorder %s18, 0
      %p116 = por %p114, %p115
      %p117 = scmp.ne.s32.totalorder %s105, %s106
      %p118 = scmp.eq.s32.totalorder %s19, 1
      %p119 = por %p117, %p118
      %p121 = scmp.ne.s32.totalorder %s106, %s120
      %p122 = scmp.eq.s32.totalorder %s19, 0
      %p123 = por %p121, %p122
      %s124 = ssub.s32 %s20, %s32
      %s125 = ssub.s32 %s21, %s28
      %s126 = sor.u32 %s124, %s125
      %p127 = scmp.eq.s32.totalorder %s126, 0
      %s129 = sadd.s32 %s128, 1
      %s130 = scalar_select %p127, %s128, %s129
      %p133 = pneg %p127
      %p134 = scmp.eq.s32.totalorder %s13, 1
      %p135 = por %p133, %p134
      %p136 = scmp.ne.s32.totalorder %s128, %s131
      %p137 = scmp.eq.s32.totalorder %s13, 0
      %p138 = por %p136, %p137
      %p139 = scmp.ne.s32.totalorder %s128, %s131
      %p140 = scmp.eq.s32.totalorder %s18, 1
      %p141 = por %p139, %p140
      %p142 = scmp.ne.s32.totalorder %s131, %s132
      %p143 = scmp.eq.s32.totalorder %s18, 0
      %p144 = por %p142, %p143
      %p145 = scmp.ne.s32.totalorder %s131, %s132
      %p146 = scmp.eq.s32.totalorder %s19, 1
      %p147 = por %p145, %p146
      %p149 = scmp.ne.s32.totalorder %s132, %s148
      %p150 = scmp.eq.s32.totalorder %s19, 0
      %p151 = por %p149, %p150
      %p152 = scmp.le.s32.totalorder 1, %s13
      %p153 = scmp.lt.s32.totalorder %s13, 3
      %p154 = pnand %p152, %p153
      %p155 = pneg %p154
      // Predicated region
      $region9: #{tpu_custom_call.1} parent=5 // pred_check
        _
      $region10: #{tpu_custom_call.1} parent=5 // pred_check_branch
        %157 = sbr.rel (%p154) target = $region12
      $region11: #{tpu_custom_call.1} parent=5 // pred_region
        %s158 = ssub.s32 %s13, 1
        // Predicated region
        $region13: #{tpu_custom_call.1} parent=11 // pred_check
          %p159 = pneg %p74
        $region14: #{tpu_custom_call.1} parent=11 // pred_check_branch
          %161 = sbr.rel (%p159) target = $region16
        $region15: #{tpu_custom_call.1} parent=11 // pred_region
          _
        $region16: #{tpu_custom_call.1} parent=11 // pred_fallthru
          _
        // Predicated region
        $region17: #{tpu_custom_call.1} parent=11 // pred_check
          %p162 = pneg %p95
        $region18: #{tpu_custom_call.1} parent=11 // pred_check_branch
          %164 = sbr.rel (%p162) target = $region20
        $region19: #{tpu_custom_call.1} parent=11 // pred_region
          _
        $region20: #{tpu_custom_call.1} parent=11 // pred_fallthru
          _
        // Predicated region
        $region21: #{tpu_custom_call.1} parent=11 // pred_check
          %p165 = pneg %p116
        $region22: #{tpu_custom_call.1} parent=11 // pred_check_branch
          %167 = sbr.rel (%p165) target = $region24
        $region23: #{tpu_custom_call.1} parent=11 // pred_region
          _
        $region24: #{tpu_custom_call.1} parent=11 // pred_fallthru
          _
      $region12: #{tpu_custom_call.1} parent=5 // pred_fallthru
        _
      %p168 = scmp.lt.s32.totalorder %s13, 2
      // Predicated region
      $region25: #{tpu_custom_call.1} parent=5 // pred_check
        %p169 = pneg %p168
      $region26: #{tpu_custom_call.1} parent=5 // pred_check_branch
        %171 = sbr.rel (%p169) target = $region28
      $region27: #{tpu_custom_call.1} parent=5 // pred_region
        // Predicated region
        $region29: #{tpu_custom_call.1} parent=27 // pred_check
          %p172 = pneg %p47
        $region30: #{tpu_custom_call.1} parent=27 // pred_check_branch
          %174 = sbr.rel (%p172) target = $region32
        $region31: #{tpu_custom_call.1} parent=27 // pred_region
          %p175 = scmp.lt.s32.totalorder %s20, 1
          %s176 = scalar_select %p175, %s20, 1
          %p177 = scmp.lt.s32.totalorder %s21, 0
          %s178 = scalar_select %p177, %s21, 0
          %s179 = smul.addr %s178, 3
          %s180 = smul.addr %s176, 3
          %s181 = sadd.s32 %s179, %s180
          %s182 = smul.addr %s181, 4
          %s183 = scalar_lea.vmem %s0, %s182
        $region32: #{tpu_custom_call.1} parent=27 // pred_fallthru
          _
      $region28: #{tpu_custom_call.1} parent=5 // pred_fallthru
        _
      %p184 = scmp.le.s32.totalorder 1, %s13
      %p185 = scmp.lt.s32.totalorder %s13, 3
      %p186 = pnand %p184, %p185
      %p187 = pneg %p186
      // Predicated region
      $region33: #{tpu_custom_call.1} parent=5 // pred_check
        _
      $region34: #{tpu_custom_call.1} parent=5 // pred_check_branch
        %189 = sbr.rel (%p186) target = $region36
      $region35: #{tpu_custom_call.1} parent=5 // pred_region
        %s190 = ssub.s32 %s13, 1
        %p191 = scmp.lt.s32.totalorder %s22, 1
        %s192 = scalar_select %p191, %s22, 1
        %p193 = scmp.lt.s32.totalorder %s23, 0
        %s194 = scalar_select %p193, %s23, 0
        %s195 = smul.addr %s194, 3
        %s196 = smul.addr %s192, 3
        %s197 = sadd.s32 %s195, %s196
        %s198 = smul.addr %s197, 4
        %s199 = scalar_lea.vmem %s0, %s198
        %p200 = pneg %p53
        %p201 = pneg %p50
        %p202 = pneg %p74
        %p203 = pneg %p71
        %p204 = pneg %p95
        %p205 = pneg %p92
        %p206 = pneg %p116
        %p207 = pneg %p113
        %p208 = pneg %p144
        %p209 = pneg %p141
        %s210 = sand.u32 %s131, 1
        %s211 = scalar_lea.sflag [#allocation3], %s210
        %s212 = sand.u32 %s131, 1
        %s213 = smul.addr %s212, 64
        %s214 = scalar_lea.vmem [#allocation2], %s213
        %p215 = scmp.lt.s32.totalorder %s22, 1
        %s216 = scalar_select %p215, %s22, 1
        %p217 = scmp.lt.s32.totalorder %s23, 0
        %s218 = scalar_select %p217, %s23, 0
        %s219 = smul.addr %s218, 3
        %s220 = smul.addr %s216, 3
        %s221 = sadd.s32 %s219, %s220
        %s222 = smul.addr %s221, 4
        %s223 = scalar_lea.vmem %s0, %s222
        %s224 = smul.u32 2, %s23
        %v225 = vld [vmem:[%s223] sm:$0xff]
        %v226 = vld [vmem:[%s223 + $0x8] sm:$0xf]
        %v227 = vld [vmem:[%s1] sm:$0xff]
        %v228 = vld [vmem:[%s1 + $0x8] sm:$0xff]
        %v229 = vld [vmem:[%s1 + $0x10] sm:$0xff]
        %v230 = vld [vmem:[%s1 + $0x18] sm:$0xff]
        %v231 = vld [vmem:[%s1 + $0x20] sm:$0xff]
        %v232 = vld [vmem:[%s1 + $0x28] sm:$0xff]
        %v235 = vcombine.high %v225, %v225
        %vm236 = vcmask 31744
        %v238 = vsel %vm236, %v227, 0
        %v241 = vsel %vm236, %v228, 0
        %v244 = vsel %vm236, %v229, 0
        %v247 = vsel %vm236, %v230, 0
        %v250 = vsel %vm236, %v231, 0
        %v253 = vsel %vm236, %v232, 0
        %vm255 = vcmask 1043456
        %v256 = vsel %vm255, %v225, 0
        %v258 = vsel %vm255, %v235, 0
        %v260 = vsel %vm255, %v226, 0
        %262 = vmatprep.subr.mxu0 0.0
        %263 = vmatpush1.msra.mxu0 0.0
        %264 = vmatprep.subr.mxu0 0.0
        %265 = vmatpush1.msra.mxu0 0.0
        %266 = vmatprep.subr.mxu0 0.0
        %267 = vmatpush1.msra.mxu0 0.0
        %268 = vmatprep.subr.mxu0 0.0
        %269 = vmatpush1.msra.mxu0 0.0
        %270 = vmatprep.subr.mxu0 0.0
        %271 = vmatpush1.msra.mxu0 0.0
        %272 = vmatprep.subr.mxu0 0.0
        %273 = vmatpush1.msra.mxu0 0.0
        %274 = vmatprep.subr.mxu0 0.0
        %275 = vmatpush1.msra.mxu0 0.0
        %276 = vmatprep.subr.mxu0 0.0
        %277 = vmatpush1.msra.mxu0 0.0
        %278 = vmatprep.subr.mxu0 0.0
        %279 = vmatpush1.msra.mxu0 0.0
        %280 = vmatprep.subr.mxu0 0.0
        %281 = vmatpush1.msra.mxu0 0.0
        %282 = vmatprep.subr.mxu0 0.0
        %283 = vmatpush1.msra.mxu0 0.0
        %284 = vmatprep.subr.mxu0 0.0
        %285 = vmatpush1.msra.mxu0 0.0
        %286 = vmatprep.subr.mxu0 0.0
        %287 = vmatpush1.msra.mxu0 0.0
        %288 = vmatprep.subr.mxu0 0.0
        %289 = vmatpush1.msra.mxu0 0.0
        %290 = vmatprep.subr.mxu0 0.0
        %291 = vmatpush1.msra.mxu0 0.0
        %292 = vmatprep.subr.mxu0 %v258
        %293 = vmatpush1.msra.mxu0 %v256
        %294 = vmatprep.subr.mxu0 0.0
        %295 = vmatpush2.msra.mxu0 0.0
        %296 = vmatprep.subr.mxu0 0.0
        %297 = vmatpush2.msra.mxu0 0.0
        %298 = vmatprep.subr.mxu0 0.0
        %299 = vmatpush2.msra.mxu0 0.0
        %300 = vmatprep.subr.mxu0 0.0
        %301 = vmatpush2.msra.mxu0 0.0
        %302 = vmatprep.subr.mxu0 0.0
        %303 = vmatpush2.msra.mxu0 0.0
        %304 = vmatprep.subr.mxu0 0.0
        %305 = vmatpush2.msra.mxu0 0.0
        %306 = vmatprep.subr.mxu0 0.0
        %307 = vmatpush2.msra.mxu0 0.0
        %308 = vmatprep.subr.mxu0 0.0
        %309 = vmatpush2.msra.mxu0 0.0
        %310 = vmatprep.subr.mxu0 0.0
        %311 = vmatpush2.msra.mxu0 0.0
        %312 = vmatprep.subr.mxu0 0.0
        %313 = vmatpush2.msra.mxu0 0.0
        %314 = vmatprep.subr.mxu0 0.0
        %315 = vmatpush2.msra.mxu0 0.0
        %316 = vmatprep.subr.mxu0 0.0
        %317 = vmatpush2.msra.mxu0 0.0
        %318 = vmatprep.subr.mxu0 0.0
        %319 = vmatpush2.msra.mxu0 0.0
        %320 = vmatprep.subr.mxu0 0.0
        %321 = vmatpush2.msra.mxu0 0.0
        %322 = vmatprep.subr.mxu0 0.0
        %323 = vmatpush2.msra.mxu0 0.0
        %324 = vmatprep.subr.mxu0 0.0
        %325 = vmatpush2.msra.mxu0 0.0
        %326 = vmatprep.mubr.f32.mxu0 0.0
        %327 = vmatmul.mubr.f32.gmra.mxu0 %v238
        %v328 = vpop.f32.mrf.mxu0
        %v329 = vadd.f32 0.0, %v328
        %v330 = vpop.f32.mrf.mxu0
        %v331 = vadd.f32 0.0, %v330
        %332 = vmatprep.mubr.f32.mxu0 0.0
        %333 = vmatmul.mubr.f32.gmra.mxu0 %v241
        %v334 = vpop.f32.mrf.mxu0
        %v335 = vadd.f32 0.0, %v334
        %v336 = vpop.f32.mrf.mxu0
        %v337 = vadd.f32 0.0, %v336
        %338 = vmatprep.mubr.f32.mxu0 0.0
        %339 = vmatmul.mubr.f32.gmra.mxu0 %v244
        %v340 = vpop.f32.mrf.mxu0
        %v341 = vadd.f32 0.0, %v340
        %v342 = vpop.f32.mrf.mxu0
        %v343 = vadd.f32 0.0, %v342
        %344 = vmatprep.mubr.f32.mxu0 0.0
        %345 = vmatmul.mubr.f32.gmra.mxu0 %v247
        %v346 = vpop.f32.mrf.mxu0
        %v347 = vadd.f32 0.0, %v346
        %v348 = vpop.f32.mrf.mxu0
        %v349 = vadd.f32 0.0, %v348
        %350 = vmatprep.mubr.f32.mxu0 0.0
        %351 = vmatmul.mubr.f32.gmra.mxu0 %v250
        %v352 = vpop.f32.mrf.mxu0
        %v353 = vadd.f32 0.0, %v352
        %v354 = vpop.f32.mrf.mxu0
        %v355 = vadd.f32 0.0, %v354
        %356 = vmatprep.mubr.f32.mxu0 0.0
        %357 = vmatmul.mubr.f32.gmra.mxu0 %v253
        %v358 = vpop.f32.mrf.mxu0
        %v359 = vadd.f32 0.0, %v358
        %v360 = vpop.f32.mrf.mxu0
        %v361 = vadd.f32 0.0, %v360
        %362 = vdwg.mxu0
        %363 = vmatprep.subr.mxu0 0.0
        %364 = vmatpush1.msra.mxu0 0.0
        %365 = vmatprep.subr.mxu0 0.0
        %366 = vmatpush1.msra.mxu0 0.0
        %367 = vmatprep.subr.mxu0 0.0
        %368 = vmatpush1.msra.mxu0 0.0
        %369 = vmatprep.subr.mxu0 0.0
        %370 = vmatpush1.msra.mxu0 0.0
        %371 = vmatprep.subr.mxu0 0.0
        %372 = vmatpush1.msra.mxu0 0.0
        %373 = vmatprep.subr.mxu0 0.0
        %374 = vmatpush1.msra.mxu0 0.0
        %375 = vmatprep.subr.mxu0 0.0
        %376 = vmatpush1.msra.mxu0 0.0
        %377 = vmatprep.subr.mxu0 0.0
        %378 = vmatpush1.msra.mxu0 0.0
        %379 = vmatprep.subr.mxu0 0.0
        %380 = vmatpush1.msra.mxu0 0.0
        %381 = vmatprep.subr.mxu0 0.0
        %382 = vmatpush1.msra.mxu0 0.0
        %383 = vmatprep.subr.mxu0 0.0
        %384 = vmatpush1.msra.mxu0 0.0
        %385 = vmatprep.subr.mxu0 0.0
        %386 = vmatpush1.msra.mxu0 0.0
        %387 = vmatprep.subr.mxu0 0.0
        %388 = vmatpush1.msra.mxu0 0.0
        %389 = vmatprep.subr.mxu0 0.0
        %390 = vmatpush1.msra.mxu0 0.0
        %391 = vmatprep.subr.mxu0 0.0
        %392 = vmatpush1.msra.mxu0 0.0
        %393 = vmatprep.subr.mxu0 0.0
        %394 = vmatpush1.msra.mxu0 %v260
        %395 = vmatprep.subr.mxu0 0.0
        %396 = vmatpush2.msra.mxu0 0.0
        %397 = vmatprep.subr.mxu0 0.0
        %398 = vmatpush2.msra.mxu0 0.0
        %399 = vmatprep.subr.mxu0 0.0
        %400 = vmatpush2.msra.mxu0 0.0
        %401 = vmatprep.subr.mxu0 0.0
        %402 = vmatpush2.msra.mxu0 0.0
        %403 = vmatprep.subr.mxu0 0.0
        %404 = vmatpush2.msra.mxu0 0.0
        %405 = vmatprep.subr.mxu0 0.0
        %406 = vmatpush2.msra.mxu0 0.0
        %407 = vmatprep.subr.mxu0 0.0
        %408 = vmatpush2.msra.mxu0 0.0
        %409 = vmatprep.subr.mxu0 0.0
        %410 = vmatpush2.msra.mxu0 0.0
        %411 = vmatprep.subr.mxu0 0.0
        %412 = vmatpush2.msra.mxu0 0.0
        %413 = vmatprep.subr.mxu0 0.0
        %414 = vmatpush2.msra.mxu0 0.0
        %415 = vmatprep.subr.mxu0 0.0
        %416 = vmatpush2.msra.mxu0 0.0
        %417 = vmatprep.subr.mxu0 0.0
        %418 = vmatpush2.msra.mxu0 0.0
        %419 = vmatprep.subr.mxu0 0.0
        %420 = vmatpush2.msra.mxu0 0.0
        %421 = vmatprep.subr.mxu0 0.0
        %422 = vmatpush2.msra.mxu0 0.0
        %423 = vmatprep.subr.mxu0 0.0
        %424 = vmatpush2.msra.mxu0 0.0
        %425 = vmatprep.subr.mxu0 0.0
        %426 = vmatpush2.msra.mxu0 0.0
        %427 = vmatprep.mubr.f32.mxu0 0.0
        %428 = vmatmul.mubr.f32.gmra.mxu0 %v238
        %v429 = vpop.f32.mrf.mxu0
        %v430 = vadd.f32 0.0, %v429
        %v431 = vpop.f32.mrf.mxu0
        %432 = vmatprep.mubr.f32.mxu0 0.0
        %433 = vmatmul.mubr.f32.gmra.mxu0 %v241
        %v434 = vpop.f32.mrf.mxu0
        %v435 = vadd.f32 0.0, %v434
        %v436 = vpop.f32.mrf.mxu0
        %437 = vmatprep.mubr.f32.mxu0 0.0
        %438 = vmatmul.mubr.f32.gmra.mxu0 %v244
        %v439 = vpop.f32.mrf.mxu0
        %v440 = vadd.f32 0.0, %v439
        %v441 = vpop.f32.mrf.mxu0
        %442 = vmatprep.mubr.f32.mxu0 0.0
        %443 = vmatmul.mubr.f32.gmra.mxu0 %v247
        %v444 = vpop.f32.mrf.mxu0
        %v445 = vadd.f32 0.0, %v444
        %v446 = vpop.f32.mrf.mxu0
        %447 = vmatprep.mubr.f32.mxu0 0.0
        %448 = vmatmul.mubr.f32.gmra.mxu0 %v250
        %v449 = vpop.f32.mrf.mxu0
        %v450 = vadd.f32 0.0, %v449
        %v451 = vpop.f32.mrf.mxu0
        %452 = vmatprep.mubr.f32.mxu0 0.0
        %453 = vmatmul.mubr.f32.gmra.mxu0 %v253
        %v454 = vpop.f32.mrf.mxu0
        %v455 = vadd.f32 0.0, %v454
        %v456 = vpop.f32.mrf.mxu0
        %457 = vdwg.mxu0
        %v458 = vld [vmem:[%s2] sm:$0xff]
        %v459 = vld [vmem:[%s2 + $0x8] sm:$0xff]
        %v460 = vld [vmem:[%s2 + $0x10] sm:$0xff]
        %v461 = vld [vmem:[%s2 + $0x18] sm:$0xff]
        %v462 = vld [vmem:[%s2 + $0x20] sm:$0xff]
        %v463 = vld [vmem:[%s2 + $0x28] sm:$0xff]
        %v464 = vld [vmem:[%s2 + $0x30] sm:$0x3f]
        %v465 = vld [vmem:[%s3] sm:$0xf]
        %467 = vset.pattern.permute.xlu0 0
        %468 = vperm.xlu0 %467, %v465
        %v469 = vpop.permute.xlu0 %468
        %v473 = vrot.slane %v335, 4
        %v474 = vrot.slane %v341, 4
        %v475 = vsel %vm255, %v473, %v474
        %476 = vrot.lane.b32.xlu0 %v475, 110
        %v477 = vpop.permute.xlu0 %476
        %478 = vrot.lane.b32.xlu0 %v474, 110
        %v479 = vpop.permute.xlu0 %478
        %v482 = vadd.f32 %v329, %v477
        %v483 = vadd.f32 %v335, %v479
        %v486 = vrot.slane %v353, 4
        %v487 = vrot.slane %v359, 4
        %v488 = vsel %vm255, %v486, %v487
        %489 = vrot.lane.b32.xlu0 %v488, 110
        %v490 = vpop.permute.xlu0 %489
        %491 = vrot.lane.b32.xlu0 %v487, 110
        %v492 = vpop.permute.xlu0 %491
        %v495 = vadd.f32 %v347, %v490
        %v496 = vadd.f32 %v353, %v492
        %v498 = vrot.slane %v482, 4
        %499 = vrot.lane.b32.xlu0 %v498, 18
        %v500 = vpop.permute.xlu0 %499
        %503 = vrot.lane.b32.xlu0 %v483, 36
        %v504 = vpop.permute.xlu0 %503
        %vm506 = vcmask 146432
        %v507 = vsel %vm506, %v482, %v500
        %vm508 = vcmask 293888
        %v509 = vsel %vm508, %v507, %v504
        %511 = vrot.lane.b32.xlu0 %v495, 110
        %v512 = vpop.permute.xlu0 %511
        %v514 = vrot.slane %v495, 4
        %517 = vrot.lane.b32.xlu0 %v496, 18
        %v518 = vpop.permute.xlu0 %517
        %v520 = vsel %vm506, %v512, %v514
        %v521 = vsel %vm508, %v520, %v518
        %v523 = vrot.slane %v521, 4
        %v525 = vsel %vm255, %v509, %v523
        %vm526 = vcmask 441344
        %v528 = vsel %vm526, %v525, 0
        %vm530 = vcmask 1045504
        %v532 = vsel %vm530, %v464, 0
        %534 = vmatprep.subr.mxu0 0.0
        %535 = vmatpush1.msra.mxu0 0.0
        %536 = vmatprep.subr.mxu0 0.0
        %537 = vmatpush1.msra.mxu0 0.0
        %538 = vmatprep.subr.mxu0 0.0
        %539 = vmatpush1.msra.mxu0 0.0
        %540 = vmatprep.subr.mxu0 0.0
        %541 = vmatpush1.msra.mxu0 0.0
        %542 = vmatprep.subr.mxu0 0.0
        %543 = vmatpush1.msra.mxu0 0.0
        %544 = vmatprep.subr.mxu0 0.0
        %545 = vmatpush1.msra.mxu0 0.0
        %546 = vmatprep.subr.mxu0 0.0
        %547 = vmatpush1.msra.mxu0 0.0
        %548 = vmatprep.subr.mxu0 0.0
        %549 = vmatpush1.msra.mxu0 0.0
        %550 = vmatprep.subr.mxu0 0.0
        %551 = vmatpush1.msra.mxu0 0.0
        %552 = vmatprep.subr.mxu0 0.0
        %553 = vmatpush1.msra.mxu0 %v532
        %554 = vmatprep.subr.mxu0 0.0
        %555 = vmatpush1.msra.mxu0 %v463
        %556 = vmatprep.subr.mxu0 0.0
        %557 = vmatpush1.msra.mxu0 %v462
        %558 = vmatprep.subr.mxu0 0.0
        %559 = vmatpush1.msra.mxu0 %v461
        %560 = vmatprep.subr.mxu0 0.0
        %561 = vmatpush1.msra.mxu0 %v460
        %562 = vmatprep.subr.mxu0 0.0
        %563 = vmatpush1.msra.mxu0 %v459
        %564 = vmatprep.subr.mxu0 0.0
        %565 = vmatpush1.msra.mxu0 %v458
        %566 = vmatprep.subr.mxu0 0.0
        %567 = vmatpush2.msra.mxu0 0.0
        %568 = vmatprep.subr.mxu0 0.0
        %569 = vmatpush2.msra.mxu0 0.0
        %570 = vmatprep.subr.mxu0 0.0
        %571 = vmatpush2.msra.mxu0 0.0
        %572 = vmatprep.subr.mxu0 0.0
        %573 = vmatpush2.msra.mxu0 0.0
        %574 = vmatprep.subr.mxu0 0.0
        %575 = vmatpush2.msra.mxu0 0.0
        %576 = vmatprep.subr.mxu0 0.0
        %577 = vmatpush2.msra.mxu0 0.0
        %578 = vmatprep.subr.mxu0 0.0
        %579 = vmatpush2.msra.mxu0 0.0
        %580 = vmatprep.subr.mxu0 0.0
        %581 = vmatpush2.msra.mxu0 0.0
        %582 = vmatprep.subr.mxu0 0.0
        %583 = vmatpush2.msra.mxu0 0.0
        %584 = vmatprep.subr.mxu0 0.0
        %585 = vmatpush2.msra.mxu0 0.0
        %586 = vmatprep.subr.mxu0 0.0
        %587 = vmatpush2.msra.mxu0 0.0
        %588 = vmatprep.subr.mxu0 0.0
        %589 = vmatpush2.msra.mxu0 0.0
        %590 = vmatprep.subr.mxu0 0.0
        %591 = vmatpush2.msra.mxu0 0.0
        %592 = vmatprep.subr.mxu0 0.0
        %593 = vmatpush2.msra.mxu0 0.0
        %594 = vmatprep.subr.mxu0 0.0
        %595 = vmatpush2.msra.mxu0 0.0
        %596 = vmatprep.subr.mxu0 0.0
        %597 = vmatpush2.msra.mxu0 0.0
        %598 = vmatprep.mubr.f32.mxu0 0.0
        %599 = vmatmul.mubr.f32.gmra.mxu0 %v528
        %v600 = vpop.f32.mrf.mxu0
        %v601 = vadd.f32 0.0, %v600
        %v602 = vpop.f32.mrf.mxu0
        %603 = vdwg.mxu0
        %v605 = vrot.slane %v601, 4
        %606 = vrot.lane.b32.xlu0 %v605, 32
        %v607 = vpop.permute.xlu0 %606
        %vm609 = vcmask 261120
        %v610 = vsel %vm609, %v601, %v607
        %v611 = vadd.f32 %v610, %v469
        %v614 = vunpack.c.l.s4 1966171168
        %v615 = vunpack.c.0.s8 %v614
        %v616 = vlaneseq
        %v617 = vshrl.u32 %v616, 7
        %v618 = vsub.s32 %v615, %v617
        %v619 = vrot.slane %v611, %v618
        %v620 = vcombine.high %v619, %v619
        %v622 = vunpack.c.l.s4 1966171168
        %v623 = vunpack.c.0.s8 %v622
        %v624 = vlaneseq
        %v625 = vshrl.u32 %v624, 7
        %v626 = vsub.s32 %v623, %v625
        %v627 = vrot.slane %v619, %v626
        %v629 = vunpack.c.l.s4 1966171168
        %v630 = vunpack.c.0.s8 %v629
        %v631 = vlaneseq
        %v632 = vshrl.u32 %v631, 7
        %v633 = vsub.s32 %v630, %v632
        %v634 = vrot.slane %v620, %v633
        %v635 = vcombine.high %v627, %v627
        %v636 = vcombine.high %v634, %v634
        %vm641 = vcmask 516096
        %642 = vst.msk [vmem:[%s214] sm:$0x1] %vm641, %v627
        %643 = vst.msk [vmem:[%s214 + $0x10] sm:$0x1] %vm641, %v634
        %644 = vst.msk [vmem:[%s214 + $0x20] sm:$0x1] %vm641, %v635
        %645 = vst.msk [vmem:[%s214 + $0x30] sm:$0x1] %vm641, %v636
        %646 = vrot.lane.b32.xlu0 %v482, 110
        %v647 = vpop.permute.xlu0 %646
        %650 = vrot.lane.b32.xlu0 %v483, 18
        %v651 = vpop.permute.xlu0 %650
        %v653 = vsel %vm506, %v647, %v498
        %v654 = vsel %vm508, %v653, %v651
        %655 = vrot.lane.b32.xlu0 %v495, 92
        %v656 = vpop.permute.xlu0 %655
        %658 = vrot.lane.b32.xlu0 %v514, 110
        %v659 = vpop.permute.xlu0 %658
        %v661 = vsel %vm506, %v656, %v659
        %v662 = vsel %vm508, %v661, %v496
        %v664 = vrot.slane %v662, 4
        %v666 = vsel %vm255, %v654, %v664
        %v668 = vsel %vm526, %v666, 0
        %670 = vmatprep.subr.mxu0 0.0
        %671 = vmatpush1.msra.mxu0 0.0
        %672 = vmatprep.subr.mxu0 0.0
        %673 = vmatpush1.msra.mxu0 0.0
        %674 = vmatprep.subr.mxu0 0.0
        %675 = vmatpush1.msra.mxu0 0.0
        %676 = vmatprep.subr.mxu0 0.0
        %677 = vmatpush1.msra.mxu0 0.0
        %678 = vmatprep.subr.mxu0 0.0
        %679 = vmatpush1.msra.mxu0 0.0
        %680 = vmatprep.subr.mxu0 0.0
        %681 = vmatpush1.msra.mxu0 0.0
        %682 = vmatprep.subr.mxu0 0.0
        %683 = vmatpush1.msra.mxu0 0.0
        %684 = vmatprep.subr.mxu0 0.0
        %685 = vmatpush1.msra.mxu0 0.0
        %686 = vmatprep.subr.mxu0 0.0
        %687 = vmatpush1.msra.mxu0 0.0
        %688 = vmatprep.subr.mxu0 0.0
        %689 = vmatpush1.msra.mxu0 %v532
        %690 = vmatprep.subr.mxu0 0.0
        %691 = vmatpush1.msra.mxu0 %v463
        %692 = vmatprep.subr.mxu0 0.0
        %693 = vmatpush1.msra.mxu0 %v462
        %694 = vmatprep.subr.mxu0 0.0
        %695 = vmatpush1.msra.mxu0 %v461
        %696 = vmatprep.subr.mxu0 0.0
        %697 = vmatpush1.msra.mxu0 %v460
        %698 = vmatprep.subr.mxu0 0.0
        %699 = vmatpush1.msra.mxu0 %v459
        %700 = vmatprep.subr.mxu0 0.0
        %701 = vmatpush1.msra.mxu0 %v458
        %702 = vmatprep.subr.mxu0 0.0
        %703 = vmatpush2.msra.mxu0 0.0
        %704 = vmatprep.subr.mxu0 0.0
        %705 = vmatpush2.msra.mxu0 0.0
        %706 = vmatprep.subr.mxu0 0.0
        %707 = vmatpush2.msra.mxu0 0.0
        %708 = vmatprep.subr.mxu0 0.0
        %709 = vmatpush2.msra.mxu0 0.0
        %710 = vmatprep.subr.mxu0 0.0
        %711 = vmatpush2.msra.mxu0 0.0
        %712 = vmatprep.subr.mxu0 0.0
        %713 = vmatpush2.msra.mxu0 0.0
        %714 = vmatprep.subr.mxu0 0.0
        %715 = vmatpush2.msra.mxu0 0.0
        %716 = vmatprep.subr.mxu0 0.0
        %717 = vmatpush2.msra.mxu0 0.0
        %718 = vmatprep.subr.mxu0 0.0
        %719 = vmatpush2.msra.mxu0 0.0
        %720 = vmatprep.subr.mxu0 0.0
        %721 = vmatpush2.msra.mxu0 0.0
        %722 = vmatprep.subr.mxu0 0.0
        %723 = vmatpush2.msra.mxu0 0.0
        %724 = vmatprep.subr.mxu0 0.0
        %725 = vmatpush2.msra.mxu0 0.0
        %726 = vmatprep.subr.mxu0 0.0
        %727 = vmatpush2.msra.mxu0 0.0
        %728 = vmatprep.subr.mxu0 0.0
        %729 = vmatpush2.msra.mxu0 0.0
        %730 = vmatprep.subr.mxu0 0.0
        %731 = vmatpush2.msra.mxu0 0.0
        %732 = vmatprep.subr.mxu0 0.0
        %733 = vmatpush2.msra.mxu0 0.0
        %734 = vmatprep.mubr.f32.mxu0 0.0
        %735 = vmatmul.mubr.f32.gmra.mxu0 %v668
        %v736 = vpop.f32.mrf.mxu0
        %v737 = vadd.f32 0.0, %v736
        %v738 = vpop.f32.mrf.mxu0
        %739 = vdwg.mxu0
        %v741 = vrot.slane %v737, 4
        %742 = vrot.lane.b32.xlu0 %v741, 32
        %v743 = vpop.permute.xlu0 %742
        %v745 = vsel %vm609, %v737, %v743
        %v746 = vadd.f32 %v745, %v469
        %v749 = vunpack.c.l.s4 1966171168
        %v750 = vunpack.c.0.s8 %v749
        %v751 = vlaneseq
        %v752 = vshrl.u32 %v751, 7
        %v753 = vsub.s32 %v750, %v752
        %v754 = vrot.slane %v746, %v753
        %v755 = vcombine.high %v754, %v754
        %v757 = vunpack.c.l.s4 1966171168
        %v758 = vunpack.c.0.s8 %v757
        %v759 = vlaneseq
        %v760 = vshrl.u32 %v759, 7
        %v761 = vsub.s32 %v758, %v760
        %v762 = vrot.slane %v754, %v761
        %v764 = vunpack.c.l.s4 1966171168
        %v765 = vunpack.c.0.s8 %v764
        %v766 = vlaneseq
        %v767 = vshrl.u32 %v766, 7
        %v768 = vsub.s32 %v765, %v767
        %v769 = vrot.slane %v755, %v768
        %v770 = vcombine.high %v762, %v762
        %v771 = vcombine.high %v769, %v769
        %776 = vst.msk [vmem:[%s214 + $0x1] sm:$0x1] %vm641, %v762
        %777 = vst.msk [vmem:[%s214 + $0x11] sm:$0x1] %vm641, %v769
        %778 = vst.msk [vmem:[%s214 + $0x21] sm:$0x1] %vm641, %v770
        %779 = vst.msk [vmem:[%s214 + $0x31] sm:$0x1] %vm641, %v771
        %780 = vrot.lane.b32.xlu0 %v482, 92
        %v781 = vpop.permute.xlu0 %780
        %783 = vrot.lane.b32.xlu0 %v498, 110
        %v784 = vpop.permute.xlu0 %783
        %v786 = vsel %vm506, %v781, %v784
        %v787 = vsel %vm508, %v786, %v483
        %788 = vrot.lane.b32.xlu0 %v495, 74
        %v789 = vpop.permute.xlu0 %788
        %791 = vrot.lane.b32.xlu0 %v514, 92
        %v792 = vpop.permute.xlu0 %791
        %794 = vrot.lane.b32.xlu0 %v496, 110
        %v795 = vpop.permute.xlu0 %794
        %v797 = vsel %vm506, %v789, %v792
        %v798 = vsel %vm508, %v797, %v795
        %v800 = vrot.slane %v798, 4
        %v802 = vsel %vm255, %v787, %v800
        %v804 = vsel %vm526, %v802, 0
        %806 = vmatprep.subr.mxu0 0.0
        %807 = vmatpush1.msra.mxu0 0.0
        %808 = vmatprep.subr.mxu0 0.0
        %809 = vmatpush1.msra.mxu0 0.0
        %810 = vmatprep.subr.mxu0 0.0
        %811 = vmatpush1.msra.mxu0 0.0
        %812 = vmatprep.subr.mxu0 0.0
        %813 = vmatpush1.msra.mxu0 0.0
        %814 = vmatprep.subr.mxu0 0.0
        %815 = vmatpush1.msra.mxu0 0.0
        %816 = vmatprep.subr.mxu0 0.0
        %817 = vmatpush1.msra.mxu0 0.0
        %818 = vmatprep.subr.mxu0 0.0
        %819 = vmatpush1.msra.mxu0 0.0
        %820 = vmatprep.subr.mxu0 0.0
        %821 = vmatpush1.msra.mxu0 0.0
        %822 = vmatprep.subr.mxu0 0.0
        %823 = vmatpush1.msra.mxu0 0.0
        %824 = vmatprep.subr.mxu0 0.0
        %825 = vmatpush1.msra.mxu0 %v532
        %826 = vmatprep.subr.mxu0 0.0
        %827 = vmatpush1.msra.mxu0 %v463
        %828 = vmatprep.subr.mxu0 0.0
        %829 = vmatpush1.msra.mxu0 %v462
        %830 = vmatprep.subr.mxu0 0.0
        %831 = vmatpush1.msra.mxu0 %v461
        %832 = vmatprep.subr.mxu0 0.0
        %833 = vmatpush1.msra.mxu0 %v460
        %834 = vmatprep.subr.mxu0 0.0
        %835 = vmatpush1.msra.mxu0 %v459
        %836 = vmatprep.subr.mxu0 0.0
        %837 = vmatpush1.msra.mxu0 %v458
        %838 = vmatprep.subr.mxu0 0.0
        %839 = vmatpush2.msra.mxu0 0.0
        %840 = vmatprep.subr.mxu0 0.0
        %841 = vmatpush2.msra.mxu0 0.0
        %842 = vmatprep.subr.mxu0 0.0
        %843 = vmatpush2.msra.mxu0 0.0
        %844 = vmatprep.subr.mxu0 0.0
        %845 = vmatpush2.msra.mxu0 0.0
        %846 = vmatprep.subr.mxu0 0.0
        %847 = vmatpush2.msra.mxu0 0.0
        %848 = vmatprep.subr.mxu0 0.0
        %849 = vmatpush2.msra.mxu0 0.0
        %850 = vmatprep.subr.mxu0 0.0
        %851 = vmatpush2.msra.mxu0 0.0
        %852 = vmatprep.subr.mxu0 0.0
        %853 = vmatpush2.msra.mxu0 0.0
        %854 = vmatprep.subr.mxu0 0.0
        %855 = vmatpush2.msra.mxu0 0.0
        %856 = vmatprep.subr.mxu0 0.0
        %857 = vmatpush2.msra.mxu0 0.0
        %858 = vmatprep.subr.mxu0 0.0
        %859 = vmatpush2.msra.mxu0 0.0
        %860 = vmatprep.subr.mxu0 0.0
        %861 = vmatpush2.msra.mxu0 0.0
        %862 = vmatprep.subr.mxu0 0.0
        %863 = vmatpush2.msra.mxu0 0.0
        %864 = vmatprep.subr.mxu0 0.0
        %865 = vmatpush2.msra.mxu0 0.0
        %866 = vmatprep.subr.mxu0 0.0
        %867 = vmatpush2.msra.mxu0 0.0
        %868 = vmatprep.subr.mxu0 0.0
        %869 = vmatpush2.msra.mxu0 0.0
        %870 = vmatprep.mubr.f32.mxu0 0.0
        %871 = vmatmul.mubr.f32.gmra.mxu0 %v804
        %v872 = vpop.f32.mrf.mxu0
        %v873 = vadd.f32 0.0, %v872
        %v874 = vpop.f32.mrf.mxu0
        %875 = vdwg.mxu0
        %v877 = vrot.slane %v873, 4
        %878 = vrot.lane.b32.xlu0 %v877, 32
        %v879 = vpop.permute.xlu0 %878
        %v881 = vsel %vm609, %v873, %v879
        %v882 = vadd.f32 %v881, %v469
        %v885 = vunpack.c.l.s4 1966171168
        %v886 = vunpack.c.0.s8 %v885
        %v887 = vlaneseq
        %v888 = vshrl.u32 %v887, 7
        %v889 = vsub.s32 %v886, %v888
        %v890 = vrot.slane %v882, %v889
        %v891 = vcombine.high %v890, %v890
        %v893 = vunpack.c.l.s4 1966171168
        %v894 = vunpack.c.0.s8 %v893
        %v895 = vlaneseq
        %v896 = vshrl.u32 %v895, 7
        %v897 = vsub.s32 %v894, %v896
        %v898 = vrot.slane %v890, %v897
        %v900 = vunpack.c.l.s4 1966171168
        %v901 = vunpack.c.0.s8 %v900
        %v902 = vlaneseq
        %v903 = vshrl.u32 %v902, 7
        %v904 = vsub.s32 %v901, %v903
        %v905 = vrot.slane %v891, %v904
        %v906 = vcombine.high %v898, %v898
        %v907 = vcombine.high %v905, %v905
        %912 = vst.msk [vmem:[%s214 + $0x2] sm:$0x1] %vm641, %v898
        %913 = vst.msk [vmem:[%s214 + $0x12] sm:$0x1] %vm641, %v905
        %914 = vst.msk [vmem:[%s214 + $0x22] sm:$0x1] %vm641, %v906
        %915 = vst.msk [vmem:[%s214 + $0x32] sm:$0x1] %vm641, %v907
        %916 = vrot.lane.b32.xlu0 %v482, 74
        %v917 = vpop.permute.xlu0 %916
        %919 = vrot.lane.b32.xlu0 %v498, 92
        %v920 = vpop.permute.xlu0 %919
        %922 = vrot.lane.b32.xlu0 %v483, 110
        %v923 = vpop.permute.xlu0 %922
        %v925 = vsel %vm506, %v917, %v920
        %v926 = vsel %vm508, %v925, %v923
        %927 = vrot.lane.b32.xlu0 %v495, 56
        %v928 = vpop.permute.xlu0 %927
        %930 = vrot.lane.b32.xlu0 %v514, 74
        %v931 = vpop.permute.xlu0 %930
        %933 = vrot.lane.b32.xlu0 %v496, 92
        %v934 = vpop.permute.xlu0 %933
        %v936 = vsel %vm506, %v928, %v931
        %v937 = vsel %vm508, %v936, %v934
        %v939 = vrot.slane %v937, 4
        %v941 = vsel %vm255, %v926, %v939
        %v943 = vsel %vm526, %v941, 0
        %945 = vmatprep.subr.mxu0 0.0
        %946 = vmatpush1.msra.mxu0 0.0
        %947 = vmatprep.subr.mxu0 0.0
        %948 = vmatpush1.msra.mxu0 0.0
        %949 = vmatprep.subr.mxu0 0.0
        %950 = vmatpush1.msra.mxu0 0.0
        %951 = vmatprep.subr.mxu0 0.0
        %952 = vmatpush1.msra.mxu0 0.0
        %953 = vmatprep.subr.mxu0 0.0
        %954 = vmatpush1.msra.mxu0 0.0
        %955 = vmatprep.subr.mxu0 0.0
        %956 = vmatpush1.msra.mxu0 0.0
        %957 = vmatprep.subr.mxu0 0.0
        %958 = vmatpush1.msra.mxu0 0.0
        %959 = vmatprep.subr.mxu0 0.0
        %960 = vmatpush1.msra.mxu0 0.0
        %961 = vmatprep.subr.mxu0 0.0
        %962 = vmatpush1.msra.mxu0 0.0
        %963 = vmatprep.subr.mxu0 0.0
        %964 = vmatpush1.msra.mxu0 %v532
        %965 = vmatprep.subr.mxu0 0.0
        %966 = vmatpush1.msra.mxu0 %v463
        %967 = vmatprep.subr.mxu0 0.0
        %968 = vmatpush1.msra.mxu0 %v462
        %969 = vmatprep.subr.mxu0 0.0
        %970 = vmatpush1.msra.mxu0 %v461
        %971 = vmatprep.subr.mxu0 0.0
        %972 = vmatpush1.msra.mxu0 %v460
        %973 = vmatprep.subr.mxu0 0.0
        %974 = vmatpush1.msra.mxu0 %v459
        %975 = vmatprep.subr.mxu0 0.0
        %976 = vmatpush1.msra.mxu0 %v458
        %977 = vmatprep.subr.mxu0 0.0
        %978 = vmatpush2.msra.mxu0 0.0
        %979 = vmatprep.subr.mxu0 0.0
        %980 = vmatpush2.msra.mxu0 0.0
        %981 = vmatprep.subr.mxu0 0.0
        %982 = vmatpush2.msra.mxu0 0.0
        %983 = vmatprep.subr.mxu0 0.0
        %984 = vmatpush2.msra.mxu0 0.0
        %985 = vmatprep.subr.mxu0 0.0
        %986 = vmatpush2.msra.mxu0 0.0
        %987 = vmatprep.subr.mxu0 0.0
        %988 = vmatpush2.msra.mxu0 0.0
        %989 = vmatprep.subr.mxu0 0.0
        %990 = vmatpush2.msra.mxu0 0.0
        %991 = vmatprep.subr.mxu0 0.0
        %992 = vmatpush2.msra.mxu0 0.0
        %993 = vmatprep.subr.mxu0 0.0
        %994 = vmatpush2.msra.mxu0 0.0
        %995 = vmatprep.subr.mxu0 0.0
        %996 = vmatpush2.msra.mxu0 0.0
        %997 = vmatprep.subr.mxu0 0.0
        %998 = vmatpush2.msra.mxu0 0.0
        %999 = vmatprep.subr.mxu0 0.0
        %1000 = vmatpush2.msra.mxu0 0.0
        %1001 = vmatprep.subr.mxu0 0.0
        %1002 = vmatpush2.msra.mxu0 0.0
        %1003 = vmatprep.subr.mxu0 0.0
        %1004 = vmatpush2.msra.mxu0 0.0
        %1005 = vmatprep.subr.mxu0 0.0
        %1006 = vmatpush2.msra.mxu0 0.0
        %1007 = vmatprep.subr.mxu0 0.0
        %1008 = vmatpush2.msra.mxu0 0.0
        %1009 = vmatprep.mubr.f32.mxu0 0.0
        %1010 = vmatmul.mubr.f32.gmra.mxu0 %v943
        %v1011 = vpop.f32.mrf.mxu0
        %v1012 = vadd.f32 0.0, %v1011
        %v1013 = vpop.f32.mrf.mxu0
        %1014 = vdwg.mxu0
        %v1016 = vrot.slane %v1012, 4
        %1017 = vrot.lane.b32.xlu0 %v1016, 32
        %v1018 = vpop.permute.xlu0 %1017
        %v1020 = vsel %vm609, %v1012, %v1018
        %v1021 = vadd.f32 %v1020, %v469
        %v1024 = vunpack.c.l.s4 1966171168
        %v1025 = vunpack.c.0.s8 %v1024
        %v1026 = vlaneseq
        %v1027 = vshrl.u32 %v1026, 7
        %v1028 = vsub.s32 %v1025, %v1027
        %v1029 = vrot.slane %v1021, %v1028
        %v1030 = vcombine.high %v1029, %v1029
        %v1032 = vunpack.c.l.s4 1966171168
        %v1033 = vunpack.c.0.s8 %v1032
        %v1034 = vlaneseq
        %v1035 = vshrl.u32 %v1034, 7
        %v1036 = vsub.s32 %v1033, %v1035
        %v1037 = vrot.slane %v1029, %v1036
        %v1039 = vunpack.c.l.s4 1966171168
        %v1040 = vunpack.c.0.s8 %v1039
        %v1041 = vlaneseq
        %v1042 = vshrl.u32 %v1041, 7
        %v1043 = vsub.s32 %v1040, %v1042
        %v1044 = vrot.slane %v1030, %v1043
        %v1045 = vcombine.high %v1037, %v1037
        %v1046 = vcombine.high %v1044, %v1044
        %1051 = vst.msk [vmem:[%s214 + $0x3] sm:$0x1] %vm641, %v1037
        %1052 = vst.msk [vmem:[%s214 + $0x13] sm:$0x1] %vm641, %v1044
        %1053 = vst.msk [vmem:[%s214 + $0x23] sm:$0x1] %vm641, %v1045
        %1054 = vst.msk [vmem:[%s214 + $0x33] sm:$0x1] %vm641, %v1046
        %1055 = vrot.lane.b32.xlu0 %v482, 56
        %v1056 = vpop.permute.xlu0 %1055
        %1058 = vrot.lane.b32.xlu0 %v498, 74
        %v1059 = vpop.permute.xlu0 %1058
        %1061 = vrot.lane.b32.xlu0 %v483, 92
        %v1062 = vpop.permute.xlu0 %1061
        %v1064 = vsel %vm506, %v1056, %v1059
        %v1065 = vsel %vm508, %v1064, %v1062
        %1066 = vrot.lane.b32.xlu0 %v495, 38
        %v1067 = vpop.permute.xlu0 %1066
        %1069 = vrot.lane.b32.xlu0 %v514, 56
        %v1070 = vpop.permute.xlu0 %1069
        %1072 = vrot.lane.b32.xlu0 %v496, 74
        %v1073 = vpop.permute.xlu0 %1072
        %v1075 = vsel %vm506, %v1067, %v1070
        %v1076 = vsel %vm508, %v1075, %v1073
        %v1078 = vrot.slane %v1076, 4
        %v1080 = vsel %vm255, %v1065, %v1078
        %v1082 = vsel %vm526, %v1080, 0
        %1084 = vmatprep.subr.mxu0 0.0
        %1085 = vmatpush1.msra.mxu0 0.0
        %1086 = vmatprep.subr.mxu0 0.0
        %1087 = vmatpush1.msra.mxu0 0.0
        %1088 = vmatprep.subr.mxu0 0.0
        %1089 = vmatpush1.msra.mxu0 0.0
        %1090 = vmatprep.subr.mxu0 0.0
        %1091 = vmatpush1.msra.mxu0 0.0
        %1092 = vmatprep.subr.mxu0 0.0
        %1093 = vmatpush1.msra.mxu0 0.0
        %1094 = vmatprep.subr.mxu0 0.0
        %1095 = vmatpush1.msra.mxu0 0.0
        %1096 = vmatprep.subr.mxu0 0.0
        %1097 = vmatpush1.msra.mxu0 0.0
        %1098 = vmatprep.subr.mxu0 0.0
        %1099 = vmatpush1.msra.mxu0 0.0
        %1100 = vmatprep.subr.mxu0 0.0
        %1101 = vmatpush1.msra.mxu0 0.0
        %1102 = vmatprep.subr.mxu0 0.0
        %1103 = vmatpush1.msra.mxu0 %v532
        %1104 = vmatprep.subr.mxu0 0.0
        %1105 = vmatpush1.msra.mxu0 %v463
        %1106 = vmatprep.subr.mxu0 0.0
        %1107 = vmatpush1.msra.mxu0 %v462
        %1108 = vmatprep.subr.mxu0 0.0
        %1109 = vmatpush1.msra.mxu0 %v461
        %1110 = vmatprep.subr.mxu0 0.0
        %1111 = vmatpush1.msra.mxu0 %v460
        %1112 = vmatprep.subr.mxu0 0.0
        %1113 = vmatpush1.msra.mxu0 %v459
        %1114 = vmatprep.subr.mxu0 0.0
        %1115 = vmatpush1.msra.mxu0 %v458
        %1116 = vmatprep.subr.mxu0 0.0
        %1117 = vmatpush2.msra.mxu0 0.0
        %1118 = vmatprep.subr.mxu0 0.0
        %1119 = vmatpush2.msra.mxu0 0.0
        %1120 = vmatprep.subr.mxu0 0.0
        %1121 = vmatpush2.msra.mxu0 0.0
        %1122 = vmatprep.subr.mxu0 0.0
        %1123 = vmatpush2.msra.mxu0 0.0
        %1124 = vmatprep.subr.mxu0 0.0
        %1125 = vmatpush2.msra.mxu0 0.0
        %1126 = vmatprep.subr.mxu0 0.0
        %1127 = vmatpush2.msra.mxu0 0.0
        %1128 = vmatprep.subr.mxu0 0.0
        %1129 = vmatpush2.msra.mxu0 0.0
        %1130 = vmatprep.subr.mxu0 0.0
        %1131 = vmatpush2.msra.mxu0 0.0
        %1132 = vmatprep.subr.mxu0 0.0
        %1133 = vmatpush2.msra.mxu0 0.0
        %1134 = vmatprep.subr.mxu0 0.0
        %1135 = vmatpush2.msra.mxu0 0.0
        %1136 = vmatprep.subr.mxu0 0.0
        %1137 = vmatpush2.msra.mxu0 0.0
        %1138 = vmatprep.subr.mxu0 0.0
        %1139 = vmatpush2.msra.mxu0 0.0
        %1140 = vmatprep.subr.mxu0 0.0
        %1141 = vmatpush2.msra.mxu0 0.0
        %1142 = vmatprep.subr.mxu0 0.0
        %1143 = vmatpush2.msra.mxu0 0.0
        %1144 = vmatprep.subr.mxu0 0.0
        %1145 = vmatpush2.msra.mxu0 0.0
        %1146 = vmatprep.subr.mxu0 0.0
        %1147 = vmatpush2.msra.mxu0 0.0
        %1148 = vmatprep.mubr.f32.mxu0 0.0
        %1149 = vmatmul.mubr.f32.gmra.mxu0 %v1082
        %v1150 = vpop.f32.mrf.mxu0
        %v1151 = vadd.f32 0.0, %v1150
        %v1152 = vpop.f32.mrf.mxu0
        %1153 = vdwg.mxu0
        %v1155 = vrot.slane %v1151, 4
        %1156 = vrot.lane.b32.xlu0 %v1155, 32
        %v1157 = vpop.permute.xlu0 %1156
        %v1159 = vsel %vm609, %v1151, %v1157
        %v1160 = vadd.f32 %v1159, %v469
        %v1163 = vunpack.c.l.s4 1966171168
        %v1164 = vunpack.c.0.s8 %v1163
        %v1165 = vlaneseq
        %v1166 = vshrl.u32 %v1165, 7
        %v1167 = vsub.s32 %v1164, %v1166
        %v1168 = vrot.slane %v1160, %v1167
        %v1169 = vcombine.high %v1168, %v1168
        %v1171 = vunpack.c.l.s4 1966171168
        %v1172 = vunpack.c.0.s8 %v1171
        %v1173 = vlaneseq
        %v1174 = vshrl.u32 %v1173, 7
        %v1175 = vsub.s32 %v1172, %v1174
        %v1176 = vrot.slane %v1168, %v1175
        %v1178 = vunpack.c.l.s4 1966171168
        %v1179 = vunpack.c.0.s8 %v1178
        %v1180 = vlaneseq
        %v1181 = vshrl.u32 %v1180, 7
        %v1182 = vsub.s32 %v1179, %v1181
        %v1183 = vrot.slane %v1169, %v1182
        %v1184 = vcombine.high %v1176, %v1176
        %v1185 = vcombine.high %v1183, %v1183
        %1190 = vst.msk [vmem:[%s214 + $0x4] sm:$0x1] %vm641, %v1176
        %1191 = vst.msk [vmem:[%s214 + $0x14] sm:$0x1] %vm641, %v1183
        %1192 = vst.msk [vmem:[%s214 + $0x24] sm:$0x1] %vm641, %v1184
        %1193 = vst.msk [vmem:[%s214 + $0x34] sm:$0x1] %vm641, %v1185
        %v1196 = vrot.slane %v355, 4
        %v1197 = vrot.slane %v361, 4
        %v1198 = vsel %vm255, %v1196, %v1197
        %1199 = vrot.lane.b32.xlu0 %v1198, 110
        %v1200 = vpop.permute.xlu0 %1199
        %1201 = vrot.lane.b32.xlu0 %v1197, 110
        %v1202 = vpop.permute.xlu0 %1201
        %vm1203 = vcmask 900096
        %v1204 = vsel %vm1203, %v490, %v1200
        %v1205 = vsel %vm1203, %v492, %v1202
        %v1208 = vadd.f32 %v347, %v1204
        %v1209 = vadd.f32 %v353, %v1205
        %1210 = vrot.lane.b32.xlu0 %v482, 38
        %v1211 = vpop.permute.xlu0 %1210
        %1213 = vrot.lane.b32.xlu0 %v498, 56
        %v1214 = vpop.permute.xlu0 %1213
        %1216 = vrot.lane.b32.xlu0 %v483, 74
        %v1217 = vpop.permute.xlu0 %1216
        %v1219 = vsel %vm506, %v1211, %v1214
        %v1220 = vsel %vm508, %v1219, %v1217
        %1222 = vrot.lane.b32.xlu0 %v1208, 20
        %v1223 = vpop.permute.xlu0 %1222
        %v1225 = vrot.slane %v1208, 4
        %1226 = vrot.lane.b32.xlu0 %v1225, 38
        %v1227 = vpop.permute.xlu0 %1226
        %1230 = vrot.lane.b32.xlu0 %v1209, 56
        %v1231 = vpop.permute.xlu0 %1230
        %v1233 = vsel %vm506, %v1223, %v1227
        %v1234 = vsel %vm508, %v1233, %v1231
        %v1236 = vrot.slane %v1234, 4
        %v1238 = vsel %vm255, %v1220, %v1236
        %v1240 = vsel %vm526, %v1238, 0
        %1242 = vmatprep.subr.mxu0 0.0
        %1243 = vmatpush1.msra.mxu0 0.0
        %1244 = vmatprep.subr.mxu0 0.0
        %1245 = vmatpush1.msra.mxu0 0.0
        %1246 = vmatprep.subr.mxu0 0.0
        %1247 = vmatpush1.msra.mxu0 0.0
        %1248 = vmatprep.subr.mxu0 0.0
        %1249 = vmatpush1.msra.mxu0 0.0
        %1250 = vmatprep.subr.mxu0 0.0
        %1251 = vmatpush1.msra.mxu0 0.0
        %1252 = vmatprep.subr.mxu0 0.0
        %1253 = vmatpush1.msra.mxu0 0.0
        %1254 = vmatprep.subr.mxu0 0.0
        %1255 = vmatpush1.msra.mxu0 0.0
        %1256 = vmatprep.subr.mxu0 0.0
        %1257 = vmatpush1.msra.mxu0 0.0
        %1258 = vmatprep.subr.mxu0 0.0
        %1259 = vmatpush1.msra.mxu0 0.0
        %1260 = vmatprep.subr.mxu0 0.0
        %1261 = vmatpush1.msra.mxu0 %v532
        %1262 = vmatprep.subr.mxu0 0.0
        %1263 = vmatpush1.msra.mxu0 %v463
        %1264 = vmatprep.subr.mxu0 0.0
        %1265 = vmatpush1.msra.mxu0 %v462
        %1266 = vmatprep.subr.mxu0 0.0
        %1267 = vmatpush1.msra.mxu0 %v461
        %1268 = vmatprep.subr.mxu0 0.0
        %1269 = vmatpush1.msra.mxu0 %v460
        %1270 = vmatprep.subr.mxu0 0.0
        %1271 = vmatpush1.msra.mxu0 %v459
        %1272 = vmatprep.subr.mxu0 0.0
        %1273 = vmatpush1.msra.mxu0 %v458
        %1274 = vmatprep.subr.mxu0 0.0
        %1275 = vmatpush2.msra.mxu0 0.0
        %1276 = vmatprep.subr.mxu0 0.0
        %1277 = vmatpush2.msra.mxu0 0.0
        %1278 = vmatprep.subr.mxu0 0.0
        %1279 = vmatpush2.msra.mxu0 0.0
        %1280 = vmatprep.subr.mxu0 0.0
        %1281 = vmatpush2.msra.mxu0 0.0
        %1282 = vmatprep.subr.mxu0 0.0
        %1283 = vmatpush2.msra.mxu0 0.0
        %1284 = vmatprep.subr.mxu0 0.0
        %1285 = vmatpush2.msra.mxu0 0.0
        %1286 = vmatprep.subr.mxu0 0.0
        %1287 = vmatpush2.msra.mxu0 0.0
        %1288 = vmatprep.subr.mxu0 0.0
        %1289 = vmatpush2.msra.mxu0 0.0
        %1290 = vmatprep.subr.mxu0 0.0
        %1291 = vmatpush2.msra.mxu0 0.0
        %1292 = vmatprep.subr.mxu0 0.0
        %1293 = vmatpush2.msra.mxu0 0.0
        %1294 = vmatprep.subr.mxu0 0.0
        %1295 = vmatpush2.msra.mxu0 0.0
        %1296 = vmatprep.subr.mxu0 0.0
        %1297 = vmatpush2.msra.mxu0 0.0
        %1298 = vmatprep.subr.mxu0 0.0
        %1299 = vmatpush2.msra.mxu0 0.0
        %1300 = vmatprep.subr.mxu0 0.0
        %1301 = vmatpush2.msra.mxu0 0.0
        %1302 = vmatprep.subr.mxu0 0.0
        %1303 = vmatpush2.msra.mxu0 0.0
        %1304 = vmatprep.subr.mxu0 0.0
        %1305 = vmatpush2.msra.mxu0 0.0
        %1306 = vmatprep.mubr.f32.mxu0 0.0
        %1307 = vmatmul.mubr.f32.gmra.mxu0 %v1240
        %v1308 = vpop.f32.mrf.mxu0
        %v1309 = vadd.f32 0.0, %v1308
        %v1310 = vpop.f32.mrf.mxu0
        %1311 = vdwg.mxu0
        %v1313 = vrot.slane %v1309, 4
        %1314 = vrot.lane.b32.xlu0 %v1313, 32
        %v1315 = vpop.permute.xlu0 %1314
        %v1317 = vsel %vm609, %v1309, %v1315
        %v1318 = vadd.f32 %v1317, %v469
        %v1321 = vunpack.c.l.s4 1966171168
        %v1322 = vunpack.c.0.s8 %v1321
        %v1323 = vlaneseq
        %v1324 = vshrl.u32 %v1323, 7
        %v1325 = vsub.s32 %v1322, %v1324
        %v1326 = vrot.slane %v1318, %v1325
        %v1327 = vcombine.high %v1326, %v1326
        %v1329 = vunpack.c.l.s4 1966171168
        %v1330 = vunpack.c.0.s8 %v1329
        %v1331 = vlaneseq
        %v1332 = vshrl.u32 %v1331, 7
        %v1333 = vsub.s32 %v1330, %v1332
        %v1334 = vrot.slane %v1326, %v1333
        %v1336 = vunpack.c.l.s4 1966171168
        %v1337 = vunpack.c.0.s8 %v1336
        %v1338 = vlaneseq
        %v1339 = vshrl.u32 %v1338, 7
        %v1340 = vsub.s32 %v1337, %v1339
        %v1341 = vrot.slane %v1327, %v1340
        %v1342 = vcombine.high %v1334, %v1334
        %v1343 = vcombine.high %v1341, %v1341
        %1348 = vst.msk [vmem:[%s214 + $0x5] sm:$0x1] %vm641, %v1334
        %1349 = vst.msk [vmem:[%s214 + $0x15] sm:$0x1] %vm641, %v1341
        %1350 = vst.msk [vmem:[%s214 + $0x25] sm:$0x1] %vm641, %v1342
        %1351 = vst.msk [vmem:[%s214 + $0x35] sm:$0x1] %vm641, %v1343
        %v1354 = vrot.slane %v337, 4
        %v1355 = vrot.slane %v343, 4
        %v1356 = vsel %vm255, %v1354, %v1355
        %1357 = vrot.lane.b32.xlu0 %v1356, 110
        %v1358 = vpop.permute.xlu0 %1357
        %1359 = vrot.lane.b32.xlu0 %v1355, 110
        %v1360 = vpop.permute.xlu0 %1359
        %v1361 = vsel %vm1203, %v477, %v1358
        %v1362 = vsel %vm1203, %v479, %v1360
        %v1365 = vadd.f32 %v329, %v1361
        %v1366 = vadd.f32 %v335, %v1362
        %v1369 = vadd.f32 %v347, %v1200
        %v1370 = vadd.f32 %v349, %v1200
        %v1371 = vadd.f32 %v353, %v1202
        %v1372 = vadd.f32 %v355, %v1202
        %1374 = vrot.lane.b32.xlu0 %v1365, 20
        %v1375 = vpop.permute.xlu0 %1374
        %v1377 = vrot.slane %v1365, 4
        %1378 = vrot.lane.b32.xlu0 %v1377, 38
        %v1379 = vpop.permute.xlu0 %1378
        %1382 = vrot.lane.b32.xlu0 %v1366, 56
        %v1383 = vpop.permute.xlu0 %1382
        %v1385 = vsel %vm506, %v1375, %v1379
        %v1386 = vsel %vm508, %v1385, %v1383
        %1389 = vrot.lane.b32.xlu0 %v1369, 2
        %v1390 = vpop.permute.xlu0 %1389
        %1391 = vrot.lane.b32.xlu0 %v1370, 2
        %v1392 = vpop.permute.xlu0 %1391
        %vm1393 = vcmask 15360
        %v1394 = vsel %vm1393, %v1390, %v1392
        %v1396 = vrot.slane %v1369, 4
        %v1397 = vrot.slane %v1370, 4
        %1398 = vrot.lane.b32.xlu0 %v1396, 20
        %v1399 = vpop.permute.xlu0 %1398
        %1400 = vrot.lane.b32.xlu0 %v1397, 20
        %v1401 = vpop.permute.xlu0 %1400
        %vm1402 = vcmask 162816
        %v1403 = vsel %vm1402, %v1399, %v1401
        %1407 = vrot.lane.b32.xlu0 %v1371, 38
        %v1408 = vpop.permute.xlu0 %1407
        %1409 = vrot.lane.b32.xlu0 %v1372, 38
        %v1410 = vpop.permute.xlu0 %1409
        %vm1411 = vcmask 310272
        %v1412 = vsel %vm1411, %v1408, %v1410
        %v1414 = vsel %vm506, %v1394, %v1403
        %v1415 = vsel %vm508, %v1414, %v1412
        %v1417 = vrot.slane %v1415, 4
        %v1419 = vsel %vm255, %v1386, %v1417
        %v1421 = vsel %vm526, %v1419, 0
        %1423 = vmatprep.subr.mxu0 0.0
        %1424 = vmatpush1.msra.mxu0 0.0
        %1425 = vmatprep.subr.mxu0 0.0
        %1426 = vmatpush1.msra.mxu0 0.0
        %1427 = vmatprep.subr.mxu0 0.0
        %1428 = vmatpush1.msra.mxu0 0.0
        %1429 = vmatprep.subr.mxu0 0.0
        %1430 = vmatpush1.msra.mxu0 0.0
        %1431 = vmatprep.subr.mxu0 0.0
        %1432 = vmatpush1.msra.mxu0 0.0
        %1433 = vmatprep.subr.mxu0 0.0
        %1434 = vmatpush1.msra.mxu0 0.0
        %1435 = vmatprep.subr.mxu0 0.0
        %1436 = vmatpush1.msra.mxu0 0.0
        %1437 = vmatprep.subr.mxu0 0.0
        %1438 = vmatpush1.msra.mxu0 0.0
        %1439 = vmatprep.subr.mxu0 0.0
        %1440 = vmatpush1.msra.mxu0 0.0
        %1441 = vmatprep.subr.mxu0 0.0
        %1442 = vmatpush1.msra.mxu0 %v532
        %1443 = vmatprep.subr.mxu0 0.0
        %1444 = vmatpush1.msra.mxu0 %v463
        %1445 = vmatprep.subr.mxu0 0.0
        %1446 = vmatpush1.msra.mxu0 %v462
        %1447 = vmatprep.subr.mxu0 0.0
        %1448 = vmatpush1.msra.mxu0 %v461
        %1449 = vmatprep.subr.mxu0 0.0
        %1450 = vmatpush1.msra.mxu0 %v460
        %1451 = vmatprep.subr.mxu0 0.0
        %1452 = vmatpush1.msra.mxu0 %v459
        %1453 = vmatprep.subr.mxu0 0.0
        %1454 = vmatpush1.msra.mxu0 %v458
        %1455 = vmatprep.subr.mxu0 0.0
        %1456 = vmatpush2.msra.mxu0 0.0
        %1457 = vmatprep.subr.mxu0 0.0
        %1458 = vmatpush2.msra.mxu0 0.0
        %1459 = vmatprep.subr.mxu0 0.0
        %1460 = vmatpush2.msra.mxu0 0.0
        %1461 = vmatprep.subr.mxu0 0.0
        %1462 = vmatpush2.msra.mxu0 0.0
        %1463 = vmatprep.subr.mxu0 0.0
        %1464 = vmatpush2.msra.mxu0 0.0
        %1465 = vmatprep.subr.mxu0 0.0
        %1466 = vmatpush2.msra.mxu0 0.0
        %1467 = vmatprep.subr.mxu0 0.0
        %1468 = vmatpush2.msra.mxu0 0.0
        %1469 = vmatprep.subr.mxu0 0.0
        %1470 = vmatpush2.msra.mxu0 0.0
        %1471 = vmatprep.subr.mxu0 0.0
        %1472 = vmatpush2.msra.mxu0 0.0
        %1473 = vmatprep.subr.mxu0 0.0
        %1474 = vmatpush2.msra.mxu0 0.0
        %1475 = vmatprep.subr.mxu0 0.0
        %1476 = vmatpush2.msra.mxu0 0.0
        %1477 = vmatprep.subr.mxu0 0.0
        %1478 = vmatpush2.msra.mxu0 0.0
        %1479 = vmatprep.subr.mxu0 0.0
        %1480 = vmatpush2.msra.mxu0 0.0
        %1481 = vmatprep.subr.mxu0 0.0
        %1482 = vmatpush2.msra.mxu0 0.0
        %1483 = vmatprep.subr.mxu0 0.0
        %1484 = vmatpush2.msra.mxu0 0.0
        %1485 = vmatprep.subr.mxu0 0.0
        %1486 = vmatpush2.msra.mxu0 0.0
        %1487 = vmatprep.mubr.f32.mxu0 0.0
        %1488 = vmatmul.mubr.f32.gmra.mxu0 %v1421
        %v1489 = vpop.f32.mrf.mxu0
        %v1490 = vadd.f32 0.0, %v1489
        %v1491 = vpop.f32.mrf.mxu0
        %1492 = vdwg.mxu0
        %v1494 = vrot.slane %v1490, 4
        %1495 = vrot.lane.b32.xlu0 %v1494, 32
        %v1496 = vpop.permute.xlu0 %1495
        %v1498 = vsel %vm609, %v1490, %v1496
        %v1499 = vadd.f32 %v1498, %v469
        %v1502 = vunpack.c.l.s4 1966171168
        %v1503 = vunpack.c.0.s8 %v1502
        %v1504 = vlaneseq
        %v1505 = vshrl.u32 %v1504, 7
        %v1506 = vsub.s32 %v1503, %v1505
        %v1507 = vrot.slane %v1499, %v1506
        %v1508 = vcombine.high %v1507, %v1507
        %v1510 = vunpack.c.l.s4 1966171168
        %v1511 = vunpack.c.0.s8 %v1510
        %v1512 = vlaneseq
        %v1513 = vshrl.u32 %v1512, 7
        %v1514 = vsub.s32 %v1511, %v1513
        %v1515 = vrot.slane %v1507, %v1514
        %v1517 = vunpack.c.l.s4 1966171168
        %v1518 = vunpack.c.0.s8 %v1517
        %v1519 = vlaneseq
        %v1520 = vshrl.u32 %v1519, 7
        %v1521 = vsub.s32 %v1518, %v1520
        %v1522 = vrot.slane %v1508, %v1521
        %v1523 = vcombine.high %v1515, %v1515
        %v1524 = vcombine.high %v1522, %v1522
        %1529 = vst.msk [vmem:[%s214 + $0x6] sm:$0x1] %vm641, %v1515
        %1530 = vst.msk [vmem:[%s214 + $0x16] sm:$0x1] %vm641, %v1522
        %1531 = vst.msk [vmem:[%s214 + $0x26] sm:$0x1] %vm641, %v1523
        %1532 = vst.msk [vmem:[%s214 + $0x36] sm:$0x1] %vm641, %v1524
        %v1535 = vadd.f32 %v329, %v1358
        %v1536 = vadd.f32 %v331, %v1358
        %v1537 = vadd.f32 %v335, %v1360
        %v1538 = vadd.f32 %v337, %v1360
        %1541 = vrot.lane.b32.xlu0 %v1535, 2
        %v1542 = vpop.permute.xlu0 %1541
        %1543 = vrot.lane.b32.xlu0 %v1536, 2
        %v1544 = vpop.permute.xlu0 %1543
        %v1545 = vsel %vm1393, %v1542, %v1544
        %v1547 = vrot.slane %v1535, 4
        %v1548 = vrot.slane %v1536, 4
        %1549 = vrot.lane.b32.xlu0 %v1547, 20
        %v1550 = vpop.permute.xlu0 %1549
        %1551 = vrot.lane.b32.xlu0 %v1548, 20
        %v1552 = vpop.permute.xlu0 %1551
        %v1553 = vsel %vm1402, %v1550, %v1552
        %1557 = vrot.lane.b32.xlu0 %v1537, 38
        %v1558 = vpop.permute.xlu0 %1557
        %1559 = vrot.lane.b32.xlu0 %v1538, 38
        %v1560 = vpop.permute.xlu0 %1559
        %v1561 = vsel %vm1411, %v1558, %v1560
        %v1563 = vsel %vm506, %v1545, %v1553
        %v1564 = vsel %vm508, %v1563, %v1561
        %1565 = vrot.lane.b32.xlu0 %v1370, 112
        %v1566 = vpop.permute.xlu0 %1565
        %1568 = vrot.lane.b32.xlu0 %v1397, 2
        %v1569 = vpop.permute.xlu0 %1568
        %1571 = vrot.lane.b32.xlu0 %v1372, 20
        %v1572 = vpop.permute.xlu0 %1571
        %v1574 = vsel %vm506, %v1566, %v1569
        %v1575 = vsel %vm508, %v1574, %v1572
        %v1577 = vrot.slane %v1575, 4
        %v1579 = vsel %vm255, %v1564, %v1577
        %v1581 = vsel %vm526, %v1579, 0
        %1583 = vmatprep.subr.mxu0 0.0
        %1584 = vmatpush1.msra.mxu0 0.0
        %1585 = vmatprep.subr.mxu0 0.0
        %1586 = vmatpush1.msra.mxu0 0.0
        %1587 = vmatprep.subr.mxu0 0.0
        %1588 = vmatpush1.msra.mxu0 0.0
        %1589 = vmatprep.subr.mxu0 0.0
        %1590 = vmatpush1.msra.mxu0 0.0
        %1591 = vmatprep.subr.mxu0 0.0
        %1592 = vmatpush1.msra.mxu0 0.0
        %1593 = vmatprep.subr.mxu0 0.0
        %1594 = vmatpush1.msra.mxu0 0.0
        %1595 = vmatprep.subr.mxu0 0.0
        %1596 = vmatpush1.msra.mxu0 0.0
        %1597 = vmatprep.subr.mxu0 0.0
        %1598 = vmatpush1.msra.mxu0 0.0
        %1599 = vmatprep.subr.mxu0 0.0
        %1600 = vmatpush1.msra.mxu0 0.0
        %1601 = vmatprep.subr.mxu0 0.0
        %1602 = vmatpush1.msra.mxu0 %v532
        %1603 = vmatprep.subr.mxu0 0.0
        %1604 = vmatpush1.msra.mxu0 %v463
        %1605 = vmatprep.subr.mxu0 0.0
        %1606 = vmatpush1.msra.mxu0 %v462
        %1607 = vmatprep.subr.mxu0 0.0
        %1608 = vmatpush1.msra.mxu0 %v461
        %1609 = vmatprep.subr.mxu0 0.0
        %1610 = vmatpush1.msra.mxu0 %v460
        %1611 = vmatprep.subr.mxu0 0.0
        %1612 = vmatpush1.msra.mxu0 %v459
        %1613 = vmatprep.subr.mxu0 0.0
        %1614 = vmatpush1.msra.mxu0 %v458
        %1615 = vmatprep.subr.mxu0 0.0
        %1616 = vmatpush2.msra.mxu0 0.0
        %1617 = vmatprep.subr.mxu0 0.0
        %1618 = vmatpush2.msra.mxu0 0.0
        %1619 = vmatprep.subr.mxu0 0.0
        %1620 = vmatpush2.msra.mxu0 0.0
        %1621 = vmatprep.subr.mxu0 0.0
        %1622 = vmatpush2.msra.mxu0 0.0
        %1623 = vmatprep.subr.mxu0 0.0
        %1624 = vmatpush2.msra.mxu0 0.0
        %1625 = vmatprep.subr.mxu0 0.0
        %1626 = vmatpush2.msra.mxu0 0.0
        %1627 = vmatprep.subr.mxu0 0.0
        %1628 = vmatpush2.msra.mxu0 0.0
        %1629 = vmatprep.subr.mxu0 0.0
        %1630 = vmatpush2.msra.mxu0 0.0
        %1631 = vmatprep.subr.mxu0 0.0
        %1632 = vmatpush2.msra.mxu0 0.0
        %1633 = vmatprep.subr.mxu0 0.0
        %1634 = vmatpush2.msra.mxu0 0.0
        %1635 = vmatprep.subr.mxu0 0.0
        %1636 = vmatpush2.msra.mxu0 0.0
        %1637 = vmatprep.subr.mxu0 0.0
        %1638 = vmatpush2.msra.mxu0 0.0
        %1639 = vmatprep.subr.mxu0 0.0
        %1640 = vmatpush2.msra.mxu0 0.0
        %1641 = vmatprep.subr.mxu0 0.0
        %1642 = vmatpush2.msra.mxu0 0.0
        %1643 = vmatprep.subr.mxu0 0.0
        %1644 = vmatpush2.msra.mxu0 0.0
        %1645 = vmatprep.subr.mxu0 0.0
        %1646 = vmatpush2.msra.mxu0 0.0
        %1647 = vmatprep.mubr.f32.mxu0 0.0
        %1648 = vmatmul.mubr.f32.gmra.mxu0 %v1581
        %v1649 = vpop.f32.mrf.mxu0
        %v1650 = vadd.f32 0.0, %v1649
        %v1651 = vpop.f32.mrf.mxu0
        %1652 = vdwg.mxu0
        %v1654 = vrot.slane %v1650, 4
        %1655 = vrot.lane.b32.xlu0 %v1654, 32
        %v1656 = vpop.permute.xlu0 %1655
        %v1658 = vsel %vm609, %v1650, %v1656
        %v1659 = vadd.f32 %v1658, %v469
        %v1662 = vunpack.c.l.s4 1966171168
        %v1663 = vunpack.c.0.s8 %v1662
        %v1664 = vlaneseq
        %v1665 = vshrl.u32 %v1664, 7
        %v1666 = vsub.s32 %v1663, %v1665
        %v1667 = vrot.slane %v1659, %v1666
        %v1668 = vcombine.high %v1667, %v1667
        %v1670 = vunpack.c.l.s4 1966171168
        %v1671 = vunpack.c.0.s8 %v1670
        %v1672 = vlaneseq
        %v1673 = vshrl.u32 %v1672, 7
        %v1674 = vsub.s32 %v1671, %v1673
        %v1675 = vrot.slane %v1667, %v1674
        %v1677 = vunpack.c.l.s4 1966171168
        %v1678 = vunpack.c.0.s8 %v1677
        %v1679 = vlaneseq
        %v1680 = vshrl.u32 %v1679, 7
        %v1681 = vsub.s32 %v1678, %v1680
        %v1682 = vrot.slane %v1668, %v1681
        %v1683 = vcombine.high %v1675, %v1675
        %v1684 = vcombine.high %v1682, %v1682
        %1689 = vst.msk [vmem:[%s214 + $0x7] sm:$0x1] %vm641, %v1675
        %1690 = vst.msk [vmem:[%s214 + $0x17] sm:$0x1] %vm641, %v1682
        %1691 = vst.msk [vmem:[%s214 + $0x27] sm:$0x1] %vm641, %v1683
        %1692 = vst.msk [vmem:[%s214 + $0x37] sm:$0x1] %vm641, %v1684
        %1693 = vrot.lane.b32.xlu0 %v1536, 112
        %v1694 = vpop.permute.xlu0 %1693
        %1696 = vrot.lane.b32.xlu0 %v1548, 2
        %v1697 = vpop.permute.xlu0 %1696
        %1699 = vrot.lane.b32.xlu0 %v1538, 20
        %v1700 = vpop.permute.xlu0 %1699
        %v1702 = vsel %vm506, %v1694, %v1697
        %v1703 = vsel %vm508, %v1702, %v1700
        %1704 = vrot.lane.b32.xlu0 %v1370, 94
        %v1705 = vpop.permute.xlu0 %1704
        %1707 = vrot.lane.b32.xlu0 %v1397, 112
        %v1708 = vpop.permute.xlu0 %1707
        %1710 = vrot.lane.b32.xlu0 %v1372, 2
        %v1711 = vpop.permute.xlu0 %1710
        %v1713 = vsel %vm506, %v1705, %v1708
        %v1714 = vsel %vm508, %v1713, %v1711
        %v1716 = vrot.slane %v1714, 4
        %v1718 = vsel %vm255, %v1703, %v1716
        %v1720 = vsel %vm526, %v1718, 0
        %1722 = vmatprep.subr.mxu0 0.0
        %1723 = vmatpush1.msra.mxu0 0.0
        %1724 = vmatprep.subr.mxu0 0.0
        %1725 = vmatpush1.msra.mxu0 0.0
        %1726 = vmatprep.subr.mxu0 0.0
        %1727 = vmatpush1.msra.mxu0 0.0
        %1728 = vmatprep.subr.mxu0 0.0
        %1729 = vmatpush1.msra.mxu0 0.0
        %1730 = vmatprep.subr.mxu0 0.0
        %1731 = vmatpush1.msra.mxu0 0.0
        %1732 = vmatprep.subr.mxu0 0.0
        %1733 = vmatpush1.msra.mxu0 0.0
        %1734 = vmatprep.subr.mxu0 0.0
        %1735 = vmatpush1.msra.mxu0 0.0
        %1736 = vmatprep.subr.mxu0 0.0
        %1737 = vmatpush1.msra.mxu0 0.0
        %1738 = vmatprep.subr.mxu0 0.0
        %1739 = vmatpush1.msra.mxu0 0.0
        %1740 = vmatprep.subr.mxu0 0.0
        %1741 = vmatpush1.msra.mxu0 %v532
        %1742 = vmatprep.subr.mxu0 0.0
        %1743 = vmatpush1.msra.mxu0 %v463
        %1744 = vmatprep.subr.mxu0 0.0
        %1745 = vmatpush1.msra.mxu0 %v462
        %1746 = vmatprep.subr.mxu0 0.0
        %1747 = vmatpush1.msra.mxu0 %v461
        %1748 = vmatprep.subr.mxu0 0.0
        %1749 = vmatpush1.msra.mxu0 %v460
        %1750 = vmatprep.subr.mxu0 0.0
        %1751 = vmatpush1.msra.mxu0 %v459
        %1752 = vmatprep.subr.mxu0 0.0
        %1753 = vmatpush1.msra.mxu0 %v458
        %1754 = vmatprep.subr.mxu0 0.0
        %1755 = vmatpush2.msra.mxu0 0.0
        %1756 = vmatprep.subr.mxu0 0.0
        %1757 = vmatpush2.msra.mxu0 0.0
        %1758 = vmatprep.subr.mxu0 0.0
        %1759 = vmatpush2.msra.mxu0 0.0
        %1760 = vmatprep.subr.mxu0 0.0
        %1761 = vmatpush2.msra.mxu0 0.0
        %1762 = vmatprep.subr.mxu0 0.0
        %1763 = vmatpush2.msra.mxu0 0.0
        %1764 = vmatprep.subr.mxu0 0.0
        %1765 = vmatpush2.msra.mxu0 0.0
        %1766 = vmatprep.subr.mxu0 0.0
        %1767 = vmatpush2.msra.mxu0 0.0
        %1768 = vmatprep.subr.mxu0 0.0
        %1769 = vmatpush2.msra.mxu0 0.0
        %1770 = vmatprep.subr.mxu0 0.0
        %1771 = vmatpush2.msra.mxu0 0.0
        %1772 = vmatprep.subr.mxu0 0.0
        %1773 = vmatpush2.msra.mxu0 0.0
        %1774 = vmatprep.subr.mxu0 0.0
        %1775 = vmatpush2.msra.mxu0 0.0
        %1776 = vmatprep.subr.mxu0 0.0
        %1777 = vmatpush2.msra.mxu0 0.0
        %1778 = vmatprep.subr.mxu0 0.0
        %1779 = vmatpush2.msra.mxu0 0.0
        %1780 = vmatprep.subr.mxu0 0.0
        %1781 = vmatpush2.msra.mxu0 0.0
        %1782 = vmatprep.subr.mxu0 0.0
        %1783 = vmatpush2.msra.mxu0 0.0
        %1784 = vmatprep.subr.mxu0 0.0
        %1785 = vmatpush2.msra.mxu0 0.0
        %1786 = vmatprep.mubr.f32.mxu0 0.0
        %1787 = vmatmul.mubr.f32.gmra.mxu0 %v1720
        %v1788 = vpop.f32.mrf.mxu0
        %v1789 = vadd.f32 0.0, %v1788
        %v1790 = vpop.f32.mrf.mxu0
        %1791 = vdwg.mxu0
        %v1793 = vrot.slane %v1789, 4
        %1794 = vrot.lane.b32.xlu0 %v1793, 32
        %v1795 = vpop.permute.xlu0 %1794
        %v1797 = vsel %vm609, %v1789, %v1795
        %v1798 = vadd.f32 %v1797, %v469
        %v1801 = vunpack.c.l.s4 1966171168
        %v1802 = vunpack.c.0.s8 %v1801
        %v1803 = vlaneseq
        %v1804 = vshrl.u32 %v1803, 7
        %v1805 = vsub.s32 %v1802, %v1804
        %v1806 = vrot.slane %v1798, %v1805
        %v1807 = vcombine.high %v1806, %v1806
        %v1809 = vunpack.c.l.s4 1966171168
        %v1810 = vunpack.c.0.s8 %v1809
        %v1811 = vlaneseq
        %v1812 = vshrl.u32 %v1811, 7
        %v1813 = vsub.s32 %v1810, %v1812
        %v1814 = vrot.slane %v1806, %v1813
        %v1816 = vunpack.c.l.s4 1966171168
        %v1817 = vunpack.c.0.s8 %v1816
        %v1818 = vlaneseq
        %v1819 = vshrl.u32 %v1818, 7
        %v1820 = vsub.s32 %v1817, %v1819
        %v1821 = vrot.slane %v1807, %v1820
        %v1822 = vcombine.high %v1814, %v1814
        %v1823 = vcombine.high %v1821, %v1821
        %1828 = vst.msk [vmem:[%s214 + $0x8] sm:$0x1] %vm641, %v1814
        %1829 = vst.msk [vmem:[%s214 + $0x18] sm:$0x1] %vm641, %v1821
        %1830 = vst.msk [vmem:[%s214 + $0x28] sm:$0x1] %vm641, %v1822
        %1831 = vst.msk [vmem:[%s214 + $0x38] sm:$0x1] %vm641, %v1823
        %1832 = vrot.lane.b32.xlu0 %v1536, 94
        %v1833 = vpop.permute.xlu0 %1832
        %1835 = vrot.lane.b32.xlu0 %v1548, 112
        %v1836 = vpop.permute.xlu0 %1835
        %1838 = vrot.lane.b32.xlu0 %v1538, 2
        %v1839 = vpop.permute.xlu0 %1838
        %v1841 = vsel %vm506, %v1833, %v1836
        %v1842 = vsel %vm508, %v1841, %v1839
        %1843 = vrot.lane.b32.xlu0 %v1370, 76
        %v1844 = vpop.permute.xlu0 %1843
        %1846 = vrot.lane.b32.xlu0 %v1397, 94
        %v1847 = vpop.permute.xlu0 %1846
        %1849 = vrot.lane.b32.xlu0 %v1372, 112
        %v1850 = vpop.permute.xlu0 %1849
        %v1852 = vsel %vm506, %v1844, %v1847
        %v1853 = vsel %vm508, %v1852, %v1850
        %v1855 = vrot.slane %v1853, 4
        %v1857 = vsel %vm255, %v1842, %v1855
        %v1859 = vsel %vm526, %v1857, 0
        %1861 = vmatprep.subr.mxu0 0.0
        %1862 = vmatpush1.msra.mxu0 0.0
        %1863 = vmatprep.subr.mxu0 0.0
        %1864 = vmatpush1.msra.mxu0 0.0
        %1865 = vmatprep.subr.mxu0 0.0
        %1866 = vmatpush1.msra.mxu0 0.0
        %1867 = vmatprep.subr.mxu0 0.0
        %1868 = vmatpush1.msra.mxu0 0.0
        %1869 = vmatprep.subr.mxu0 0.0
        %1870 = vmatpush1.msra.mxu0 0.0
        %1871 = vmatprep.subr.mxu0 0.0
        %1872 = vmatpush1.msra.mxu0 0.0
        %1873 = vmatprep.subr.mxu0 0.0
        %1874 = vmatpush1.msra.mxu0 0.0
        %1875 = vmatprep.subr.mxu0 0.0
        %1876 = vmatpush1.msra.mxu0 0.0
        %1877 = vmatprep.subr.mxu0 0.0
        %1878 = vmatpush1.msra.mxu0 0.0
        %1879 = vmatprep.subr.mxu0 0.0
        %1880 = vmatpush1.msra.mxu0 %v532
        %1881 = vmatprep.subr.mxu0 0.0
        %1882 = vmatpush1.msra.mxu0 %v463
        %1883 = vmatprep.subr.mxu0 0.0
        %1884 = vmatpush1.msra.mxu0 %v462
        %1885 = vmatprep.subr.mxu0 0.0
        %1886 = vmatpush1.msra.mxu0 %v461
        %1887 = vmatprep.subr.mxu0 0.0
        %1888 = vmatpush1.msra.mxu0 %v460
        %1889 = vmatprep.subr.mxu0 0.0
        %1890 = vmatpush1.msra.mxu0 %v459
        %1891 = vmatprep.subr.mxu0 0.0
        %1892 = vmatpush1.msra.mxu0 %v458
        %1893 = vmatprep.subr.mxu0 0.0
        %1894 = vmatpush2.msra.mxu0 0.0
        %1895 = vmatprep.subr.mxu0 0.0
        %1896 = vmatpush2.msra.mxu0 0.0
        %1897 = vmatprep.subr.mxu0 0.0
        %1898 = vmatpush2.msra.mxu0 0.0
        %1899 = vmatprep.subr.mxu0 0.0
        %1900 = vmatpush2.msra.mxu0 0.0
        %1901 = vmatprep.subr.mxu0 0.0
        %1902 = vmatpush2.msra.mxu0 0.0
        %1903 = vmatprep.subr.mxu0 0.0
        %1904 = vmatpush2.msra.mxu0 0.0
        %1905 = vmatprep.subr.mxu0 0.0
        %1906 = vmatpush2.msra.mxu0 0.0
        %1907 = vmatprep.subr.mxu0 0.0
        %1908 = vmatpush2.msra.mxu0 0.0
        %1909 = vmatprep.subr.mxu0 0.0
        %1910 = vmatpush2.msra.mxu0 0.0
        %1911 = vmatprep.subr.mxu0 0.0
        %1912 = vmatpush2.msra.mxu0 0.0
        %1913 = vmatprep.subr.mxu0 0.0
        %1914 = vmatpush2.msra.mxu0 0.0
        %1915 = vmatprep.subr.mxu0 0.0
        %1916 = vmatpush2.msra.mxu0 0.0
        %1917 = vmatprep.subr.mxu0 0.0
        %1918 = vmatpush2.msra.mxu0 0.0
        %1919 = vmatprep.subr.mxu0 0.0
        %1920 = vmatpush2.msra.mxu0 0.0
        %1921 = vmatprep.subr.mxu0 0.0
        %1922 = vmatpush2.msra.mxu0 0.0
        %1923 = vmatprep.subr.mxu0 0.0
        %1924 = vmatpush2.msra.mxu0 0.0
        %1925 = vmatprep.mubr.f32.mxu0 0.0
        %1926 = vmatmul.mubr.f32.gmra.mxu0 %v1859
        %v1927 = vpop.f32.mrf.mxu0
        %v1928 = vadd.f32 0.0, %v1927
        %v1929 = vpop.f32.mrf.mxu0
        %1930 = vdwg.mxu0
        %v1932 = vrot.slane %v1928, 4
        %1933 = vrot.lane.b32.xlu0 %v1932, 32
        %v1934 = vpop.permute.xlu0 %1933
        %v1936 = vsel %vm609, %v1928, %v1934
        %v1937 = vadd.f32 %v1936, %v469
        %v1940 = vunpack.c.l.s4 1966171168
        %v1941 = vunpack.c.0.s8 %v1940
        %v1942 = vlaneseq
        %v1943 = vshrl.u32 %v1942, 7
        %v1944 = vsub.s32 %v1941, %v1943
        %v1945 = vrot.slane %v1937, %v1944
        %v1946 = vcombine.high %v1945, %v1945
        %v1948 = vunpack.c.l.s4 1966171168
        %v1949 = vunpack.c.0.s8 %v1948
        %v1950 = vlaneseq
        %v1951 = vshrl.u32 %v1950, 7
        %v1952 = vsub.s32 %v1949, %v1951
        %v1953 = vrot.slane %v1945, %v1952
        %v1955 = vunpack.c.l.s4 1966171168
        %v1956 = vunpack.c.0.s8 %v1955
        %v1957 = vlaneseq
        %v1958 = vshrl.u32 %v1957, 7
        %v1959 = vsub.s32 %v1956, %v1958
        %v1960 = vrot.slane %v1946, %v1959
        %v1961 = vcombine.high %v1953, %v1953
        %v1962 = vcombine.high %v1960, %v1960
        %1967 = vst.msk [vmem:[%s214 + $0x9] sm:$0x1] %vm641, %v1953
        %1968 = vst.msk [vmem:[%s214 + $0x19] sm:$0x1] %vm641, %v1960
        %1969 = vst.msk [vmem:[%s214 + $0x29] sm:$0x1] %vm641, %v1961
        %1970 = vst.msk [vmem:[%s214 + $0x39] sm:$0x1] %vm641, %v1962
        %1971 = vrot.lane.b32.xlu0 %v1536, 76
        %v1972 = vpop.permute.xlu0 %1971
        %1974 = vrot.lane.b32.xlu0 %v1548, 94
        %v1975 = vpop.permute.xlu0 %1974
        %1977 = vrot.lane.b32.xlu0 %v1538, 112
        %v1978 = vpop.permute.xlu0 %1977
        %v1980 = vsel %vm506, %v1972, %v1975
        %v1981 = vsel %vm508, %v1980, %v1978
        %1982 = vrot.lane.b32.xlu0 %v1370, 58
        %v1983 = vpop.permute.xlu0 %1982
        %1985 = vrot.lane.b32.xlu0 %v1397, 76
        %v1986 = vpop.permute.xlu0 %1985
        %1988 = vrot.lane.b32.xlu0 %v1372, 94
        %v1989 = vpop.permute.xlu0 %1988
        %v1991 = vsel %vm506, %v1983, %v1986
        %v1992 = vsel %vm508, %v1991, %v1989
        %v1994 = vrot.slane %v1992, 4
        %v1996 = vsel %vm255, %v1981, %v1994
        %v1998 = vsel %vm526, %v1996, 0
        %2000 = vmatprep.subr.mxu0 0.0
        %2001 = vmatpush1.msra.mxu0 0.0
        %2002 = vmatprep.subr.mxu0 0.0
        %2003 = vmatpush1.msra.mxu0 0.0
        %2004 = vmatprep.subr.mxu0 0.0
        %2005 = vmatpush1.msra.mxu0 0.0
        %2006 = vmatprep.subr.mxu0 0.0
        %2007 = vmatpush1.msra.mxu0 0.0
        %2008 = vmatprep.subr.mxu0 0.0
        %2009 = vmatpush1.msra.mxu0 0.0
        %2010 = vmatprep.subr.mxu0 0.0
        %2011 = vmatpush1.msra.mxu0 0.0
        %2012 = vmatprep.subr.mxu0 0.0
        %2013 = vmatpush1.msra.mxu0 0.0
        %2014 = vmatprep.subr.mxu0 0.0
        %2015 = vmatpush1.msra.mxu0 0.0
        %2016 = vmatprep.subr.mxu0 0.0
        %2017 = vmatpush1.msra.mxu0 0.0
        %2018 = vmatprep.subr.mxu0 0.0
        %2019 = vmatpush1.msra.mxu0 %v532
        %2020 = vmatprep.subr.mxu0 0.0
        %2021 = vmatpush1.msra.mxu0 %v463
        %2022 = vmatprep.subr.mxu0 0.0
        %2023 = vmatpush1.msra.mxu0 %v462
        %2024 = vmatprep.subr.mxu0 0.0
        %2025 = vmatpush1.msra.mxu0 %v461
        %2026 = vmatprep.subr.mxu0 0.0
        %2027 = vmatpush1.msra.mxu0 %v460
        %2028 = vmatprep.subr.mxu0 0.0
        %2029 = vmatpush1.msra.mxu0 %v459
        %2030 = vmatprep.subr.mxu0 0.0
        %2031 = vmatpush1.msra.mxu0 %v458
        %2032 = vmatprep.subr.mxu0 0.0
        %2033 = vmatpush2.msra.mxu0 0.0
        %2034 = vmatprep.subr.mxu0 0.0
        %2035 = vmatpush2.msra.mxu0 0.0
        %2036 = vmatprep.subr.mxu0 0.0
        %2037 = vmatpush2.msra.mxu0 0.0
        %2038 = vmatprep.subr.mxu0 0.0
        %2039 = vmatpush2.msra.mxu0 0.0
        %2040 = vmatprep.subr.mxu0 0.0
        %2041 = vmatpush2.msra.mxu0 0.0
        %2042 = vmatprep.subr.mxu0 0.0
        %2043 = vmatpush2.msra.mxu0 0.0
        %2044 = vmatprep.subr.mxu0 0.0
        %2045 = vmatpush2.msra.mxu0 0.0
        %2046 = vmatprep.subr.mxu0 0.0
        %2047 = vmatpush2.msra.mxu0 0.0
        %2048 = vmatprep.subr.mxu0 0.0
        %2049 = vmatpush2.msra.mxu0 0.0
        %2050 = vmatprep.subr.mxu0 0.0
        %2051 = vmatpush2.msra.mxu0 0.0
        %2052 = vmatprep.subr.mxu0 0.0
        %2053 = vmatpush2.msra.mxu0 0.0
        %2054 = vmatprep.subr.mxu0 0.0
        %2055 = vmatpush2.msra.mxu0 0.0
        %2056 = vmatprep.subr.mxu0 0.0
        %2057 = vmatpush2.msra.mxu0 0.0
        %2058 = vmatprep.subr.mxu0 0.0
        %2059 = vmatpush2.msra.mxu0 0.0
        %2060 = vmatprep.subr.mxu0 0.0
        %2061 = vmatpush2.msra.mxu0 0.0
        %2062 = vmatprep.subr.mxu0 0.0
        %2063 = vmatpush2.msra.mxu0 0.0
        %2064 = vmatprep.mubr.f32.mxu0 0.0
        %2065 = vmatmul.mubr.f32.gmra.mxu0 %v1998
        %v2066 = vpop.f32.mrf.mxu0
        %v2067 = vadd.f32 0.0, %v2066
        %v2068 = vpop.f32.mrf.mxu0
        %2069 = vdwg.mxu0
        %v2071 = vrot.slane %v2067, 4
        %2072 = vrot.lane.b32.xlu0 %v2071, 32
        %v2073 = vpop.permute.xlu0 %2072
        %v2075 = vsel %vm609, %v2067, %v2073
        %v2076 = vadd.f32 %v2075, %v469
        %v2079 = vunpack.c.l.s4 1966171168
        %v2080 = vunpack.c.0.s8 %v2079
        %v2081 = vlaneseq
        %v2082 = vshrl.u32 %v2081, 7
        %v2083 = vsub.s32 %v2080, %v2082
        %v2084 = vrot.slane %v2076, %v2083
        %v2085 = vcombine.high %v2084, %v2084
        %v2087 = vunpack.c.l.s4 1966171168
        %v2088 = vunpack.c.0.s8 %v2087
        %v2089 = vlaneseq
        %v2090 = vshrl.u32 %v2089, 7
        %v2091 = vsub.s32 %v2088, %v2090
        %v2092 = vrot.slane %v2084, %v2091
        %v2094 = vunpack.c.l.s4 1966171168
        %v2095 = vunpack.c.0.s8 %v2094
        %v2096 = vlaneseq
        %v2097 = vshrl.u32 %v2096, 7
        %v2098 = vsub.s32 %v2095, %v2097
        %v2099 = vrot.slane %v2085, %v2098
        %v2100 = vcombine.high %v2092, %v2092
        %v2101 = vcombine.high %v2099, %v2099
        %2106 = vst.msk [vmem:[%s214 + $0xa] sm:$0x1] %vm641, %v2092
        %2107 = vst.msk [vmem:[%s214 + $0x1a] sm:$0x1] %vm641, %v2099
        %2108 = vst.msk [vmem:[%s214 + $0x2a] sm:$0x1] %vm641, %v2100
        %2109 = vst.msk [vmem:[%s214 + $0x3a] sm:$0x1] %vm641, %v2101
        %2110 = vrot.lane.b32.xlu0 %v1536, 58
        %v2111 = vpop.permute.xlu0 %2110
        %2113 = vrot.lane.b32.xlu0 %v1548, 76
        %v2114 = vpop.permute.xlu0 %2113
        %2116 = vrot.lane.b32.xlu0 %v1538, 94
        %v2117 = vpop.permute.xlu0 %2116
        %v2119 = vsel %vm506, %v2111, %v2114
        %v2120 = vsel %vm508, %v2119, %v2117
        %2121 = vrot.lane.b32.xlu0 %v1370, 40
        %v2122 = vpop.permute.xlu0 %2121
        %2124 = vrot.lane.b32.xlu0 %v1397, 58
        %v2125 = vpop.permute.xlu0 %2124
        %2127 = vrot.lane.b32.xlu0 %v1372, 76
        %v2128 = vpop.permute.xlu0 %2127
        %v2130 = vsel %vm506, %v2122, %v2125
        %v2131 = vsel %vm508, %v2130, %v2128
        %v2133 = vrot.slane %v2131, 4
        %v2135 = vsel %vm255, %v2120, %v2133
        %v2137 = vsel %vm526, %v2135, 0
        %2139 = vmatprep.subr.mxu0 0.0
        %2140 = vmatpush1.msra.mxu0 0.0
        %2141 = vmatprep.subr.mxu0 0.0
        %2142 = vmatpush1.msra.mxu0 0.0
        %2143 = vmatprep.subr.mxu0 0.0
        %2144 = vmatpush1.msra.mxu0 0.0
        %2145 = vmatprep.subr.mxu0 0.0
        %2146 = vmatpush1.msra.mxu0 0.0
        %2147 = vmatprep.subr.mxu0 0.0
        %2148 = vmatpush1.msra.mxu0 0.0
        %2149 = vmatprep.subr.mxu0 0.0
        %2150 = vmatpush1.msra.mxu0 0.0
        %2151 = vmatprep.subr.mxu0 0.0
        %2152 = vmatpush1.msra.mxu0 0.0
        %2153 = vmatprep.subr.mxu0 0.0
        %2154 = vmatpush1.msra.mxu0 0.0
        %2155 = vmatprep.subr.mxu0 0.0
        %2156 = vmatpush1.msra.mxu0 0.0
        %2157 = vmatprep.subr.mxu0 0.0
        %2158 = vmatpush1.msra.mxu0 %v532
        %2159 = vmatprep.subr.mxu0 0.0
        %2160 = vmatpush1.msra.mxu0 %v463
        %2161 = vmatprep.subr.mxu0 0.0
        %2162 = vmatpush1.msra.mxu0 %v462
        %2163 = vmatprep.subr.mxu0 0.0
        %2164 = vmatpush1.msra.mxu0 %v461
        %2165 = vmatprep.subr.mxu0 0.0
        %2166 = vmatpush1.msra.mxu0 %v460
        %2167 = vmatprep.subr.mxu0 0.0
        %2168 = vmatpush1.msra.mxu0 %v459
        %2169 = vmatprep.subr.mxu0 0.0
        %2170 = vmatpush1.msra.mxu0 %v458
        %2171 = vmatprep.subr.mxu0 0.0
        %2172 = vmatpush2.msra.mxu0 0.0
        %2173 = vmatprep.subr.mxu0 0.0
        %2174 = vmatpush2.msra.mxu0 0.0
        %2175 = vmatprep.subr.mxu0 0.0
        %2176 = vmatpush2.msra.mxu0 0.0
        %2177 = vmatprep.subr.mxu0 0.0
        %2178 = vmatpush2.msra.mxu0 0.0
        %2179 = vmatprep.subr.mxu0 0.0
        %2180 = vmatpush2.msra.mxu0 0.0
        %2181 = vmatprep.subr.mxu0 0.0
        %2182 = vmatpush2.msra.mxu0 0.0
        %2183 = vmatprep.subr.mxu0 0.0
        %2184 = vmatpush2.msra.mxu0 0.0
        %2185 = vmatprep.subr.mxu0 0.0
        %2186 = vmatpush2.msra.mxu0 0.0
        %2187 = vmatprep.subr.mxu0 0.0
        %2188 = vmatpush2.msra.mxu0 0.0
        %2189 = vmatprep.subr.mxu0 0.0
        %2190 = vmatpush2.msra.mxu0 0.0
        %2191 = vmatprep.subr.mxu0 0.0
        %2192 = vmatpush2.msra.mxu0 0.0
        %2193 = vmatprep.subr.mxu0 0.0
        %2194 = vmatpush2.msra.mxu0 0.0
        %2195 = vmatprep.subr.mxu0 0.0
        %2196 = vmatpush2.msra.mxu0 0.0
        %2197 = vmatprep.subr.mxu0 0.0
        %2198 = vmatpush2.msra.mxu0 0.0
        %2199 = vmatprep.subr.mxu0 0.0
        %2200 = vmatpush2.msra.mxu0 0.0
        %2201 = vmatprep.subr.mxu0 0.0
        %2202 = vmatpush2.msra.mxu0 0.0
        %2203 = vmatprep.mubr.f32.mxu0 0.0
        %2204 = vmatmul.mubr.f32.gmra.mxu0 %v2137
        %v2205 = vpop.f32.mrf.mxu0
        %v2206 = vadd.f32 0.0, %v2205
        %v2207 = vpop.f32.mrf.mxu0
        %2208 = vdwg.mxu0
        %v2210 = vrot.slane %v2206, 4
        %2211 = vrot.lane.b32.xlu0 %v2210, 32
        %v2212 = vpop.permute.xlu0 %2211
        %v2214 = vsel %vm609, %v2206, %v2212
        %v2215 = vadd.f32 %v2214, %v469
        %v2218 = vunpack.c.l.s4 1966171168
        %v2219 = vunpack.c.0.s8 %v2218
        %v2220 = vlaneseq
        %v2221 = vshrl.u32 %v2220, 7
        %v2222 = vsub.s32 %v2219, %v2221
        %v2223 = vrot.slane %v2215, %v2222
        %v2224 = vcombine.high %v2223, %v2223
        %v2226 = vunpack.c.l.s4 1966171168
        %v2227 = vunpack.c.0.s8 %v2226
        %v2228 = vlaneseq
        %v2229 = vshrl.u32 %v2228, 7
        %v2230 = vsub.s32 %v2227, %v2229
        %v2231 = vrot.slane %v2223, %v2230
        %v2233 = vunpack.c.l.s4 1966171168
        %v2234 = vunpack.c.0.s8 %v2233
        %v2235 = vlaneseq
        %v2236 = vshrl.u32 %v2235, 7
        %v2237 = vsub.s32 %v2234, %v2236
        %v2238 = vrot.slane %v2224, %v2237
        %v2239 = vcombine.high %v2231, %v2231
        %v2240 = vcombine.high %v2238, %v2238
        %2245 = vst.msk [vmem:[%s214 + $0xb] sm:$0x1] %vm641, %v2231
        %2246 = vst.msk [vmem:[%s214 + $0x1b] sm:$0x1] %vm641, %v2238
        %2247 = vst.msk [vmem:[%s214 + $0x2b] sm:$0x1] %vm641, %v2239
        %2248 = vst.msk [vmem:[%s214 + $0x3b] sm:$0x1] %vm641, %v2240
        %v2251 = vrot.slane %v450, 4
        %v2252 = vrot.slane %v455, 4
        %v2253 = vsel %vm255, %v2251, %v2252
        %2254 = vrot.lane.b32.xlu0 %v2253, 110
        %v2255 = vpop.permute.xlu0 %2254
        %2256 = vrot.lane.b32.xlu0 %v2252, 110
        %v2257 = vpop.permute.xlu0 %2256
        %v2258 = vsel %vm1203, %v1200, %v2255
        %v2259 = vsel %vm1203, %v1202, %v2257
        %v2262 = vadd.f32 %v349, %v2258
        %v2263 = vadd.f32 %v355, %v2259
        %2264 = vrot.lane.b32.xlu0 %v1536, 40
        %v2265 = vpop.permute.xlu0 %2264
        %2267 = vrot.lane.b32.xlu0 %v1548, 58
        %v2268 = vpop.permute.xlu0 %2267
        %2270 = vrot.lane.b32.xlu0 %v1538, 76
        %v2271 = vpop.permute.xlu0 %2270
        %v2273 = vsel %vm506, %v2265, %v2268
        %v2274 = vsel %vm508, %v2273, %v2271
        %2276 = vrot.lane.b32.xlu0 %v2262, 22
        %v2277 = vpop.permute.xlu0 %2276
        %v2279 = vrot.slane %v2262, 4
        %2280 = vrot.lane.b32.xlu0 %v2279, 40
        %v2281 = vpop.permute.xlu0 %2280
        %2284 = vrot.lane.b32.xlu0 %v2263, 58
        %v2285 = vpop.permute.xlu0 %2284
        %v2287 = vsel %vm506, %v2277, %v2281
        %v2288 = vsel %vm508, %v2287, %v2285
        %v2290 = vrot.slane %v2288, 4
        %v2292 = vsel %vm255, %v2274, %v2290
        %v2294 = vsel %vm526, %v2292, 0
        %2296 = vmatprep.subr.mxu0 0.0
        %2297 = vmatpush1.msra.mxu0 0.0
        %2298 = vmatprep.subr.mxu0 0.0
        %2299 = vmatpush1.msra.mxu0 0.0
        %2300 = vmatprep.subr.mxu0 0.0
        %2301 = vmatpush1.msra.mxu0 0.0
        %2302 = vmatprep.subr.mxu0 0.0
        %2303 = vmatpush1.msra.mxu0 0.0
        %2304 = vmatprep.subr.mxu0 0.0
        %2305 = vmatpush1.msra.mxu0 0.0
        %2306 = vmatprep.subr.mxu0 0.0
        %2307 = vmatpush1.msra.mxu0 0.0
        %2308 = vmatprep.subr.mxu0 0.0
        %2309 = vmatpush1.msra.mxu0 0.0
        %2310 = vmatprep.subr.mxu0 0.0
        %2311 = vmatpush1.msra.mxu0 0.0
        %2312 = vmatprep.subr.mxu0 0.0
        %2313 = vmatpush1.msra.mxu0 0.0
        %2314 = vmatprep.subr.mxu0 0.0
        %2315 = vmatpush1.msra.mxu0 %v532
        %2316 = vmatprep.subr.mxu0 0.0
        %2317 = vmatpush1.msra.mxu0 %v463
        %2318 = vmatprep.subr.mxu0 0.0
        %2319 = vmatpush1.msra.mxu0 %v462
        %2320 = vmatprep.subr.mxu0 0.0
        %2321 = vmatpush1.msra.mxu0 %v461
        %2322 = vmatprep.subr.mxu0 0.0
        %2323 = vmatpush1.msra.mxu0 %v460
        %2324 = vmatprep.subr.mxu0 0.0
        %2325 = vmatpush1.msra.mxu0 %v459
        %2326 = vmatprep.subr.mxu0 0.0
        %2327 = vmatpush1.msra.mxu0 %v458
        %2328 = vmatprep.subr.mxu0 0.0
        %2329 = vmatpush2.msra.mxu0 0.0
        %2330 = vmatprep.subr.mxu0 0.0
        %2331 = vmatpush2.msra.mxu0 0.0
        %2332 = vmatprep.subr.mxu0 0.0
        %2333 = vmatpush2.msra.mxu0 0.0
        %2334 = vmatprep.subr.mxu0 0.0
        %2335 = vmatpush2.msra.mxu0 0.0
        %2336 = vmatprep.subr.mxu0 0.0
        %2337 = vmatpush2.msra.mxu0 0.0
        %2338 = vmatprep.subr.mxu0 0.0
        %2339 = vmatpush2.msra.mxu0 0.0
        %2340 = vmatprep.subr.mxu0 0.0
        %2341 = vmatpush2.msra.mxu0 0.0
        %2342 = vmatprep.subr.mxu0 0.0
        %2343 = vmatpush2.msra.mxu0 0.0
        %2344 = vmatprep.subr.mxu0 0.0
        %2345 = vmatpush2.msra.mxu0 0.0
        %2346 = vmatprep.subr.mxu0 0.0
        %2347 = vmatpush2.msra.mxu0 0.0
        %2348 = vmatprep.subr.mxu0 0.0
        %2349 = vmatpush2.msra.mxu0 0.0
        %2350 = vmatprep.subr.mxu0 0.0
        %2351 = vmatpush2.msra.mxu0 0.0
        %2352 = vmatprep.subr.mxu0 0.0
        %2353 = vmatpush2.msra.mxu0 0.0
        %2354 = vmatprep.subr.mxu0 0.0
        %2355 = vmatpush2.msra.mxu0 0.0
        %2356 = vmatprep.subr.mxu0 0.0
        %2357 = vmatpush2.msra.mxu0 0.0
        %2358 = vmatprep.subr.mxu0 0.0
        %2359 = vmatpush2.msra.mxu0 0.0
        %2360 = vmatprep.mubr.f32.mxu0 0.0
        %2361 = vmatmul.mubr.f32.gmra.mxu0 %v2294
        %v2362 = vpop.f32.mrf.mxu0
        %v2363 = vadd.f32 0.0, %v2362
        %v2364 = vpop.f32.mrf.mxu0
        %2365 = vdwg.mxu0
        %v2367 = vrot.slane %v2363, 4
        %2368 = vrot.lane.b32.xlu0 %v2367, 32
        %v2369 = vpop.permute.xlu0 %2368
        %v2371 = vsel %vm609, %v2363, %v2369
        %v2372 = vadd.f32 %v2371, %v469
        %v2375 = vunpack.c.l.s4 1966171168
        %v2376 = vunpack.c.0.s8 %v2375
        %v2377 = vlaneseq
        %v2378 = vshrl.u32 %v2377, 7
        %v2379 = vsub.s32 %v2376, %v2378
        %v2380 = vrot.slane %v2372, %v2379
        %v2381 = vcombine.high %v2380, %v2380
        %v2383 = vunpack.c.l.s4 1966171168
        %v2384 = vunpack.c.0.s8 %v2383
        %v2385 = vlaneseq
        %v2386 = vshrl.u32 %v2385, 7
        %v2387 = vsub.s32 %v2384, %v2386
        %v2388 = vrot.slane %v2380, %v2387
        %v2390 = vunpack.c.l.s4 1966171168
        %v2391 = vunpack.c.0.s8 %v2390
        %v2392 = vlaneseq
        %v2393 = vshrl.u32 %v2392, 7
        %v2394 = vsub.s32 %v2391, %v2393
        %v2395 = vrot.slane %v2381, %v2394
        %v2396 = vcombine.high %v2388, %v2388
        %v2397 = vcombine.high %v2395, %v2395
        %2402 = vst.msk [vmem:[%s214 + $0xc] sm:$0x1] %vm641, %v2388
        %2403 = vst.msk [vmem:[%s214 + $0x1c] sm:$0x1] %vm641, %v2395
        %2404 = vst.msk [vmem:[%s214 + $0x2c] sm:$0x1] %vm641, %v2396
        %2405 = vst.msk [vmem:[%s214 + $0x3c] sm:$0x1] %vm641, %v2397
        %v2408 = vrot.slane %v435, 4
        %v2409 = vrot.slane %v440, 4
        %v2410 = vsel %vm255, %v2408, %v2409
        %2411 = vrot.lane.b32.xlu0 %v2410, 110
        %v2412 = vpop.permute.xlu0 %2411
        %2413 = vrot.lane.b32.xlu0 %v2409, 110
        %v2414 = vpop.permute.xlu0 %2413
        %v2415 = vsel %vm1203, %v1358, %v2412
        %v2416 = vsel %vm1203, %v1360, %v2414
        %v2419 = vadd.f32 %v331, %v2415
        %v2420 = vadd.f32 %v337, %v2416
        %v2423 = vadd.f32 %v349, %v2255
        %v2424 = vadd.f32 %v445, %v2255
        %v2425 = vadd.f32 %v355, %v2257
        %v2426 = vadd.f32 %v450, %v2257
        %2428 = vrot.lane.b32.xlu0 %v2419, 22
        %v2429 = vpop.permute.xlu0 %2428
        %v2431 = vrot.slane %v2419, 4
        %2432 = vrot.lane.b32.xlu0 %v2431, 40
        %v2433 = vpop.permute.xlu0 %2432
        %2436 = vrot.lane.b32.xlu0 %v2420, 58
        %v2437 = vpop.permute.xlu0 %2436
        %v2439 = vsel %vm506, %v2429, %v2433
        %v2440 = vsel %vm508, %v2439, %v2437
        %2443 = vrot.lane.b32.xlu0 %v2423, 4
        %v2444 = vpop.permute.xlu0 %2443
        %2445 = vrot.lane.b32.xlu0 %v2424, 4
        %v2446 = vpop.permute.xlu0 %2445
        %v2447 = vsel %vm236, %v2444, %v2446
        %v2449 = vrot.slane %v2423, 4
        %v2450 = vrot.slane %v2424, 4
        %2451 = vrot.lane.b32.xlu0 %v2449, 22
        %v2452 = vpop.permute.xlu0 %2451
        %2453 = vrot.lane.b32.xlu0 %v2450, 22
        %v2454 = vpop.permute.xlu0 %2453
        %vm2455 = vcmask 179200
        %v2456 = vsel %vm2455, %v2452, %v2454
        %2460 = vrot.lane.b32.xlu0 %v2425, 40
        %v2461 = vpop.permute.xlu0 %2460
        %2462 = vrot.lane.b32.xlu0 %v2426, 40
        %v2463 = vpop.permute.xlu0 %2462
        %vm2464 = vcmask 326656
        %v2465 = vsel %vm2464, %v2461, %v2463
        %v2467 = vsel %vm506, %v2447, %v2456
        %v2468 = vsel %vm508, %v2467, %v2465
        %v2470 = vrot.slane %v2468, 4
        %v2472 = vsel %vm255, %v2440, %v2470
        %v2474 = vsel %vm526, %v2472, 0
        %2476 = vmatprep.subr.mxu0 0.0
        %2477 = vmatpush1.msra.mxu0 0.0
        %2478 = vmatprep.subr.mxu0 0.0
        %2479 = vmatpush1.msra.mxu0 0.0
        %2480 = vmatprep.subr.mxu0 0.0
        %2481 = vmatpush1.msra.mxu0 0.0
        %2482 = vmatprep.subr.mxu0 0.0
        %2483 = vmatpush1.msra.mxu0 0.0
        %2484 = vmatprep.subr.mxu0 0.0
        %2485 = vmatpush1.msra.mxu0 0.0
        %2486 = vmatprep.subr.mxu0 0.0
        %2487 = vmatpush1.msra.mxu0 0.0
        %2488 = vmatprep.subr.mxu0 0.0
        %2489 = vmatpush1.msra.mxu0 0.0
        %2490 = vmatprep.subr.mxu0 0.0
        %2491 = vmatpush1.msra.mxu0 0.0
        %2492 = vmatprep.subr.mxu0 0.0
        %2493 = vmatpush1.msra.mxu0 0.0
        %2494 = vmatprep.subr.mxu0 0.0
        %2495 = vmatpush1.msra.mxu0 %v532
        %2496 = vmatprep.subr.mxu0 0.0
        %2497 = vmatpush1.msra.mxu0 %v463
        %2498 = vmatprep.subr.mxu0 0.0
        %2499 = vmatpush1.msra.mxu0 %v462
        %2500 = vmatprep.subr.mxu0 0.0
        %2501 = vmatpush1.msra.mxu0 %v461
        %2502 = vmatprep.subr.mxu0 0.0
        %2503 = vmatpush1.msra.mxu0 %v460
        %2504 = vmatprep.subr.mxu0 0.0
        %2505 = vmatpush1.msra.mxu0 %v459
        %2506 = vmatprep.subr.mxu0 0.0
        %2507 = vmatpush1.msra.mxu0 %v458
        %2508 = vmatprep.subr.mxu0 0.0
        %2509 = vmatpush2.msra.mxu0 0.0
        %2510 = vmatprep.subr.mxu0 0.0
        %2511 = vmatpush2.msra.mxu0 0.0
        %2512 = vmatprep.subr.mxu0 0.0
        %2513 = vmatpush2.msra.mxu0 0.0
        %2514 = vmatprep.subr.mxu0 0.0
        %2515 = vmatpush2.msra.mxu0 0.0
        %2516 = vmatprep.subr.mxu0 0.0
        %2517 = vmatpush2.msra.mxu0 0.0
        %2518 = vmatprep.subr.mxu0 0.0
        %2519 = vmatpush2.msra.mxu0 0.0
        %2520 = vmatprep.subr.mxu0 0.0
        %2521 = vmatpush2.msra.mxu0 0.0
        %2522 = vmatprep.subr.mxu0 0.0
        %2523 = vmatpush2.msra.mxu0 0.0
        %2524 = vmatprep.subr.mxu0 0.0
        %2525 = vmatpush2.msra.mxu0 0.0
        %2526 = vmatprep.subr.mxu0 0.0
        %2527 = vmatpush2.msra.mxu0 0.0
        %2528 = vmatprep.subr.mxu0 0.0
        %2529 = vmatpush2.msra.mxu0 0.0
        %2530 = vmatprep.subr.mxu0 0.0
        %2531 = vmatpush2.msra.mxu0 0.0
        %2532 = vmatprep.subr.mxu0 0.0
        %2533 = vmatpush2.msra.mxu0 0.0
        %2534 = vmatprep.subr.mxu0 0.0
        %2535 = vmatpush2.msra.mxu0 0.0
        %2536 = vmatprep.subr.mxu0 0.0
        %2537 = vmatpush2.msra.mxu0 0.0
        %2538 = vmatprep.subr.mxu0 0.0
        %2539 = vmatpush2.msra.mxu0 0.0
        %2540 = vmatprep.mubr.f32.mxu0 0.0
        %2541 = vmatmul.mubr.f32.gmra.mxu0 %v2474
        %v2542 = vpop.f32.mrf.mxu0
        %v2543 = vadd.f32 0.0, %v2542
        %v2544 = vpop.f32.mrf.mxu0
        %2545 = vdwg.mxu0
        %v2547 = vrot.slane %v2543, 4
        %2548 = vrot.lane.b32.xlu0 %v2547, 32
        %v2549 = vpop.permute.xlu0 %2548
        %v2551 = vsel %vm609, %v2543, %v2549
        %v2552 = vadd.f32 %v2551, %v469
        %v2555 = vunpack.c.l.s4 1966171168
        %v2556 = vunpack.c.0.s8 %v2555
        %v2557 = vlaneseq
        %v2558 = vshrl.u32 %v2557, 7
        %v2559 = vsub.s32 %v2556, %v2558
        %v2560 = vrot.slane %v2552, %v2559
        %v2561 = vcombine.high %v2560, %v2560
        %v2563 = vunpack.c.l.s4 1966171168
        %v2564 = vunpack.c.0.s8 %v2563
        %v2565 = vlaneseq
        %v2566 = vshrl.u32 %v2565, 7
        %v2567 = vsub.s32 %v2564, %v2566
        %v2568 = vrot.slane %v2560, %v2567
        %v2570 = vunpack.c.l.s4 1966171168
        %v2571 = vunpack.c.0.s8 %v2570
        %v2572 = vlaneseq
        %v2573 = vshrl.u32 %v2572, 7
        %v2574 = vsub.s32 %v2571, %v2573
        %v2575 = vrot.slane %v2561, %v2574
        %v2576 = vcombine.high %v2568, %v2568
        %v2577 = vcombine.high %v2575, %v2575
        %2582 = vst.msk [vmem:[%s214 + $0xd] sm:$0x1] %vm641, %v2568
        %2583 = vst.msk [vmem:[%s214 + $0x1d] sm:$0x1] %vm641, %v2575
        %2584 = vst.msk [vmem:[%s214 + $0x2d] sm:$0x1] %vm641, %v2576
        %2585 = vst.msk [vmem:[%s214 + $0x3d] sm:$0x1] %vm641, %v2577
        %v2588 = vadd.f32 %v331, %v2412
        %v2589 = vadd.f32 %v430, %v2412
        %v2590 = vadd.f32 %v337, %v2414
        %v2591 = vadd.f32 %v435, %v2414
        %2594 = vrot.lane.b32.xlu0 %v2588, 4
        %v2595 = vpop.permute.xlu0 %2594
        %2596 = vrot.lane.b32.xlu0 %v2589, 4
        %v2597 = vpop.permute.xlu0 %2596
        %v2598 = vsel %vm236, %v2595, %v2597
        %v2600 = vrot.slane %v2588, 4
        %v2601 = vrot.slane %v2589, 4
        %2602 = vrot.lane.b32.xlu0 %v2600, 22
        %v2603 = vpop.permute.xlu0 %2602
        %2604 = vrot.lane.b32.xlu0 %v2601, 22
        %v2605 = vpop.permute.xlu0 %2604
        %v2606 = vsel %vm2455, %v2603, %v2605
        %2610 = vrot.lane.b32.xlu0 %v2590, 40
        %v2611 = vpop.permute.xlu0 %2610
        %2612 = vrot.lane.b32.xlu0 %v2591, 40
        %v2613 = vpop.permute.xlu0 %2612
        %v2614 = vsel %vm2464, %v2611, %v2613
        %v2616 = vsel %vm506, %v2598, %v2606
        %v2617 = vsel %vm508, %v2616, %v2614
        %2618 = vrot.lane.b32.xlu0 %v2424, 114
        %v2619 = vpop.permute.xlu0 %2618
        %2621 = vrot.lane.b32.xlu0 %v2450, 4
        %v2622 = vpop.permute.xlu0 %2621
        %2624 = vrot.lane.b32.xlu0 %v2426, 22
        %v2625 = vpop.permute.xlu0 %2624
        %v2627 = vsel %vm506, %v2619, %v2622
        %v2628 = vsel %vm508, %v2627, %v2625
        %v2630 = vrot.slane %v2628, 4
        %v2632 = vsel %vm255, %v2617, %v2630
        %v2634 = vsel %vm526, %v2632, 0
        %2636 = vmatprep.subr.mxu0 0.0
        %2637 = vmatpush1.msra.mxu0 0.0
        %2638 = vmatprep.subr.mxu0 0.0
        %2639 = vmatpush1.msra.mxu0 0.0
        %2640 = vmatprep.subr.mxu0 0.0
        %2641 = vmatpush1.msra.mxu0 0.0
        %2642 = vmatprep.subr.mxu0 0.0
        %2643 = vmatpush1.msra.mxu0 0.0
        %2644 = vmatprep.subr.mxu0 0.0
        %2645 = vmatpush1.msra.mxu0 0.0
        %2646 = vmatprep.subr.mxu0 0.0
        %2647 = vmatpush1.msra.mxu0 0.0
        %2648 = vmatprep.subr.mxu0 0.0
        %2649 = vmatpush1.msra.mxu0 0.0
        %2650 = vmatprep.subr.mxu0 0.0
        %2651 = vmatpush1.msra.mxu0 0.0
        %2652 = vmatprep.subr.mxu0 0.0
        %2653 = vmatpush1.msra.mxu0 0.0
        %2654 = vmatprep.subr.mxu0 0.0
        %2655 = vmatpush1.msra.mxu0 %v532
        %2656 = vmatprep.subr.mxu0 0.0
        %2657 = vmatpush1.msra.mxu0 %v463
        %2658 = vmatprep.subr.mxu0 0.0
        %2659 = vmatpush1.msra.mxu0 %v462
        %2660 = vmatprep.subr.mxu0 0.0
        %2661 = vmatpush1.msra.mxu0 %v461
        %2662 = vmatprep.subr.mxu0 0.0
        %2663 = vmatpush1.msra.mxu0 %v460
        %2664 = vmatprep.subr.mxu0 0.0
        %2665 = vmatpush1.msra.mxu0 %v459
        %2666 = vmatprep.subr.mxu0 0.0
        %2667 = vmatpush1.msra.mxu0 %v458
        %2668 = vmatprep.subr.mxu0 0.0
        %2669 = vmatpush2.msra.mxu0 0.0
        %2670 = vmatprep.subr.mxu0 0.0
        %2671 = vmatpush2.msra.mxu0 0.0
        %2672 = vmatprep.subr.mxu0 0.0
        %2673 = vmatpush2.msra.mxu0 0.0
        %2674 = vmatprep.subr.mxu0 0.0
        %2675 = vmatpush2.msra.mxu0 0.0
        %2676 = vmatprep.subr.mxu0 0.0
        %2677 = vmatpush2.msra.mxu0 0.0
        %2678 = vmatprep.subr.mxu0 0.0
        %2679 = vmatpush2.msra.mxu0 0.0
        %2680 = vmatprep.subr.mxu0 0.0
        %2681 = vmatpush2.msra.mxu0 0.0
        %2682 = vmatprep.subr.mxu0 0.0
        %2683 = vmatpush2.msra.mxu0 0.0
        %2684 = vmatprep.subr.mxu0 0.0
        %2685 = vmatpush2.msra.mxu0 0.0
        %2686 = vmatprep.subr.mxu0 0.0
        %2687 = vmatpush2.msra.mxu0 0.0
        %2688 = vmatprep.subr.mxu0 0.0
        %2689 = vmatpush2.msra.mxu0 0.0
        %2690 = vmatprep.subr.mxu0 0.0
        %2691 = vmatpush2.msra.mxu0 0.0
        %2692 = vmatprep.subr.mxu0 0.0
        %2693 = vmatpush2.msra.mxu0 0.0
        %2694 = vmatprep.subr.mxu0 0.0
        %2695 = vmatpush2.msra.mxu0 0.0
        %2696 = vmatprep.subr.mxu0 0.0
        %2697 = vmatpush2.msra.mxu0 0.0
        %2698 = vmatprep.subr.mxu0 0.0
        %2699 = vmatpush2.msra.mxu0 0.0
        %2700 = vmatprep.mubr.f32.mxu0 0.0
        %2701 = vmatmul.mubr.f32.gmra.mxu0 %v2634
        %v2702 = vpop.f32.mrf.mxu0
        %v2703 = vadd.f32 0.0, %v2702
        %v2704 = vpop.f32.mrf.mxu0
        %2705 = vdwg.mxu0
        %v2707 = vrot.slane %v2703, 4
        %2708 = vrot.lane.b32.xlu0 %v2707, 32
        %v2709 = vpop.permute.xlu0 %2708
        %v2711 = vsel %vm609, %v2703, %v2709
        %v2712 = vadd.f32 %v2711, %v469
        %v2715 = vunpack.c.l.s4 1966171168
        %v2716 = vunpack.c.0.s8 %v2715
        %v2717 = vlaneseq
        %v2718 = vshrl.u32 %v2717, 7
        %v2719 = vsub.s32 %v2716, %v2718
        %v2720 = vrot.slane %v2712, %v2719
        %v2721 = vcombine.high %v2720, %v2720
        %v2723 = vunpack.c.l.s4 1966171168
        %v2724 = vunpack.c.0.s8 %v2723
        %v2725 = vlaneseq
        %v2726 = vshrl.u32 %v2725, 7
        %v2727 = vsub.s32 %v2724, %v2726
        %v2728 = vrot.slane %v2720, %v2727
        %v2730 = vunpack.c.l.s4 1966171168
        %v2731 = vunpack.c.0.s8 %v2730
        %v2732 = vlaneseq
        %v2733 = vshrl.u32 %v2732, 7
        %v2734 = vsub.s32 %v2731, %v2733
        %v2735 = vrot.slane %v2721, %v2734
        %v2736 = vcombine.high %v2728, %v2728
        %v2737 = vcombine.high %v2735, %v2735
        %2742 = vst.msk [vmem:[%s214 + $0xe] sm:$0x1] %vm641, %v2728
        %2743 = vst.msk [vmem:[%s214 + $0x1e] sm:$0x1] %vm641, %v2735
        %2744 = vst.msk [vmem:[%s214 + $0x2e] sm:$0x1] %vm641, %v2736
        %2745 = vst.msk [vmem:[%s214 + $0x3e] sm:$0x1] %vm641, %v2737
        %2746 = vrot.lane.b32.xlu0 %v2589, 114
        %v2747 = vpop.permute.xlu0 %2746
        %2749 = vrot.lane.b32.xlu0 %v2601, 4
        %v2750 = vpop.permute.xlu0 %2749
        %2752 = vrot.lane.b32.xlu0 %v2591, 22
        %v2753 = vpop.permute.xlu0 %2752
        %v2755 = vsel %vm506, %v2747, %v2750
        %v2756 = vsel %vm508, %v2755, %v2753
        %2757 = vrot.lane.b32.xlu0 %v2424, 96
        %v2758 = vpop.permute.xlu0 %2757
        %2760 = vrot.lane.b32.xlu0 %v2450, 114
        %v2761 = vpop.permute.xlu0 %2760
        %2763 = vrot.lane.b32.xlu0 %v2426, 4
        %v2764 = vpop.permute.xlu0 %2763
        %v2766 = vsel %vm506, %v2758, %v2761
        %v2767 = vsel %vm508, %v2766, %v2764
        %v2769 = vrot.slane %v2767, 4
        %v2771 = vsel %vm255, %v2756, %v2769
        %v2773 = vsel %vm526, %v2771, 0
        %2775 = vmatprep.subr.mxu0 0.0
        %2776 = vmatpush1.msra.mxu0 0.0
        %2777 = vmatprep.subr.mxu0 0.0
        %2778 = vmatpush1.msra.mxu0 0.0
        %2779 = vmatprep.subr.mxu0 0.0
        %2780 = vmatpush1.msra.mxu0 0.0
        %2781 = vmatprep.subr.mxu0 0.0
        %2782 = vmatpush1.msra.mxu0 0.0
        %2783 = vmatprep.subr.mxu0 0.0
        %2784 = vmatpush1.msra.mxu0 0.0
        %2785 = vmatprep.subr.mxu0 0.0
        %2786 = vmatpush1.msra.mxu0 0.0
        %2787 = vmatprep.subr.mxu0 0.0
        %2788 = vmatpush1.msra.mxu0 0.0
        %2789 = vmatprep.subr.mxu0 0.0
        %2790 = vmatpush1.msra.mxu0 0.0
        %2791 = vmatprep.subr.mxu0 0.0
        %2792 = vmatpush1.msra.mxu0 0.0
        %2793 = vmatprep.subr.mxu0 0.0
        %2794 = vmatpush1.msra.mxu0 %v532
        %2795 = vmatprep.subr.mxu0 0.0
        %2796 = vmatpush1.msra.mxu0 %v463
        %2797 = vmatprep.subr.mxu0 0.0
        %2798 = vmatpush1.msra.mxu0 %v462
        %2799 = vmatprep.subr.mxu0 0.0
        %2800 = vmatpush1.msra.mxu0 %v461
        %2801 = vmatprep.subr.mxu0 0.0
        %2802 = vmatpush1.msra.mxu0 %v460
        %2803 = vmatprep.subr.mxu0 0.0
        %2804 = vmatpush1.msra.mxu0 %v459
        %2805 = vmatprep.subr.mxu0 0.0
        %2806 = vmatpush1.msra.mxu0 %v458
        %2807 = vmatprep.subr.mxu0 0.0
        %2808 = vmatpush2.msra.mxu0 0.0
        %2809 = vmatprep.subr.mxu0 0.0
        %2810 = vmatpush2.msra.mxu0 0.0
        %2811 = vmatprep.subr.mxu0 0.0
        %2812 = vmatpush2.msra.mxu0 0.0
        %2813 = vmatprep.subr.mxu0 0.0
        %2814 = vmatpush2.msra.mxu0 0.0
        %2815 = vmatprep.subr.mxu0 0.0
        %2816 = vmatpush2.msra.mxu0 0.0
        %2817 = vmatprep.subr.mxu0 0.0
        %2818 = vmatpush2.msra.mxu0 0.0
        %2819 = vmatprep.subr.mxu0 0.0
        %2820 = vmatpush2.msra.mxu0 0.0
        %2821 = vmatprep.subr.mxu0 0.0
        %2822 = vmatpush2.msra.mxu0 0.0
        %2823 = vmatprep.subr.mxu0 0.0
        %2824 = vmatpush2.msra.mxu0 0.0
        %2825 = vmatprep.subr.mxu0 0.0
        %2826 = vmatpush2.msra.mxu0 0.0
        %2827 = vmatprep.subr.mxu0 0.0
        %2828 = vmatpush2.msra.mxu0 0.0
        %2829 = vmatprep.subr.mxu0 0.0
        %2830 = vmatpush2.msra.mxu0 0.0
        %2831 = vmatprep.subr.mxu0 0.0
        %2832 = vmatpush2.msra.mxu0 0.0
        %2833 = vmatprep.subr.mxu0 0.0
        %2834 = vmatpush2.msra.mxu0 0.0
        %2835 = vmatprep.subr.mxu0 0.0
        %2836 = vmatpush2.msra.mxu0 0.0
        %2837 = vmatprep.subr.mxu0 0.0
        %2838 = vmatpush2.msra.mxu0 0.0
        %2839 = vmatprep.mubr.f32.mxu0 0.0
        %2840 = vmatmul.mubr.f32.gmra.mxu0 %v2773
        %v2841 = vpop.f32.mrf.mxu0
        %v2842 = vadd.f32 0.0, %v2841
        %v2843 = vpop.f32.mrf.mxu0
        %2844 = vdwg.mxu0
        %v2846 = vrot.slane %v2842, 4
        %2847 = vrot.lane.b32.xlu0 %v2846, 32
        %v2848 = vpop.permute.xlu0 %2847
        %v2850 = vsel %vm609, %v2842, %v2848
        %v2851 = vadd.f32 %v2850, %v469
        %v2854 = vunpack.c.l.s4 1966171168
        %v2855 = vunpack.c.0.s8 %v2854
        %v2856 = vlaneseq
        %v2857 = vshrl.u32 %v2856, 7
        %v2858 = vsub.s32 %v2855, %v2857
        %v2859 = vrot.slane %v2851, %v2858
        %v2860 = vcombine.high %v2859, %v2859
        %v2862 = vunpack.c.l.s4 1966171168
        %v2863 = vunpack.c.0.s8 %v2862
        %v2864 = vlaneseq
        %v2865 = vshrl.u32 %v2864, 7
        %v2866 = vsub.s32 %v2863, %v2865
        %v2867 = vrot.slane %v2859, %v2866
        %v2869 = vunpack.c.l.s4 1966171168
        %v2870 = vunpack.c.0.s8 %v2869
        %v2871 = vlaneseq
        %v2872 = vshrl.u32 %v2871, 7
        %v2873 = vsub.s32 %v2870, %v2872
        %v2874 = vrot.slane %v2860, %v2873
        %v2875 = vcombine.high %v2867, %v2867
        %v2876 = vcombine.high %v2874, %v2874
        %2881 = vst.msk [vmem:[%s214 + $0xf] sm:$0x1] %vm641, %v2867
        %2882 = vst.msk [vmem:[%s214 + $0x1f] sm:$0x1] %vm641, %v2874
        %2883 = vst.msk [vmem:[%s214 + $0x2f] sm:$0x1] %vm641, %v2875
        %2884 = vst.msk [vmem:[%s214 + $0x3f] sm:$0x1] %vm641, %v2876
        %s2885 = sand.u32 %s131, 1
        %s2886 = scalar_lea.sflag [#allocation3], %s2885
        %s2887 = sand.u32 %s131, 1
        %s2888 = smul.addr %s2887, 64
        %s2889 = scalar_lea.vmem [#allocation2], %s2888
        // Predicated region
        $region37: #{tpu_custom_call.1} parent=35 // pred_check
          %p2890 = pneg %p141
        $region38: #{tpu_custom_call.1} parent=35 // pred_check_branch
          %2892 = sbr.rel (%p2890) target = $region40
        $region39: #{tpu_custom_call.1} parent=35 // pred_region
          %s2893 = smul.u32 2, %s23
          %s2895 = ssub.s32 1024, 1024
          %2896 = vsyncadd %s2886, %s2895
          %s2897 = smul.addr %s22, 8
          %s2898 = sadd.s32 %s2893, %s2897
          %s2899 = smul.addr %s2898, 128
          %s2900 = scalar_lea.hbm %s4, %s2899
          %s2901 = sshll.u32 %s2889, 4
          %s2902 = int_to_ptr.vmem [resolvable:$true] %s2901
          %2907 = dma.vmem_to_hbm [thread:$0]  %s2902, 1024, %s2900, %s2886, 128, 128, 8
        $region40: #{tpu_custom_call.1} parent=35 // pred_fallthru
          _
      $region36: #{tpu_custom_call.1} parent=5 // pred_fallthru
        _
      %p2908 = scmp.le.s32.totalorder 2, %s13
      // Predicated region
      $region41: #{tpu_custom_call.1} parent=5 // pred_check
        %p2909 = pneg %p2908
      $region42: #{tpu_custom_call.1} parent=5 // pred_check_branch
        %2911 = sbr.rel (%p2909) target = $region44
      $region43: #{tpu_custom_call.1} parent=5 // pred_region
        %s2912 = ssub.s32 %s13, 2
        // Predicated region
        $region45: #{tpu_custom_call.1} parent=43 // pred_check
          %p2913 = pneg %p147
        $region46: #{tpu_custom_call.1} parent=43 // pred_check_branch
          %2915 = sbr.rel (%p2913) target = $region48
        $region47: #{tpu_custom_call.1} parent=43 // pred_region
          %s2916 = sand.u32 %s132, 1
          %s2917 = scalar_lea.sflag [#allocation3], %s2916
          %s2918 = sand.u32 %s132, 1
          %s2919 = smul.addr %s2918, 64
          %s2920 = scalar_lea.vmem [#allocation2], %s2919
          %2921 = dma.done %s2917, 1024
        $region48: #{tpu_custom_call.1} parent=43 // pred_fallthru
          _
      $region44: #{tpu_custom_call.1} parent=5 // pred_fallthru
        _
    $region6: #{tpu_custom_call.1} parent=1 // loop_footer
      %s17 = sadd.s32 1, %s13
    $region7: #{tpu_custom_call.1} parent=1 // loop_footer_branch
      %12 = sbr.rel target = $region3
    $region8: #{tpu_custom_call.1} parent=1 // loop_exit
      _
    %2922 = vsyncpa [#allocation3], 1
    %s2923 = scalar_lea.sflag [#allocation3], 1
    %2924 = vsyncpa %s2923, 1

</llo_original>
